<compile_context>
chip_gen: v5e
topology: v5e:2x2
jax: 0.10.0
libtpu: 0.0.40
codegen_flags: <defaults>
</compile_context>

<pallas_src>
import functools
import math

import jax
import jax.numpy as jnp
from jax.experimental import pallas as pl
from jax.experimental.pallas import tpu as pltpu

_BF = jnp.bfloat16
_F32 = jnp.float32


# ------------------------------------------------------------------
# Small helpers for row-gridded matmul kernels
# ------------------------------------------------------------------
def _round_up(x, m):
    return (x + m - 1) // m * m


def _row_tile(m, cap=512):
    """Row tile size + padded row count (tile divisible by 8, <= cap)."""
    tm = min(cap, _round_up(m, 8))
    return tm, _round_up(m, tm)


def _pad_rows(x, mp):
    m = x.shape[0]
    if m == mp:
        return x
    return jnp.pad(x, ((0, mp - m), (0, 0)))


# ------------------------------------------------------------------
# Pallas kernels
# ------------------------------------------------------------------
def _matmul_relu_kernel(x_ref, w_ref, o_ref):
    acc = jnp.dot(x_ref[...].astype(_BF), w_ref[...].astype(_BF),
                  preferred_element_type=_F32)
    o_ref[...] = jnp.maximum(acc, 0.0)


def _matmul_bias_kernel(x_ref, w_ref, b_ref, o_ref):
    acc = jnp.dot(x_ref[...].astype(_BF), w_ref[...].astype(_BF),
                  preferred_element_type=_F32)
    o_ref[...] = acc + b_ref[...]


def _prelu_matmul_kernel(x_ref, w_ref, b_ref, a_ref, o_ref):
    x = x_ref[...]
    x = jnp.where(x >= 0.0, x, a_ref[...] * x)          # PReLU (shared alpha), f32
    acc = jnp.dot(x.astype(_BF), w_ref[...].astype(_BF),
                  preferred_element_type=_F32)
    o_ref[...] = acc + b_ref[...]


def _mulcat_proj_kernel(hf_ref, hb_ref, x_ref, pwf_ref, pwb_ref, pb_ref,
                        w1_ref, w2_ref, b_ref, o_ref):
    """rnn/gate projections -> gating mul -> block projection -> + residual."""
    x = x_ref[...]
    n = x.shape[1]
    proj = (jnp.dot(hf_ref[...].astype(_BF), pwf_ref[...].astype(_BF),
                    preferred_element_type=_F32)
            + jnp.dot(hb_ref[...].astype(_BF), pwb_ref[...].astype(_BF),
                      preferred_element_type=_F32)
            + pb_ref[...])                               # (tm, 2N) = [rnn | gate]
    gated = proj[:, :n] * proj[:, n:]
    out = (jnp.dot(gated.astype(_BF), w1_ref[...].astype(_BF),
                   preferred_element_type=_F32)
           + jnp.dot(x.astype(_BF), w2_ref[...].astype(_BF),
                     preferred_element_type=_F32)
           + b_ref[...] + x)                             # +x = fused residual add
    o_ref[...] = out


def _lstm_recur_kernel(gx_ref, whh_ref, mask_ref, hf_ref, hb_ref,
                       h_scr, c_scr, *, T, H):
    """Fused 4-direction LSTM recurrence.

    gx_ref: (T, BB, 16H) hoisted x @ W_ih for dirs [rnn_f, gate_f, rnn_b, gate_b]
            in gate-major layout  [i(4 dirs) | f | g | o].
    mask:   (1, 16H) 1.0 on forward-direction columns (read time s), 0.0 on
            backward-direction columns (read time T-1-s).
    hf/hb:  (T, BB, 2H) hidden states of fwd dirs / bwd dirs, already in
            physical-time order.
    """
    H2, H4 = 2 * H, 4 * H
    h_scr[...] = jnp.zeros_like(h_scr)
    c_scr[...] = jnp.zeros_like(c_scr)
    mask = mask_ref[...]
    whh_bf = whh_ref[...].astype(_BF)
    for s in range(T):                                   # statically unrolled
        gx_t = mask * gx_ref[s] + (1.0 - mask) * gx_ref[T - 1 - s]
        gates = gx_t + jnp.dot(h_scr[...].astype(_BF), whh_bf,
                               preferred_element_type=_F32)
        i = jax.nn.sigmoid(gates[:, 0 * H4:1 * H4])
        f = jax.nn.sigmoid(gates[:, 1 * H4:2 * H4])
        g = jnp.tanh(gates[:, 2 * H4:3 * H4])
        o = jax.nn.sigmoid(gates[:, 3 * H4:4 * H4])
        c = f * c_scr[...] + i * g
        h = o * jnp.tanh(c)
        c_scr[...] = c
        h_scr[...] = h
        hf_ref[s] = h[:, :H2]                            # fwd dirs at time s
        hb_ref[T - 1 - s] = h[:, H2:]                    # bwd dirs at time T-1-s


# ------------------------------------------------------------------
# pallas_call wrappers (row-gridded, megacore-parallel)
# ------------------------------------------------------------------
def matmul_relu(x, w):
    m, k = x.shape
    n = w.shape[1]
    tm, mp = _row_tile(m)
    out = pl.pallas_call(
        _matmul_relu_kernel,
        out_shape=jax.ShapeDtypeStruct((mp, n), _F32),
        grid=(mp // tm,),
        in_specs=[pl.BlockSpec((tm, k), lambda i: (i, 0)),
                  pl.BlockSpec((k, n), lambda i: (0, 0))],
        out_specs=pl.BlockSpec((tm, n), lambda i: (i, 0)),
        compiler_params=pltpu.CompilerParams(dimension_semantics=("parallel",)),
        cost_estimate=pl.CostEstimate(flops=2 * mp * k * n, transcendentals=0,
                                      bytes_accessed=4 * (mp * k + k * n + mp * n)),
    )(_pad_rows(x, mp), w)
    return out[:m] if mp != m else out


def matmul_bias(x, w, b):
    m, k = x.shape
    n = w.shape[1]
    tm, mp = _row_tile(m)
    out = pl.pallas_call(
        _matmul_bias_kernel,
        out_shape=jax.ShapeDtypeStruct((mp, n), _F32),
        grid=(mp // tm,),
        in_specs=[pl.BlockSpec((tm, k), lambda i: (i, 0)),
                  pl.BlockSpec((k, n), lambda i: (0, 0)),
                  pl.BlockSpec((1, n), lambda i: (0, 0))],
        out_specs=pl.BlockSpec((tm, n), lambda i: (i, 0)),
        compiler_params=pltpu.CompilerParams(dimension_semantics=("parallel",)),
        cost_estimate=pl.CostEstimate(flops=2 * mp * k * n, transcendentals=0,
                                      bytes_accessed=4 * (mp * k + k * n + mp * n)),
    )(_pad_rows(x, mp), w, b.reshape(1, n))
    return out[:m] if mp != m else out


def prelu_conv1x1(x, w, b, alpha):
    m, k = x.shape
    n = w.shape[1]
    tm, mp = _row_tile(m)
    out = pl.pallas_call(
        _prelu_matmul_kernel,
        out_shape=jax.ShapeDtypeStruct((mp, n), _F32),
        grid=(mp // tm,),
        in_specs=[pl.BlockSpec((tm, k), lambda i: (i, 0)),
                  pl.BlockSpec((k, n), lambda i: (0, 0)),
                  pl.BlockSpec((1, n), lambda i: (0, 0)),
                  pl.BlockSpec((1, 1), lambda i: (0, 0))],
        out_specs=pl.BlockSpec((tm, n), lambda i: (i, 0)),
        compiler_params=pltpu.CompilerParams(dimension_semantics=("parallel",)),
        cost_estimate=pl.CostEstimate(flops=2 * mp * k * n, transcendentals=0,
                                      bytes_accessed=4 * (mp * k + k * n + mp * n)),
    )(_pad_rows(x, mp), w, b.reshape(1, n), alpha.reshape(1, 1))
    return out[:m] if mp != m else out


def mulcat_projection(hf, hb, x, p):
    m, h2 = hf.shape
    n = x.shape[1]
    tm, mp = _row_tile(m)
    out = pl.pallas_call(
        _mulcat_proj_kernel,
        out_shape=jax.ShapeDtypeStruct((mp, n), _F32),
        grid=(mp // tm,),
        in_specs=[pl.BlockSpec((tm, h2), lambda i: (i, 0)),
                  pl.BlockSpec((tm, h2), lambda i: (i, 0)),
                  pl.BlockSpec((tm, n), lambda i: (i, 0)),
                  pl.BlockSpec((h2, 2 * n), lambda i: (0, 0)),
                  pl.BlockSpec((h2, 2 * n), lambda i: (0, 0)),
                  pl.BlockSpec((1, 2 * n), lambda i: (0, 0)),
                  pl.BlockSpec((n, n), lambda i: (0, 0)),
                  pl.BlockSpec((n, n), lambda i: (0, 0)),
                  pl.BlockSpec((1, n), lambda i: (0, 0))],
        out_specs=pl.BlockSpec((tm, n), lambda i: (i, 0)),
        compiler_params=pltpu.CompilerParams(dimension_semantics=("parallel",)),
        cost_estimate=pl.CostEstimate(
            flops=2 * mp * (2 * h2 * 2 * n + 2 * n * n), transcendentals=0,
            bytes_accessed=4 * (mp * (2 * h2 + 2 * n) + 4 * h2 * n + 2 * n * n)),
    )(_pad_rows(hf, mp), _pad_rows(hb, mp), _pad_rows(x, mp),
      p["proj_wf"], p["proj_wb"], p["proj_b"].reshape(1, 2 * n),
      p["block_w1"], p["block_w2"], p["block_b"].reshape(1, n))
    return out[:m] if mp != m else out


def lstm_recurrence(gx3, whh_bd, fwd_mask):
    """gx3: (T, BB, 16H) -> hf, hb each (T, BB, 2H)."""
    T, BB, G = gx3.shape
    H = whh_bd.shape[0] // 4
    # Batch split for the second TensorCore (v7x) only when blocks stay 8-aligned.
    nb = 2 if BB % 16 == 0 else 1
    bb = BB // nb
    hf, hb = pl.pallas_call(
        functools.partial(_lstm_recur_kernel, T=T, H=H),
        out_shape=(jax.ShapeDtypeStruct((T, BB, 2 * H), _F32),
                   jax.ShapeDtypeStruct((T, BB, 2 * H), _F32)),
        grid=(nb,),
        in_specs=[pl.BlockSpec((T, bb, G), lambda b: (0, b, 0)),
                  pl.BlockSpec((4 * H, G), lambda b: (0, 0)),
                  pl.BlockSpec((1, G), lambda b: (0, 0))],
        out_specs=(pl.BlockSpec((T, bb, 2 * H), lambda b: (0, b, 0)),
                   pl.BlockSpec((T, bb, 2 * H), lambda b: (0, b, 0))),
        scratch_shapes=[pltpu.VMEM((bb, 4 * H), _F32),
                        pltpu.VMEM((bb, 4 * H), _F32)],
        compiler_params=pltpu.CompilerParams(dimension_semantics=("parallel",)),
        cost_estimate=pl.CostEstimate(
            flops=2 * T * BB * 4 * H * G, transcendentals=5 * T * BB * 4 * H,
            bytes_accessed=4 * (T * BB * G + 4 * T * BB * H + 4 * H * G)),
    )(gx3, whh_bd, fwd_mask)
    return hf, hb


# ------------------------------------------------------------------
# Model blocks (glue around the kernels)
# ------------------------------------------------------------------
def mulcat_block(x_btn, p):
    """MulCatBlock + residual: x_btn (BB, T, N) -> (BB, T, N)."""
    BB, T, N = x_btn.shape
    H = p["whh_bd"].shape[0] // 4
    x_tbn = jnp.transpose(x_btn, (1, 0, 2))              # (T, BB, N) time-major
    x_flat = x_tbn.reshape(T * BB, N)

    # 1) hoisted input projection for all 4 LSTM directions (lane-dense 16H out)
    gx = matmul_bias(x_flat, p["wih_all"], p["b_all"])   # (T*BB, 16H)
    gx3 = gx.reshape(T, BB, 16 * H)

    # 2) fused 4-direction recurrence in a single kernel invocation
    hf, hb = lstm_recurrence(gx3, p["whh_bd"], p["fwd_mask"])

    # 3) fused proj + gating + block projection + residual add
    out = mulcat_projection(hf.reshape(T * BB, 2 * H), hb.reshape(T * BB, 2 * H),
                            x_flat, p)                   # (T*BB, N), residual incl.
    return jnp.transpose(out.reshape(T, BB, N), (1, 0, 2))


def dpmulcat(x_bndd, params, num_layers, num_spk):
    """DPMulCat: x (B, N, d1, d2) -> list of (B, N*num_spk, d1, d2)."""
    B, N, d1, d2 = x_bndd.shape
    output = x_bndd
    outs = []
    for i in range(num_layers):
        # rows: sequences along d1, batched over (B, d2); residual folded in-kernel
        row_in = jnp.transpose(output, (0, 3, 2, 1)).reshape(B * d2, d1, N)
        row_out = mulcat_block(row_in, params["rows"][i])
        output = jnp.transpose(row_out.reshape(B, d2, d1, N), (0, 3, 2, 1))
        # TODO(synk): GroupNorm branch (input_normalize=True) not implemented;
        # the configured ByPass (identity) normalization is what is computed.

        # cols: sequences along d2, batched over (B, d1)
        col_in = jnp.transpose(output, (0, 2, 3, 1)).reshape(B * d1, d2, N)
        col_out = mulcat_block(col_in, params["cols"][i])
        output = jnp.transpose(col_out.reshape(B, d1, d2, N), (0, 3, 1, 2))

        # shared output head: PReLU -> Conv2d(N, N*num_spk, 1)  (1x1 conv == matmul)
        head_in = jnp.transpose(output, (0, 2, 3, 1)).reshape(B * d1 * d2, N)
        head_out = prelu_conv1x1(head_in, params["out_w"], params["out_b"],
                                 params["prelu"])
        outs.append(jnp.transpose(head_out.reshape(B, d1, d2, N * num_spk),
                                  (0, 3, 1, 2)))         # training=True -> every layer
    return outs


def pad_segment(x, seg):
    B, D, S = x.shape
    stride = seg // 2
    rest = seg - (stride + S % seg) % seg
    if rest > 0:
        x = jnp.pad(x, ((0, 0), (0, 0), (0, rest)))
    x = jnp.pad(x, ((0, 0), (0, 0), (stride, stride)))
    return x, rest


def create_chunks(x, seg):
    x, rest = pad_segment(x, seg)
    B, D, _ = x.shape
    stride = seg // 2
    seg1 = x[:, :, :-stride].reshape(B, D, -1, seg)
    seg2 = x[:, :, stride:].reshape(B, D, -1, seg)
    segs = jnp.concatenate([seg1, seg2], axis=3).reshape(B, D, -1, seg)
    return jnp.transpose(segs, (0, 1, 3, 2)), rest       # (B, D, seg, n_chunks)


def merge_chunks(x, rest):
    B, D, seg, _ = x.shape
    stride = seg // 2
    x = jnp.transpose(x, (0, 1, 3, 2)).reshape(B, D, -1, seg * 2)
    in1 = x[:, :, :, :seg].reshape(B, D, -1)[:, :, stride:]
    in2 = x[:, :, :, seg:].reshape(B, D, -1)[:, :, :-stride]
    out = in1 + in2
    if rest > 0:
        out = out[:, :, :-rest]
    return out


def encoder(mixture, enc_w_t, N, L):
    """Conv1d(1, N, L, stride=L//2, bias=False) + ReLU, as framed matmul."""
    B, T = mixture.shape
    stride = L // 2
    K = (T - L) // stride + 1
    idx = jnp.arange(K)[:, None] * stride + jnp.arange(L)[None, :]
    frames = mixture[:, idx].reshape(B * K, L)           # (B*K, L)
    out = matmul_relu(frames, enc_w_t)                   # no dead zero-bias add
    return jnp.transpose(out.reshape(B, K, N), (0, 2, 1))  # (B, N, K)


def overlap_and_add(sig, step):
    *outer, frames, flen = sig.shape
    out_len = step * (frames - 1) + flen
    out = jnp.zeros((*outer, out_len), sig.dtype)
    for f in range(frames):
        out = out.at[..., f * step:f * step + flen].add(sig[..., f, :])
    return out


def decoder(est, L):
    """est: (B, C, N, K) -> transpose -> AvgPool2d((1,L)) -> overlap_and_add."""
    est = jnp.transpose(est, (0, 1, 3, 2))               # (B, C, K, N)
    B, C, K, N = est.shape
    pooled = est.reshape(B, C, K, N // L, L).mean(axis=-1)
    return overlap_and_add(pooled, L // 2)


def swave_forward(params, mixture, *, N, L, R, C, segment_size):
    B, T_mix = mixture.shape
    mixture_w = encoder(mixture, params["enc_w_t"], N, L)      # (B, N, K)
    K = mixture_w.shape[2]
    segments, rest = create_chunks(mixture_w, segment_size)    # (B, N, d1, d2)
    output_all = dpmulcat(segments, params, R, C)
    outs = []
    for out_i in output_all:
        merged = merge_chunks(out_i, rest)                     # (B, N*C, K)
        est = merged.reshape(B, C, N, K)
        wav = decoder(est, L)                                  # (B, C, T_est)
        wav = jnp.pad(wav, ((0, 0), (0, 0), (0, T_mix - wav.shape[-1])))
        outs.append(wav)
    return jnp.stack(outs)                                     # (R, B, C, T_mix)


# ------------------------------------------------------------------
# Parameter construction + fusion into kernel-ready layouts
# ------------------------------------------------------------------
def init_params(key, N, L, H, R, C):
    keys = jax.random.split(key, 1024)
    cnt = [0]

    def nk():
        k = keys[cnt[0]]
        cnt[0] += 1
        return k

    def xav(shape):
        std = math.sqrt(2.0 / (shape[0] + shape[-1]))
        return std * jax.random.normal(nk(), shape, jnp.float32)

    def lstm_dir():
        # w_ih^T (IN,4H), w_hh^T (H,4H), combined bias (b_ih + b_hh) -> zeros
        return {"wih": xav((N, 4 * H)), "whh": xav((H, 4 * H)),
                "b": jnp.zeros((4 * H,), jnp.float32)}

    def mulcat_params():
        return {
            "rnn": {"fwd": lstm_dir(), "bwd": lstm_dir()},
            "gate_rnn": {"fwd": lstm_dir(), "bwd": lstm_dir()},
            "rnn_proj_w": xav((2 * H, N)),
            "rnn_proj_b": jnp.zeros((N,), jnp.float32),
            "gate_proj_w": xav((2 * H, N)),
            "gate_proj_b": jnp.zeros((N,), jnp.float32),
            "block_w1": xav((N, N)),          # top half of Linear(2N, N)^T
            "block_w2": xav((N, N)),          # bottom half
            "block_b": jnp.zeros((N,), jnp.float32),
        }

    sep = {
        "rows": [mulcat_params() for _ in range(R)],
        "cols": [mulcat_params() for _ in range(R)],
        "out_w": xav((N, N * C)),             # Conv2d(N, N*C, 1) weight^T
        "out_b": jnp.zeros((N * C,), jnp.float32),
        "prelu": jnp.array([0.25], jnp.float32),
    }
    return {"enc_w_t": xav((L, N)), "sep": sep}


def _fuse_mulcat(p, N, H):
    """Fuse the 4 LSTM directions + projection weights into kernel layouts."""
    dirs = [p["rnn"]["fwd"], p["gate_rnn"]["fwd"],
            p["rnn"]["bwd"], p["gate_rnn"]["bwd"]]       # [rf, gf, rb, gb]
    # gate-major, dir-minor columns: [i: rf gf rb gb | f: ... | g: ... | o: ...]
    wih_all = jnp.concatenate(
        [d["wih"][:, g * H:(g + 1) * H] for g in range(4) for d in dirs], axis=1)
    b_all = jnp.concatenate(
        [d["b"][g * H:(g + 1) * H] for g in range(4) for d in dirs])
    # block-diagonal recurrent weight (4H, 16H)
    rows = []
    for di, d in enumerate(dirs):
        blocks = []
        for g in range(4):
            blk = jnp.zeros((H, 4 * H), jnp.float32)
            blk = blk.at[:, di * H:(di + 1) * H].set(d["whh"][:, g * H:(g + 1) * H])
            blocks.append(blk)
        rows.append(jnp.concatenate(blocks, axis=1))
    whh_bd = jnp.concatenate(rows, axis=0)
    # combined rnn/gate projection, split into fwd-hidden / bwd-hidden halves
    zn = jnp.zeros((H, N), jnp.float32)
    proj_wf = jnp.concatenate([
        jnp.concatenate([p["rnn_proj_w"][:H], zn], axis=1),       # h_rnn_fwd
        jnp.concatenate([zn, p["gate_proj_w"][:H]], axis=1)],     # h_gate_fwd
        axis=0)
    proj_wb = jnp.concatenate([
        jnp.concatenate([p["rnn_proj_w"][H:], zn], axis=1),       # h_rnn_bwd
        jnp.concatenate([zn, p["gate_proj_w"][H:]], axis=1)],     # h_gate_bwd
        axis=0)
    proj_b = jnp.concatenate([p["rnn_proj_b"], p["gate_proj_b"]])
    # forward-direction column mask (first 2H of every 4H gate block)
    fwd_mask = jnp.tile(jnp.concatenate([jnp.ones((2 * H,), jnp.float32),
                                         jnp.zeros((2 * H,), jnp.float32)]),
                        4).reshape(1, 16 * H)
    return {"wih_all": wih_all, "b_all": b_all, "whh_bd": whh_bd,
            "proj_wf": proj_wf, "proj_wb": proj_wb, "proj_b": proj_b,
            "fwd_mask": fwd_mask,
            "block_w1": p["block_w1"], "block_w2": p["block_w2"],
            "block_b": p["block_b"]}


def prepare_params(raw, N, H):
    sep = raw["sep"]
    return {
        "enc_w_t": raw["enc_w_t"],
        "rows": [_fuse_mulcat(p, N, H) for p in sep["rows"]],
        "cols": [_fuse_mulcat(p, N, H) for p in sep["cols"]],
        "out_w": sep["out_w"],
        "out_b": sep["out_b"],
        "prelu": sep["prelu"],
    }


# ------------------------------------------------------------------
if __name__ == "__main__":
    # SWave config: N, L, H, R, C, sr, segment, input_normalize=False (ByPass)
    N, L, H, R, C = 16, 8, 16, 2, 2
    sr, segment = 8000, 0.016
    segment_size = int(math.sqrt(2 * sr * segment / (L / 2)))   # = 8

    key = jax.random.PRNGKey(0)
    pkey, xkey = jax.random.split(key)
    raw_params = init_params(pkey, N, L, H, R, C)
    params = prepare_params(raw_params, N, H)
    mixture = jax.random.normal(xkey, (2, 64), jnp.float32)     # (B, T_mix)

    fwd = jax.jit(functools.partial(swave_forward, N=N, L=L, R=R, C=C,
                                    segment_size=segment_size))
    out = fwd(params, mixture)
    jax.block_until_ready(out)
    assert out.shape == (R, 2, C, 64), out.shape
    assert bool(jnp.all(jnp.isfinite(out)))
    print("KERNEL_OK")
</pallas_src>

<mosaic_0001>
module attributes {stable_mosaic.version = 11 : i64} {
  func.func @_matmul_relu_kernel(%arg0: i32, %arg1: memref<32x8xf32, #tpu.memory_space<vmem>>, %arg2: memref<8x16xf32, #tpu.memory_space<vmem>>, %arg3: memref<32x16xf32, #tpu.memory_space<vmem>>) attributes {dimension_semantics = [#tpu.dimension_semantics<parallel>], iteration_bounds = array<i64: 1>, scalar_prefetch = 0 : i64, scratch_operands = 0 : i64, tpu.core_type = #tpu.core_type<tc>, window_params = [{transform_indices = @transform_0, window_bounds = array<i64: 32, 8>}, {pipeline_mode = #tpu.pipeline_mode<synchronous>, transform_indices = @transform_1, window_bounds = array<i64: 8, 16>}, {transform_indices = @transform_2, window_bounds = array<i64: 32, 16>}]} {
    %c0 = arith.constant 0 : index
    %c0_0 = arith.constant 0 : index
    %0 = vector.load %arg1[%c0, %c0_0] : memref<32x8xf32, #tpu.memory_space<vmem>>, vector<32x8xf32>
    %1 = arith.truncf %0 : vector<32x8xf32> to vector<32x8xbf16>
    %c0_1 = arith.constant 0 : index
    %c0_2 = arith.constant 0 : index
    %2 = vector.load %arg2[%c0_1, %c0_2] : memref<8x16xf32, #tpu.memory_space<vmem>>, vector<8x16xf32>
    %3 = arith.truncf %2 : vector<8x16xf32> to vector<8x16xbf16>
    %cst = arith.constant dense<0.000000e+00> : vector<32x16xf32>
    %4 = tpu.matmul %1, %3, %cst {dimension_numbers = #tpu.dot_dimension_numbers<[1], [0], [0], [1], [0, 0, 1, 1], [], []>} : vector<32x8xbf16>, vector<8x16xbf16>, vector<32x16xf32> -> vector<32x16xf32>
    %cst_3 = arith.constant 0.000000e+00 : f32
    %5 = vector.broadcast %cst_3 : f32 to vector<32x16xf32>
    %6 = arith.maximumf %4, %5 : vector<32x16xf32>
    %c0_4 = arith.constant 0 : index
    %c0_5 = arith.constant 0 : index
    %7 = vector.load %arg3[%c0_4, %c0_5] : memref<32x16xf32, #tpu.memory_space<vmem>>, vector<32x16xf32>
    tpu.vector_store %arg3[%c0_4, %c0_5], %6 {strides = array<i32>} : memref<32x16xf32, #tpu.memory_space<vmem>>, vector<32x16xf32>,
    return
  }
  func.func @transform_0(%arg0: i32) -> (i32, i32) {
    %c0_i32 = arith.constant 0 : i32
    %c0_i32_0 = arith.constant 0 : i32
    return %arg0, %c0_i32 : i32, i32
  }
  func.func @transform_1(%arg0: i32) -> (i32, i32) {
    %c0_i32 = arith.constant 0 : i32
    %c0_i32_0 = arith.constant 0 : i32
    %c0_i32_1 = arith.constant 0 : i32
    return %c0_i32, %c0_i32_0 : i32, i32
  }
  func.func @transform_2(%arg0: i32) -> (i32, i32) {
    %c0_i32 = arith.constant 0 : i32
    %c0_i32_0 = arith.constant 0 : i32
    return %arg0, %c0_i32 : i32, i32
  }
}

module attributes {stable_mosaic.version = 11 : i64} {
  func.func @_matmul_bias_kernel(%arg0: i32, %arg1: memref<96x16xf32, #tpu.memory_space<vmem>>, %arg2: memref<16x256xf32, #tpu.memory_space<vmem>>, %arg3: memref<1x256xf32, #tpu.memory_space<vmem>>, %arg4: memref<96x256xf32, #tpu.memory_space<vmem>>) attributes {dimension_semantics = [#tpu.dimension_semantics<parallel>], iteration_bounds = array<i64: 1>, scalar_prefetch = 0 : i64, scratch_operands = 0 : i64, tpu.core_type = #tpu.core_type<tc>, window_params = [{transform_indices = @transform_0, window_bounds = array<i64: 96, 16>}, {pipeline_mode = #tpu.pipeline_mode<synchronous>, transform_indices = @transform_1, window_bounds = array<i64: 16, 256>}, {pipeline_mode = #tpu.pipeline_mode<synchronous>, transform_indices = @transform_2, window_bounds = array<i64: 1, 256>}, {transform_indices = @transform_3, window_bounds = array<i64: 96, 256>}]} {
    %c0 = arith.constant 0 : index
    %c0_0 = arith.constant 0 : index
    %0 = vector.load %arg1[%c0, %c0_0] : memref<96x16xf32, #tpu.memory_space<vmem>>, vector<96x16xf32>
    %1 = arith.truncf %0 : vector<96x16xf32> to vector<96x16xbf16>
    %c0_1 = arith.constant 0 : index
    %c0_2 = arith.constant 0 : index
    %2 = vector.load %arg2[%c0_1, %c0_2] : memref<16x256xf32, #tpu.memory_space<vmem>>, vector<16x256xf32>
    %3 = arith.truncf %2 : vector<16x256xf32> to vector<16x256xbf16>
    %cst = arith.constant dense<0.000000e+00> : vector<96x256xf32>
    %4 = tpu.matmul %1, %3, %cst {dimension_numbers = #tpu.dot_dimension_numbers<[1], [0], [0], [1], [0, 0, 1, 1], [], []>} : vector<96x16xbf16>, vector<16x256xbf16>, vector<96x256xf32> -> vector<96x256xf32>
    %c0_3 = arith.constant 0 : index
    %c0_4 = arith.constant 0 : index
    %5 = vector.load %arg3[%c0_3, %c0_4] : memref<1x256xf32, #tpu.memory_space<vmem>>, vector<1x256xf32>
    %6 = vector.broadcast %5 : vector<1x256xf32> to vector<96x256xf32>
    %7 = arith.addf %4, %6 : vector<96x256xf32>
    %c0_5 = arith.constant 0 : index
    %c0_6 = arith.constant 0 : index
    %8 = vector.load %arg4[%c0_5, %c0_6] : memref<96x256xf32, #tpu.memory_space<vmem>>, vector<96x256xf32>
    tpu.vector_store %arg4[%c0_5, %c0_6], %7 {strides = array<i32>} : memref<96x256xf32, #tpu.memory_space<vmem>>, vector<96x256xf32>,
    return
  }
  func.func @transform_0(%arg0: i32) -> (i32, i32) {
    %c0_i32 = arith.constant 0 : i32
    %c0_i32_0 = arith.constant 0 : i32
    return %arg0, %c0_i32 : i32, i32
  }
  func.func @transform_1(%arg0: i32) -> (i32, i32) {
    %c0_i32 = arith.constant 0 : i32
    %c0_i32_0 = arith.constant 0 : i32
    %c0_i32_1 = arith.constant 0 : i32
    return %c0_i32, %c0_i32_0 : i32, i32
  }
  func.func @transform_2(%arg0: i32) -> (i32, i32) {
    %c0_i32 = arith.constant 0 : i32
    %c0_i32_0 = arith.constant 0 : i32
    %c0_i32_1 = arith.constant 0 : i32
    return %c0_i32, %c0_i32_0 : i32, i32
  }
  func.func @transform_3(%arg0: i32) -> (i32, i32) {
    %c0_i32 = arith.constant 0 : i32
    %c0_i32_0 = arith.constant 0 : i32
    return %arg0, %c0_i32 : i32, i32
  }
}

module attributes {stable_mosaic.version = 11 : i64} {
  func.func @_mulcat_proj_kernel(%arg0: i32, %arg1: memref<96x32xf32, #tpu.memory_space<vmem>>, %arg2: memref<96x32xf32, #tpu.memory_space<vmem>>, %arg3: memref<96x16xf32, #tpu.memory_space<vmem>>, %arg4: memref<32x32xf32, #tpu.memory_space<vmem>>, %arg5: memref<32x32xf32, #tpu.memory_space<vmem>>, %arg6: memref<1x32xf32, #tpu.memory_space<vmem>>, %arg7: memref<16x16xf32, #tpu.memory_space<vmem>>, %arg8: memref<16x16xf32, #tpu.memory_space<vmem>>, %arg9: memref<1x16xf32, #tpu.memory_space<vmem>>, %arg10: memref<96x16xf32, #tpu.memory_space<vmem>>) attributes {dimension_semantics = [#tpu.dimension_semantics<parallel>], iteration_bounds = array<i64: 1>, scalar_prefetch = 0 : i64, scratch_operands = 0 : i64, tpu.core_type = #tpu.core_type<tc>, window_params = [{transform_indices = @transform_0, window_bounds = array<i64: 96, 32>}, {transform_indices = @transform_1, window_bounds = array<i64: 96, 32>}, {transform_indices = @transform_2, window_bounds = array<i64: 96, 16>}, {pipeline_mode = #tpu.pipeline_mode<synchronous>, transform_indices = @transform_3, window_bounds = array<i64: 32, 32>}, {pipeline_mode = #tpu.pipeline_mode<synchronous>, transform_indices = @transform_4, window_bounds = array<i64: 32, 32>}, {pipeline_mode = #tpu.pipeline_mode<synchronous>, transform_indices = @transform_5, window_bounds = array<i64: 1, 32>}, {pipeline_mode = #tpu.pipeline_mode<synchronous>, transform_indices = @transform_6, window_bounds = array<i64: 16, 16>}, {pipeline_mode = #tpu.pipeline_mode<synchronous>, transform_indices = @transform_7, window_bounds = array<i64: 16, 16>}, {pipeline_mode = #tpu.pipeline_mode<synchronous>, transform_indices = @transform_8, window_bounds = array<i64: 1, 16>}, {transform_indices = @transform_9, window_bounds = array<i64: 96, 16>}]} {
    %c0 = arith.constant 0 : index
    %c0_0 = arith.constant 0 : index
    %0 = vector.load %arg3[%c0, %c0_0] : memref<96x16xf32, #tpu.memory_space<vmem>>, vector<96x16xf32>
    %c0_1 = arith.constant 0 : index
    %c0_2 = arith.constant 0 : index
    %1 = vector.load %arg1[%c0_1, %c0_2] : memref<96x32xf32, #tpu.memory_space<vmem>>, vector<96x32xf32>
    %2 = arith.truncf %1 : vector<96x32xf32> to vector<96x32xbf16>
    %c0_3 = arith.constant 0 : index
    %c0_4 = arith.constant 0 : index
    %3 = vector.load %arg4[%c0_3, %c0_4] : memref<32x32xf32, #tpu.memory_space<vmem>>, vector<32x32xf32>
    %4 = arith.truncf %3 : vector<32x32xf32> to vector<32x32xbf16>
    %cst = arith.constant dense<0.000000e+00> : vector<96x32xf32>
    %5 = tpu.matmul %2, %4, %cst {dimension_numbers = #tpu.dot_dimension_numbers<[1], [0], [0], [1], [0, 0, 1, 1], [], []>} : vector<96x32xbf16>, vector<32x32xbf16>, vector<96x32xf32> -> vector<96x32xf32>
    %c0_5 = arith.constant 0 : index
    %c0_6 = arith.constant 0 : index
    %6 = vector.load %arg2[%c0_5, %c0_6] : memref<96x32xf32, #tpu.memory_space<vmem>>, vector<96x32xf32>
    %7 = arith.truncf %6 : vector<96x32xf32> to vector<96x32xbf16>
    %c0_7 = arith.constant 0 : index
    %c0_8 = arith.constant 0 : index
    %8 = vector.load %arg5[%c0_7, %c0_8] : memref<32x32xf32, #tpu.memory_space<vmem>>, vector<32x32xf32>
    %9 = arith.truncf %8 : vector<32x32xf32> to vector<32x32xbf16>
    %cst_9 = arith.constant dense<0.000000e+00> : vector<96x32xf32>
    %10 = tpu.matmul %7, %9, %cst_9 {dimension_numbers = #tpu.dot_dimension_numbers<[1], [0], [0], [1], [0, 0, 1, 1], [], []>} : vector<96x32xbf16>, vector<32x32xbf16>, vector<96x32xf32> -> vector<96x32xf32>
    %11 = arith.addf %5, %10 : vector<96x32xf32>
    %c0_10 = arith.constant 0 : index
    %c0_11 = arith.constant 0 : index
    %12 = vector.load %arg6[%c0_10, %c0_11] : memref<1x32xf32, #tpu.memory_space<vmem>>, vector<1x32xf32>
    %13 = vector.broadcast %12 : vector<1x32xf32> to vector<96x32xf32>
    %14 = arith.addf %11, %13 : vector<96x32xf32>
    %15 = vector.extract_strided_slice %14 {offsets = [0, 0], sizes = [96, 16], strides = [1, 1]} : vector<96x32xf32> to vector<96x16xf32>
    %16 = vector.extract_strided_slice %14 {offsets = [0, 16], sizes = [96, 16], strides = [1, 1]} : vector<96x32xf32> to vector<96x16xf32>
    %17 = arith.mulf %15, %16 : vector<96x16xf32>
    %18 = arith.truncf %17 : vector<96x16xf32> to vector<96x16xbf16>
    %c0_12 = arith.constant 0 : index
    %c0_13 = arith.constant 0 : index
    %19 = vector.load %arg7[%c0_12, %c0_13] : memref<16x16xf32, #tpu.memory_space<vmem>>, vector<16x16xf32>
    %20 = arith.truncf %19 : vector<16x16xf32> to vector<16x16xbf16>
    %cst_14 = arith.constant dense<0.000000e+00> : vector<96x16xf32>
    %21 = tpu.matmul %18, %20, %cst_14 {dimension_numbers = #tpu.dot_dimension_numbers<[1], [0], [0], [1], [0, 0, 1, 1], [], []>} : vector<96x16xbf16>, vector<16x16xbf16>, vector<96x16xf32> -> vector<96x16xf32>
    %22 = arith.truncf %0 : vector<96x16xf32> to vector<96x16xbf16>
    %c0_15 = arith.constant 0 : index
    %c0_16 = arith.constant 0 : index
    %23 = vector.load %arg8[%c0_15, %c0_16] : memref<16x16xf32, #tpu.memory_space<vmem>>, vector<16x16xf32>
    %24 = arith.truncf %23 : vector<16x16xf32> to vector<16x16xbf16>
    %cst_17 = arith.constant dense<0.000000e+00> : vector<96x16xf32>
    %25 = tpu.matmul %22, %24, %cst_17 {dimension_numbers = #tpu.dot_dimension_numbers<[1], [0], [0], [1], [0, 0, 1, 1], [], []>} : vector<96x16xbf16>, vector<16x16xbf16>, vector<96x16xf32> -> vector<96x16xf32>
    %26 = arith.addf %21, %25 : vector<96x16xf32>
    %c0_18 = arith.constant 0 : index
    %c0_19 = arith.constant 0 : index
    %27 = vector.load %arg9[%c0_18, %c0_19] : memref<1x16xf32, #tpu.memory_space<vmem>>, vector<1x16xf32>
    %28 = vector.broadcast %27 : vector<1x16xf32> to vector<96x16xf32>
    %29 = arith.addf %26, %28 : vector<96x16xf32>
    %30 = arith.addf %29, %0 : vector<96x16xf32>
    %c0_20 = arith.constant 0 : index
    %c0_21 = arith.constant 0 : index
    %31 = vector.load %arg10[%c0_20, %c0_21] : memref<96x16xf32, #tpu.memory_space<vmem>>, vector<96x16xf32>
    tpu.vector_store %arg10[%c0_20, %c0_21], %30 {strides = array<i32>} : memref<96x16xf32, #tpu.memory_space<vmem>>, vector<96x16xf32>,
    return
  }
  func.func @transform_0(%arg0: i32) -> (i32, i32) {
    %c0_i32 = arith.constant 0 : i32
    %c0_i32_0 = arith.constant 0 : i32
    return %arg0, %c0_i32 : i32, i32
  }
  func.func @transform_1(%arg0: i32) -> (i32, i32) {
    %c0_i32 = arith.constant 0 : i32
    %c0_i32_0 = arith.constant 0 : i32
    return %arg0, %c0_i32 : i32, i32
  }
  func.func @transform_2(%arg0: i32) -> (i32, i32) {
    %c0_i32 = arith.constant 0 : i32
    %c0_i32_0 = arith.constant 0 : i32
    return %arg0, %c0_i32 : i32, i32
  }
  func.func @transform_3(%arg0: i32) -> (i32, i32) {
    %c0_i32 = arith.constant 0 : i32
    %c0_i32_0 = arith.constant 0 : i32
    %c0_i32_1 = arith.constant 0 : i32
    return %c0_i32, %c0_i32_0 : i32, i32
  }
  func.func @transform_4(%arg0: i32) -> (i32, i32) {
    %c0_i32 = arith.constant 0 : i32
    %c0_i32_0 = arith.constant 0 : i32
    %c0_i32_1 = arith.constant 0 : i32
    return %c0_i32, %c0_i32_0 : i32, i32
  }
  func.func @transform_5(%arg0: i32) -> (i32, i32) {
    %c0_i32 = arith.constant 0 : i32
    %c0_i32_0 = arith.constant 0 : i32
    %c0_i32_1 = arith.constant 0 : i32
    return %c0_i32, %c0_i32_0 : i32, i32
  }
  func.func @transform_6(%arg0: i32) -> (i32, i32) {
    %c0_i32 = arith.constant 0 : i32
    %c0_i32_0 = arith.constant 0 : i32
    %c0_i32_1 = arith.constant 0 : i32
    return %c0_i32, %c0_i32_0 : i32, i32
  }
  func.func @transform_7(%arg0: i32) -> (i32, i32) {
    %c0_i32 = arith.constant 0 : i32
    %c0_i32_0 = arith.constant 0 : i32
    %c0_i32_1 = arith.constant 0 : i32
    return %c0_i32, %c0_i32_0 : i32, i32
  }
  func.func @transform_8(%arg0: i32) -> (i32, i32) {
    %c0_i32 = arith.constant 0 : i32
    %c0_i32_0 = arith.constant 0 : i32
    %c0_i32_1 = arith.constant 0 : i32
    return %c0_i32, %c0_i32_0 : i32, i32
  }
  func.func @transform_9(%arg0: i32) -> (i32, i32) {
    %c0_i32 = arith.constant 0 : i32
    %c0_i32_0 = arith.constant 0 : i32
    return %arg0, %c0_i32 : i32, i32
  }
}

module attributes {stable_mosaic.version = 11 : i64} {
  func.func @_lstm_recur_kernel(%arg0: i32, %arg1: memref<8x12x256xf32, #tpu.memory_space<vmem>>, %arg2: memref<64x256xf32, #tpu.memory_space<vmem>>, %arg3: memref<1x256xf32, #tpu.memory_space<vmem>>, %arg4: memref<8x12x32xf32, #tpu.memory_space<vmem>>, %arg5: memref<8x12x32xf32, #tpu.memory_space<vmem>>, %arg6: memref<12x64xf32, #tpu.memory_space<vmem>>, %arg7: memref<12x64xf32, #tpu.memory_space<vmem>>) attributes {dimension_semantics = [#tpu.dimension_semantics<parallel>], iteration_bounds = array<i64: 1>, scalar_prefetch = 0 : i64, scratch_operands = 2 : i64, tpu.core_type = #tpu.core_type<tc>, window_params = [{transform_indices = @transform_0, window_bounds = array<i64: 8, 12, 256>}, {pipeline_mode = #tpu.pipeline_mode<synchronous>, transform_indices = @transform_1, window_bounds = array<i64: 64, 256>}, {pipeline_mode = #tpu.pipeline_mode<synchronous>, transform_indices = @transform_2, window_bounds = array<i64: 1, 256>}, {transform_indices = @transform_3, window_bounds = array<i64: 8, 12, 32>}, {transform_indices = @transform_4, window_bounds = array<i64: 8, 12, 32>}]} {
    %cst = arith.constant 0.000000e+00 : f32
    %0 = vector.broadcast %cst : f32 to vector<12x64xf32>
    %c0 = arith.constant 0 : index
    %c0_0 = arith.constant 0 : index
    %1 = vector.load %arg6[%c0, %c0_0] : memref<12x64xf32, #tpu.memory_space<vmem>>, vector<12x64xf32>
    tpu.vector_store %arg6[%c0, %c0_0], %0 {strides = array<i32>} : memref<12x64xf32, #tpu.memory_space<vmem>>, vector<12x64xf32>,
    %cst_1 = arith.constant 0.000000e+00 : f32
    %2 = vector.broadcast %cst_1 : f32 to vector<12x64xf32>
    %c0_2 = arith.constant 0 : index
    %c0_3 = arith.constant 0 : index
    %3 = vector.load %arg7[%c0_2, %c0_3] : memref<12x64xf32, #tpu.memory_space<vmem>>, vector<12x64xf32>
    tpu.vector_store %arg7[%c0_2, %c0_3], %2 {strides = array<i32>} : memref<12x64xf32, #tpu.memory_space<vmem>>, vector<12x64xf32>,
    %c0_4 = arith.constant 0 : index
    %c0_5 = arith.constant 0 : index
    %4 = vector.load %arg3[%c0_4, %c0_5] : memref<1x256xf32, #tpu.memory_space<vmem>>, vector<1x256xf32>
    %c0_6 = arith.constant 0 : index
    %c0_7 = arith.constant 0 : index
    %5 = vector.load %arg2[%c0_6, %c0_7] : memref<64x256xf32, #tpu.memory_space<vmem>>, vector<64x256xf32>
    %6 = arith.truncf %5 : vector<64x256xf32> to vector<64x256xbf16>
    %c0_8 = arith.constant 0 : index
    %c0_9 = arith.constant 0 : index
    %c0_10 = arith.constant 0 : index
    %7 = vector.load %arg1[%c0_8, %c0_9, %c0_10] : memref<8x12x256xf32, #tpu.memory_space<vmem>>, vector<1x12x256xf32>
    %8 = vector.shape_cast %7 : vector<1x12x256xf32> to vector<12x256xf32>
    %9 = vector.broadcast %4 : vector<1x256xf32> to vector<12x256xf32>
    %10 = arith.mulf %9, %8 : vector<12x256xf32>
    %cst_11 = arith.constant 1.000000e+00 : f32
    %11 = vector.broadcast %cst_11 : f32 to vector<1x256xf32>
    %12 = arith.subf %11, %4 : vector<1x256xf32>
    %c7 = arith.constant 7 : index
    %c0_12 = arith.constant 0 : index
    %c0_13 = arith.constant 0 : index
    %13 = vector.load %arg1[%c7, %c0_12, %c0_13] : memref<8x12x256xf32, #tpu.memory_space<vmem>>, vector<1x12x256xf32>
    %14 = vector.shape_cast %13 : vector<1x12x256xf32> to vector<12x256xf32>
    %15 = vector.broadcast %12 : vector<1x256xf32> to vector<12x256xf32>
    %16 = arith.mulf %15, %14 : vector<12x256xf32>
    %17 = arith.addf %10, %16 : vector<12x256xf32>
    %c0_14 = arith.constant 0 : index
    %c0_15 = arith.constant 0 : index
    %18 = vector.load %arg6[%c0_14, %c0_15] : memref<12x64xf32, #tpu.memory_space<vmem>>, vector<12x64xf32>
    %19 = arith.truncf %18 : vector<12x64xf32> to vector<12x64xbf16>
    %cst_16 = arith.constant dense<0.000000e+00> : vector<12x256xf32>
    %20 = tpu.matmul %19, %6, %cst_16 {dimension_numbers = #tpu.dot_dimension_numbers<[1], [0], [0], [1], [0, 0, 1, 1], [], []>} : vector<12x64xbf16>, vector<64x256xbf16>, vector<12x256xf32> -> vector<12x256xf32>
    %21 = arith.addf %17, %20 : vector<12x256xf32>
    %22 = vector.extract_strided_slice %21 {offsets = [0, 0], sizes = [12, 64], strides = [1, 1]} : vector<12x256xf32> to vector<12x64xf32>
    %23 = arith.negf %22 : vector<12x64xf32>
    %24 = math.exp %23 : vector<12x64xf32>
    %cst_17 = arith.constant 1.000000e+00 : f32
    %25 = vector.broadcast %cst_17 : f32 to vector<12x64xf32>
    %26 = arith.addf %25, %24 : vector<12x64xf32>
    %27 = arith.divf %25, %26 : vector<12x64xf32>
    %28 = vector.extract_strided_slice %21 {offsets = [0, 64], sizes = [12, 64], strides = [1, 1]} : vector<12x256xf32> to vector<12x64xf32>
    %29 = arith.negf %28 : vector<12x64xf32>
    %30 = math.exp %29 : vector<12x64xf32>
    %cst_18 = arith.constant 1.000000e+00 : f32
    %31 = vector.broadcast %cst_18 : f32 to vector<12x64xf32>
    %32 = arith.addf %31, %30 : vector<12x64xf32>
    %33 = arith.divf %31, %32 : vector<12x64xf32>
    %34 = vector.extract_strided_slice %21 {offsets = [0, 128], sizes = [12, 64], strides = [1, 1]} : vector<12x256xf32> to vector<12x64xf32>
    %35 = math.tanh %34 : vector<12x64xf32>
    %36 = vector.extract_strided_slice %21 {offsets = [0, 192], sizes = [12, 64], strides = [1, 1]} : vector<12x256xf32> to vector<12x64xf32>
    %37 = arith.negf %36 : vector<12x64xf32>
    %38 = math.exp %37 : vector<12x64xf32>
    %cst_19 = arith.constant 1.000000e+00 : f32
    %39 = vector.broadcast %cst_19 : f32 to vector<12x64xf32>
    %40 = arith.addf %39, %38 : vector<12x64xf32>
    %41 = arith.divf %39, %40 : vector<12x64xf32>
    %c0_20 = arith.constant 0 : index
    %c0_21 = arith.constant 0 : index
    %42 = vector.load %arg7[%c0_20, %c0_21] : memref<12x64xf32, #tpu.memory_space<vmem>>, vector<12x64xf32>
    %43 = arith.mulf %33, %42 : vector<12x64xf32>
    %44 = arith.mulf %27, %35 : vector<12x64xf32>
    %45 = arith.addf %43, %44 : vector<12x64xf32>
    %46 = math.tanh %45 : vector<12x64xf32>
    %47 = arith.mulf %41, %46 : vector<12x64xf32>
    %c0_22 = arith.constant 0 : index
    %c0_23 = arith.constant 0 : index
    %48 = vector.load %arg7[%c0_22, %c0_23] : memref<12x64xf32, #tpu.memory_space<vmem>>, vector<12x64xf32>
    tpu.vector_store %arg7[%c0_22, %c0_23], %45 {strides = array<i32>} : memref<12x64xf32, #tpu.memory_space<vmem>>, vector<12x64xf32>,
    %c0_24 = arith.constant 0 : index
    %c0_25 = arith.constant 0 : index
    %49 = vector.load %arg6[%c0_24, %c0_25] : memref<12x64xf32, #tpu.memory_space<vmem>>, vector<12x64xf32>
    tpu.vector_store %arg6[%c0_24, %c0_25], %47 {strides = array<i32>} : memref<12x64xf32, #tpu.memory_space<vmem>>, vector<12x64xf32>,
    %50 = vector.extract_strided_slice %47 {offsets = [0, 0], sizes = [12, 32], strides = [1, 1]} : vector<12x64xf32> to vector<12x32xf32>
    %c0_26 = arith.constant 0 : index
    %c0_27 = arith.constant 0 : index
    %c0_28 = arith.constant 0 : index
    %51 = vector.load %arg4[%c0_26, %c0_27, %c0_28] : memref<8x12x32xf32, #tpu.memory_space<vmem>>, vector<1x12x32xf32>
    %52 = vector.shape_cast %51 : vector<1x12x32xf32> to vector<12x32xf32>
    %53 = vector.shape_cast %50 : vector<12x32xf32> to vector<1x12x32xf32>
    tpu.vector_store %arg4[%c0_26, %c0_27, %c0_28], %53 {strides = array<i32>} : memref<8x12x32xf32, #tpu.memory_space<vmem>>, vector<1x12x32xf32>,
    %54 = vector.extract_strided_slice %47 {offsets = [0, 32], sizes = [12, 32], strides = [1, 1]} : vector<12x64xf32> to vector<12x32xf32>
    %c7_29 = arith.constant 7 : index
    %c0_30 = arith.constant 0 : index
    %c0_31 = arith.constant 0 : index
    %55 = vector.load %arg5[%c7_29, %c0_30, %c0_31] : memref<8x12x32xf32, #tpu.memory_space<vmem>>, vector<1x12x32xf32>
    %56 = vector.shape_cast %55 : vector<1x12x32xf32> to vector<12x32xf32>
    %57 = vector.shape_cast %54 : vector<12x32xf32> to vector<1x12x32xf32>
    tpu.vector_store %arg5[%c7_29, %c0_30, %c0_31], %57 {strides = array<i32>} : memref<8x12x32xf32, #tpu.memory_space<vmem>>, vector<1x12x32xf32>,
    %c1 = arith.constant 1 : index
    %c0_32 = arith.constant 0 : index
    %c0_33 = arith.constant 0 : index
    %58 = vector.load %arg1[%c1, %c0_32, %c0_33] : memref<8x12x256xf32, #tpu.memory_space<vmem>>, vector<1x12x256xf32>
    %59 = vector.shape_cast %58 : vector<1x12x256xf32> to vector<12x256xf32>
    %60 = vector.broadcast %4 : vector<1x256xf32> to vector<12x256xf32>
    %61 = arith.mulf %60, %59 : vector<12x256xf32>
    %cst_34 = arith.constant 1.000000e+00 : f32
    %62 = vector.broadcast %cst_34 : f32 to vector<1x256xf32>
    %63 = arith.subf %62, %4 : vector<1x256xf32>
    %c6 = arith.constant 6 : index
    %c0_35 = arith.constant 0 : index
    %c0_36 = arith.constant 0 : index
    %64 = vector.load %arg1[%c6, %c0_35, %c0_36] : memref<8x12x256xf32, #tpu.memory_space<vmem>>, vector<1x12x256xf32>
    %65 = vector.shape_cast %64 : vector<1x12x256xf32> to vector<12x256xf32>
    %66 = vector.broadcast %63 : vector<1x256xf32> to vector<12x256xf32>
    %67 = arith.mulf %66, %65 : vector<12x256xf32>
    %68 = arith.addf %61, %67 : vector<12x256xf32>
    %c0_37 = arith.constant 0 : index
    %c0_38 = arith.constant 0 : index
    %69 = vector.load %arg6[%c0_37, %c0_38] : memref<12x64xf32, #tpu.memory_space<vmem>>, vector<12x64xf32>
    %70 = arith.truncf %69 : vector<12x64xf32> to vector<12x64xbf16>
    %cst_39 = arith.constant dense<0.000000e+00> : vector<12x256xf32>
    %71 = tpu.matmul %70, %6, %cst_39 {dimension_numbers = #tpu.dot_dimension_numbers<[1], [0], [0], [1], [0, 0, 1, 1], [], []>} : vector<12x64xbf16>, vector<64x256xbf16>, vector<12x256xf32> -> vector<12x256xf32>
    %72 = arith.addf %68, %71 : vector<12x256xf32>
    %73 = vector.extract_strided_slice %72 {offsets = [0, 0], sizes = [12, 64], strides = [1, 1]} : vector<12x256xf32> to vector<12x64xf32>
    %74 = arith.negf %73 : vector<12x64xf32>
    %75 = math.exp %74 : vector<12x64xf32>
    %cst_40 = arith.constant 1.000000e+00 : f32
    %76 = vector.broadcast %cst_40 : f32 to vector<12x64xf32>
    %77 = arith.addf %76, %75 : vector<12x64xf32>
    %78 = arith.divf %76, %77 : vector<12x64xf32>
    %79 = vector.extract_strided_slice %72 {offsets = [0, 64], sizes = [12, 64], strides = [1, 1]} : vector<12x256xf32> to vector<12x64xf32>
    %80 = arith.negf %79 : vector<12x64xf32>
    %81 = math.exp %80 : vector<12x64xf32>
    %cst_41 = arith.constant 1.000000e+00 : f32
    %82 = vector.broadcast %cst_41 : f32 to vector<12x64xf32>
    %83 = arith.addf %82, %81 : vector<12x64xf32>
    %84 = arith.divf %82, %83 : vector<12x64xf32>
    %85 = vector.extract_strided_slice %72 {offsets = [0, 128], sizes = [12, 64], strides = [1, 1]} : vector<12x256xf32> to vector<12x64xf32>
    %86 = math.tanh %85 : vector<12x64xf32>
    %87 = vector.extract_strided_slice %72 {offsets = [0, 192], sizes = [12, 64], strides = [1, 1]} : vector<12x256xf32> to vector<12x64xf32>
    %88 = arith.negf %87 : vector<12x64xf32>
    %89 = math.exp %88 : vector<12x64xf32>
    %cst_42 = arith.constant 1.000000e+00 : f32
    %90 = vector.broadcast %cst_42 : f32 to vector<12x64xf32>
    %91 = arith.addf %90, %89 : vector<12x64xf32>
    %92 = arith.divf %90, %91 : vector<12x64xf32>
    %c0_43 = arith.constant 0 : index
    %c0_44 = arith.constant 0 : index
    %93 = vector.load %arg7[%c0_43, %c0_44] : memref<12x64xf32, #tpu.memory_space<vmem>>, vector<12x64xf32>
    %94 = arith.mulf %84, %93 : vector<12x64xf32>
    %95 = arith.mulf %78, %86 : vector<12x64xf32>
    %96 = arith.addf %94, %95 : vector<12x64xf32>
    %97 = math.tanh %96 : vector<12x64xf32>
    %98 = arith.mulf %92, %97 : vector<12x64xf32>
    %c0_45 = arith.constant 0 : index
    %c0_46 = arith.constant 0 : index
    %99 = vector.load %arg7[%c0_45, %c0_46] : memref<12x64xf32, #tpu.memory_space<vmem>>, vector<12x64xf32>
    tpu.vector_store %arg7[%c0_45, %c0_46], %96 {strides = array<i32>} : memref<12x64xf32, #tpu.memory_space<vmem>>, vector<12x64xf32>,
    %c0_47 = arith.constant 0 : index
    %c0_48 = arith.constant 0 : index
    %100 = vector.load %arg6[%c0_47, %c0_48] : memref<12x64xf32, #tpu.memory_space<vmem>>, vector<12x64xf32>
    tpu.vector_store %arg6[%c0_47, %c0_48], %98 {strides = array<i32>} : memref<12x64xf32, #tpu.memory_space<vmem>>, vector<12x64xf32>,
    %101 = vector.extract_strided_slice %98 {offsets = [0, 0], sizes = [12, 32], strides = [1, 1]} : vector<12x64xf32> to vector<12x32xf32>
    %c1_49 = arith.constant 1 : index
    %c0_50 = arith.constant 0 : index
    %c0_51 = arith.constant 0 : index
    %102 = vector.load %arg4[%c1_49, %c0_50, %c0_51] : memref<8x12x32xf32, #tpu.memory_space<vmem>>, vector<1x12x32xf32>
    %103 = vector.shape_cast %102 : vector<1x12x32xf32> to vector<12x32xf32>
    %104 = vector.shape_cast %101 : vector<12x32xf32> to vector<1x12x32xf32>
    tpu.vector_store %arg4[%c1_49, %c0_50, %c0_51], %104 {strides = array<i32>} : memref<8x12x32xf32, #tpu.memory_space<vmem>>, vector<1x12x32xf32>,
    %105 = vector.extract_strided_slice %98 {offsets = [0, 32], sizes = [12, 32], strides = [1, 1]} : vector<12x64xf32> to vector<12x32xf32>
    %c6_52 = arith.constant 6 : index
    %c0_53 = arith.constant 0 : index
    %c0_54 = arith.constant 0 : index
    %106 = vector.load %arg5[%c6_52, %c0_53, %c0_54] : memref<8x12x32xf32, #tpu.memory_space<vmem>>, vector<1x12x32xf32>
    %107 = vector.shape_cast %106 : vector<1x12x32xf32> to vector<12x32xf32>
    %108 = vector.shape_cast %105 : vector<12x32xf32> to vector<1x12x32xf32>
    tpu.vector_store %arg5[%c6_52, %c0_53, %c0_54], %108 {strides = array<i32>} : memref<8x12x32xf32, #tpu.memory_space<vmem>>, vector<1x12x32xf32>,
    %c2 = arith.constant 2 : index
    %c0_55 = arith.constant 0 : index
    %c0_56 = arith.constant 0 : index
    %109 = vector.load %arg1[%c2, %c0_55, %c0_56] : memref<8x12x256xf32, #tpu.memory_space<vmem>>, vector<1x12x256xf32>
    %110 = vector.shape_cast %109 : vector<1x12x256xf32> to vector<12x256xf32>
    %111 = vector.broadcast %4 : vector<1x256xf32> to vector<12x256xf32>
    %112 = arith.mulf %111, %110 : vector<12x256xf32>
    %cst_57 = arith.constant 1.000000e+00 : f32
    %113 = vector.broadcast %cst_57 : f32 to vector<1x256xf32>
    %114 = arith.subf %113, %4 : vector<1x256xf32>
    %c5 = arith.constant 5 : index
    %c0_58 = arith.constant 0 : index
    %c0_59 = arith.constant 0 : index
    %115 = vector.load %arg1[%c5, %c0_58, %c0_59] : memref<8x12x256xf32, #tpu.memory_space<vmem>>, vector<1x12x256xf32>
    %116 = vector.shape_cast %115 : vector<1x12x256xf32> to vector<12x256xf32>
    %117 = vector.broadcast %114 : vector<1x256xf32> to vector<12x256xf32>
    %118 = arith.mulf %117, %116 : vector<12x256xf32>
    %119 = arith.addf %112, %118 : vector<12x256xf32>
    %c0_60 = arith.constant 0 : index
    %c0_61 = arith.constant 0 : index
    %120 = vector.load %arg6[%c0_60, %c0_61] : memref<12x64xf32, #tpu.memory_space<vmem>>, vector<12x64xf32>
    %121 = arith.truncf %120 : vector<12x64xf32> to vector<12x64xbf16>
    %cst_62 = arith.constant dense<0.000000e+00> : vector<12x256xf32>
    %122 = tpu.matmul %121, %6, %cst_62 {dimension_numbers = #tpu.dot_dimension_numbers<[1], [0], [0], [1], [0, 0, 1, 1], [], []>} : vector<12x64xbf16>, vector<64x256xbf16>, vector<12x256xf32> -> vector<12x256xf32>
    %123 = arith.addf %119, %122 : vector<12x256xf32>
    %124 = vector.extract_strided_slice %123 {offsets = [0, 0], sizes = [12, 64], strides = [1, 1]} : vector<12x256xf32> to vector<12x64xf32>
    %125 = arith.negf %124 : vector<12x64xf32>
    %126 = math.exp %125 : vector<12x64xf32>
    %cst_63 = arith.constant 1.000000e+00 : f32
    %127 = vector.broadcast %cst_63 : f32 to vector<12x64xf32>
    %128 = arith.addf %127, %126 : vector<12x64xf32>
    %129 = arith.divf %127, %128 : vector<12x64xf32>
    %130 = vector.extract_strided_slice %123 {offsets = [0, 64], sizes = [12, 64], strides = [1, 1]} : vector<12x256xf32> to vector<12x64xf32>
    %131 = arith.negf %130 : vector<12x64xf32>
    %132 = math.exp %131 : vector<12x64xf32>
    %cst_64 = arith.constant 1.000000e+00 : f32
    %133 = vector.broadcast %cst_64 : f32 to vector<12x64xf32>
    %134 = arith.addf %133, %132 : vector<12x64xf32>
    %135 = arith.divf %133, %134 : vector<12x64xf32>
    %136 = vector.extract_strided_slice %123 {offsets = [0, 128], sizes = [12, 64], strides = [1, 1]} : vector<12x256xf32> to vector<12x64xf32>
    %137 = math.tanh %136 : vector<12x64xf32>
    %138 = vector.extract_strided_slice %123 {offsets = [0, 192], sizes = [12, 64], strides = [1, 1]} : vector<12x256xf32> to vector<12x64xf32>
    %139 = arith.negf %138 : vector<12x64xf32>
    %140 = math.exp %139 : vector<12x64xf32>
    %cst_65 = arith.constant 1.000000e+00 : f32
    %141 = vector.broadcast %cst_65 : f32 to vector<12x64xf32>
    %142 = arith.addf %141, %140 : vector<12x64xf32>
    %143 = arith.divf %141, %142 : vector<12x64xf32>
    %c0_66 = arith.constant 0 : index
    %c0_67 = arith.constant 0 : index
    %144 = vector.load %arg7[%c0_66, %c0_67] : memref<12x64xf32, #tpu.memory_space<vmem>>, vector<12x64xf32>
    %145 = arith.mulf %135, %144 : vector<12x64xf32>
    %146 = arith.mulf %129, %137 : vector<12x64xf32>
    %147 = arith.addf %145, %146 : vector<12x64xf32>
    %148 = math.tanh %147 : vector<12x64xf32>
    %149 = arith.mulf %143, %148 : vector<12x64xf32>
    %c0_68 = arith.constant 0 : index
    %c0_69 = arith.constant 0 : index
    %150 = vector.load %arg7[%c0_68, %c0_69] : memref<12x64xf32, #tpu.memory_space<vmem>>, vector<12x64xf32>
    tpu.vector_store %arg7[%c0_68, %c0_69], %147 {strides = array<i32>} : memref<12x64xf32, #tpu.memory_space<vmem>>, vector<12x64xf32>,
    %c0_70 = arith.constant 0 : index
    %c0_71 = arith.constant 0 : index
    %151 = vector.load %arg6[%c0_70, %c0_71] : memref<12x64xf32, #tpu.memory_space<vmem>>, vector<12x64xf32>
    tpu.vector_store %arg6[%c0_70, %c0_71], %149 {strides = array<i32>} : memref<12x64xf32, #tpu.memory_space<vmem>>, vector<12x64xf32>,
    %152 = vector.extract_strided_slice %149 {offsets = [0, 0], sizes = [12, 32], strides = [1, 1]} : vector<12x64xf32> to vector<12x32xf32>
    %c2_72 = arith.constant 2 : index
    %c0_73 = arith.constant 0 : index
    %c0_74 = arith.constant 0 : index
    %153 = vector.load %arg4[%c2_72, %c0_73, %c0_74] : memref<8x12x32xf32, #tpu.memory_space<vmem>>, vector<1x12x32xf32>
    %154 = vector.shape_cast %153 : vector<1x12x32xf32> to vector<12x32xf32>
    %155 = vector.shape_cast %152 : vector<12x32xf32> to vector<1x12x32xf32>
    tpu.vector_store %arg4[%c2_72, %c0_73, %c0_74], %155 {strides = array<i32>} : memref<8x12x32xf32, #tpu.memory_space<vmem>>, vector<1x12x32xf32>,
    %156 = vector.extract_strided_slice %149 {offsets = [0, 32], sizes = [12, 32], strides = [1, 1]} : vector<12x64xf32> to vector<12x32xf32>
    %c5_75 = arith.constant 5 : index
    %c0_76 = arith.constant 0 : index
    %c0_77 = arith.constant 0 : index
    %157 = vector.load %arg5[%c5_75, %c0_76, %c0_77] : memref<8x12x32xf32, #tpu.memory_space<vmem>>, vector<1x12x32xf32>
    %158 = vector.shape_cast %157 : vector<1x12x32xf32> to vector<12x32xf32>
    %159 = vector.shape_cast %156 : vector<12x32xf32> to vector<1x12x32xf32>
    tpu.vector_store %arg5[%c5_75, %c0_76, %c0_77], %159 {strides = array<i32>} : memref<8x12x32xf32, #tpu.memory_space<vmem>>, vector<1x12x32xf32>,
    %c3 = arith.constant 3 : index
    %c0_78 = arith.constant 0 : index
    %c0_79 = arith.constant 0 : index
    %160 = vector.load %arg1[%c3, %c0_78, %c0_79] : memref<8x12x256xf32, #tpu.memory_space<vmem>>, vector<1x12x256xf32>
    %161 = vector.shape_cast %160 : vector<1x12x256xf32> to vector<12x256xf32>
    %162 = vector.broadcast %4 : vector<1x256xf32> to vector<12x256xf32>
    %163 = arith.mulf %162, %161 : vector<12x256xf32>
    %cst_80 = arith.constant 1.000000e+00 : f32
    %164 = vector.broadcast %cst_80 : f32 to vector<1x256xf32>
    %165 = arith.subf %164, %4 : vector<1x256xf32>
    %c4 = arith.constant 4 : index
    %c0_81 = arith.constant 0 : index
    %c0_82 = arith.constant 0 : index
    %166 = vector.load %arg1[%c4, %c0_81, %c0_82] : memref<8x12x256xf32, #tpu.memory_space<vmem>>, vector<1x12x256xf32>
    %167 = vector.shape_cast %166 : vector<1x12x256xf32> to vector<12x256xf32>
    %168 = vector.broadcast %165 : vector<1x256xf32> to vector<12x256xf32>
    %169 = arith.mulf %168, %167 : vector<12x256xf32>
    %170 = arith.addf %163, %169 : vector<12x256xf32>
    %c0_83 = arith.constant 0 : index
    %c0_84 = arith.constant 0 : index
    %171 = vector.load %arg6[%c0_83, %c0_84] : memref<12x64xf32, #tpu.memory_space<vmem>>, vector<12x64xf32>
    %172 = arith.truncf %171 : vector<12x64xf32> to vector<12x64xbf16>
    %cst_85 = arith.constant dense<0.000000e+00> : vector<12x256xf32>
    %173 = tpu.matmul %172, %6, %cst_85 {dimension_numbers = #tpu.dot_dimension_numbers<[1], [0], [0], [1], [0, 0, 1, 1], [], []>} : vector<12x64xbf16>, vector<64x256xbf16>, vector<12x256xf32> -> vector<12x256xf32>
    %174 = arith.addf %170, %173 : vector<12x256xf32>
    %175 = vector.extract_strided_slice %174 {offsets = [0, 0], sizes = [12, 64], strides = [1, 1]} : vector<12x256xf32> to vector<12x64xf32>
    %176 = arith.negf %175 : vector<12x64xf32>
    %177 = math.exp %176 : vector<12x64xf32>
    %cst_86 = arith.constant 1.000000e+00 : f32
    %178 = vector.broadcast %cst_86 : f32 to vector<12x64xf32>
    %179 = arith.addf %178, %177 : vector<12x64xf32>
    %180 = arith.divf %178, %179 : vector<12x64xf32>
    %181 = vector.extract_strided_slice %174 {offsets = [0, 64], sizes = [12, 64], strides = [1, 1]} : vector<12x256xf32> to vector<12x64xf32>
    %182 = arith.negf %181 : vector<12x64xf32>
    %183 = math.exp %182 : vector<12x64xf32>
    %cst_87 = arith.constant 1.000000e+00 : f32
    %184 = vector.broadcast %cst_87 : f32 to vector<12x64xf32>
    %185 = arith.addf %184, %183 : vector<12x64xf32>
    %186 = arith.divf %184, %185 : vector<12x64xf32>
    %187 = vector.extract_strided_slice %174 {offsets = [0, 128], sizes = [12, 64], strides = [1, 1]} : vector<12x256xf32> to vector<12x64xf32>
    %188 = math.tanh %187 : vector<12x64xf32>
    %189 = vector.extract_strided_slice %174 {offsets = [0, 192], sizes = [12, 64], strides = [1, 1]} : vector<12x256xf32> to vector<12x64xf32>
    %190 = arith.negf %189 : vector<12x64xf32>
    %191 = math.exp %190 : vector<12x64xf32>
    %cst_88 = arith.constant 1.000000e+00 : f32
    %192 = vector.broadcast %cst_88 : f32 to vector<12x64xf32>
    %193 = arith.addf %192, %191 : vector<12x64xf32>
    %194 = arith.divf %192, %193 : vector<12x64xf32>
    %c0_89 = arith.constant 0 : index
    %c0_90 = arith.constant 0 : index
    %195 = vector.load %arg7[%c0_89, %c0_90] : memref<12x64xf32, #tpu.memory_space<vmem>>, vector<12x64xf32>
    %196 = arith.mulf %186, %195 : vector<12x64xf32>
    %197 = arith.mulf %180, %188 : vector<12x64xf32>
    %198 = arith.addf %196, %197 : vector<12x64xf32>
    %199 = math.tanh %198 : vector<12x64xf32>
    %200 = arith.mulf %194, %199 : vector<12x64xf32>
    %c0_91 = arith.constant 0 : index
    %c0_92 = arith.constant 0 : index
    %201 = vector.load %arg7[%c0_91, %c0_92] : memref<12x64xf32, #tpu.memory_space<vmem>>, vector<12x64xf32>
    tpu.vector_store %arg7[%c0_91, %c0_92], %198 {strides = array<i32>} : memref<12x64xf32, #tpu.memory_space<vmem>>, vector<12x64xf32>,
    %c0_93 = arith.constant 0 : index
    %c0_94 = arith.constant 0 : index
    %202 = vector.load %arg6[%c0_93, %c0_94] : memref<12x64xf32, #tpu.memory_space<vmem>>, vector<12x64xf32>
    tpu.vector_store %arg6[%c0_93, %c0_94], %200 {strides = array<i32>} : memref<12x64xf32, #tpu.memory_space<vmem>>, vector<12x64xf32>,
    %203 = vector.extract_strided_slice %200 {offsets = [0, 0], sizes = [12, 32], strides = [1, 1]} : vector<12x64xf32> to vector<12x32xf32>
    %c3_95 = arith.constant 3 : index
    %c0_96 = arith.constant 0 : index
    %c0_97 = arith.constant 0 : index
    %204 = vector.load %arg4[%c3_95, %c0_96, %c0_97] : memref<8x12x32xf32, #tpu.memory_space<vmem>>, vector<1x12x32xf32>
    %205 = vector.shape_cast %204 : vector<1x12x32xf32> to vector<12x32xf32>
    %206 = vector.shape_cast %203 : vector<12x32xf32> to vector<1x12x32xf32>
    tpu.vector_store %arg4[%c3_95, %c0_96, %c0_97], %206 {strides = array<i32>} : memref<8x12x32xf32, #tpu.memory_space<vmem>>, vector<1x12x32xf32>,
    %207 = vector.extract_strided_slice %200 {offsets = [0, 32], sizes = [12, 32], strides = [1, 1]} : vector<12x64xf32> to vector<12x32xf32>
    %c4_98 = arith.constant 4 : index
    %c0_99 = arith.constant 0 : index
    %c0_100 = arith.constant 0 : index
    %208 = vector.load %arg5[%c4_98, %c0_99, %c0_100] : memref<8x12x32xf32, #tpu.memory_space<vmem>>, vector<1x12x32xf32>
    %209 = vector.shape_cast %208 : vector<1x12x32xf32> to vector<12x32xf32>
    %210 = vector.shape_cast %207 : vector<12x32xf32> to vector<1x12x32xf32>
    tpu.vector_store %arg5[%c4_98, %c0_99, %c0_100], %210 {strides = array<i32>} : memref<8x12x32xf32, #tpu.memory_space<vmem>>, vector<1x12x32xf32>,
    %c4_101 = arith.constant 4 : index
    %c0_102 = arith.constant 0 : index
    %c0_103 = arith.constant 0 : index
    %211 = vector.load %arg1[%c4_101, %c0_102, %c0_103] : memref<8x12x256xf32, #tpu.memory_space<vmem>>, vector<1x12x256xf32>
    %212 = vector.shape_cast %211 : vector<1x12x256xf32> to vector<12x256xf32>
    %213 = vector.broadcast %4 : vector<1x256xf32> to vector<12x256xf32>
    %214 = arith.mulf %213, %212 : vector<12x256xf32>
    %cst_104 = arith.constant 1.000000e+00 : f32
    %215 = vector.broadcast %cst_104 : f32 to vector<1x256xf32>
    %216 = arith.subf %215, %4 : vector<1x256xf32>
    %c3_105 = arith.constant 3 : index
    %c0_106 = arith.constant 0 : index
    %c0_107 = arith.constant 0 : index
    %217 = vector.load %arg1[%c3_105, %c0_106, %c0_107] : memref<8x12x256xf32, #tpu.memory_space<vmem>>, vector<1x12x256xf32>
    %218 = vector.shape_cast %217 : vector<1x12x256xf32> to vector<12x256xf32>
    %219 = vector.broadcast %216 : vector<1x256xf32> to vector<12x256xf32>
    %220 = arith.mulf %219, %218 : vector<12x256xf32>
    %221 = arith.addf %214, %220 : vector<12x256xf32>
    %c0_108 = arith.constant 0 : index
    %c0_109 = arith.constant 0 : index
    %222 = vector.load %arg6[%c0_108, %c0_109] : memref<12x64xf32, #tpu.memory_space<vmem>>, vector<12x64xf32>
    %223 = arith.truncf %222 : vector<12x64xf32> to vector<12x64xbf16>
    %cst_110 = arith.constant dense<0.000000e+00> : vector<12x256xf32>
    %224 = tpu.matmul %223, %6, %cst_110 {dimension_numbers = #tpu.dot_dimension_numbers<[1], [0], [0], [1], [0, 0, 1, 1], [], []>} : vector<12x64xbf16>, vector<64x256xbf16>, vector<12x256xf32> -> vector<12x256xf32>
    %225 = arith.addf %221, %224 : vector<12x256xf32>
    %226 = vector.extract_strided_slice %225 {offsets = [0, 0], sizes = [12, 64], strides = [1, 1]} : vector<12x256xf32> to vector<12x64xf32>
    %227 = arith.negf %226 : vector<12x64xf32>
    %228 = math.exp %227 : vector<12x64xf32>
    %cst_111 = arith.constant 1.000000e+00 : f32
    %229 = vector.broadcast %cst_111 : f32 to vector<12x64xf32>
    %230 = arith.addf %229, %228 : vector<12x64xf32>
    %231 = arith.divf %229, %230 : vector<12x64xf32>
    %232 = vector.extract_strided_slice %225 {offsets = [0, 64], sizes = [12, 64], strides = [1, 1]} : vector<12x256xf32> to vector<12x64xf32>
    %233 = arith.negf %232 : vector<12x64xf32>
    %234 = math.exp %233 : vector<12x64xf32>
    %cst_112 = arith.constant 1.000000e+00 : f32
    %235 = vector.broadcast %cst_112 : f32 to vector<12x64xf32>
    %236 = arith.addf %235, %234 : vector<12x64xf32>
    %237 = arith.divf %235, %236 : vector<12x64xf32>
    %238 = vector.extract_strided_slice %225 {offsets = [0, 128], sizes = [12, 64], strides = [1, 1]} : vector<12x256xf32> to vector<12x64xf32>
    %239 = math.tanh %238 : vector<12x64xf32>
    %240 = vector.extract_strided_slice %225 {offsets = [0, 192], sizes = [12, 64], strides = [1, 1]} : vector<12x256xf32> to vector<12x64xf32>
    %241 = arith.negf %240 : vector<12x64xf32>
    %242 = math.exp %241 : vector<12x64xf32>
    %cst_113 = arith.constant 1.000000e+00 : f32
    %243 = vector.broadcast %cst_113 : f32 to vector<12x64xf32>
    %244 = arith.addf %243, %242 : vector<12x64xf32>
    %245 = arith.divf %243, %244 : vector<12x64xf32>
    %c0_114 = arith.constant 0 : index
    %c0_115 = arith.constant 0 : index
    %246 = vector.load %arg7[%c0_114, %c0_115] : memref<12x64xf32, #tpu.memory_space<vmem>>, vector<12x64xf32>
    %247 = arith.mulf %237, %246 : vector<12x64xf32>
    %248 = arith.mulf %231, %239 : vector<12x64xf32>
    %249 = arith.addf %247, %248 : vector<12x64xf32>
    %250 = math.tanh %249 : vector<12x64xf32>
    %251 = arith.mulf %245, %250 : vector<12x64xf32>
    %c0_116 = arith.constant 0 : index
    %c0_117 = arith.constant 0 : index
    %252 = vector.load %arg7[%c0_116, %c0_117] : memref<12x64xf32, #tpu.memory_space<vmem>>, vector<12x64xf32>
    tpu.vector_store %arg7[%c0_116, %c0_117], %249 {strides = array<i32>} : memref<12x64xf32, #tpu.memory_space<vmem>>, vector<12x64xf32>,
    %c0_118 = arith.constant 0 : index
    %c0_119 = arith.constant 0 : index
    %253 = vector.load %arg6[%c0_118, %c0_119] : memref<12x64xf32, #tpu.memory_space<vmem>>, vector<12x64xf32>
    tpu.vector_store %arg6[%c0_118, %c0_119], %251 {strides = array<i32>} : memref<12x64xf32, #tpu.memory_space<vmem>>, vector<12x64xf32>,
    %254 = vector.extract_strided_slice %251 {offsets = [0, 0], sizes = [12, 32], strides = [1, 1]} : vector<12x64xf32> to vector<12x32xf32>
    %c4_120 = arith.constant 4 : index
    %c0_121 = arith.constant 0 : index
    %c0_122 = arith.constant 0 : index
    %255 = vector.load %arg4[%c4_120, %c0_121, %c0_122] : memref<8x12x32xf32, #tpu.memory_space<vmem>>, vector<1x12x32xf32>
    %256 = vector.shape_cast %255 : vector<1x12x32xf32> to vector<12x32xf32>
    %257 = vector.shape_cast %254 : vector<12x32xf32> to vector<1x12x32xf32>
    tpu.vector_store %arg4[%c4_120, %c0_121, %c0_122], %257 {strides = array<i32>} : memref<8x12x32xf32, #tpu.memory_space<vmem>>, vector<1x12x32xf32>,
    %258 = vector.extract_strided_slice %251 {offsets = [0, 32], sizes = [12, 32], strides = [1, 1]} : vector<12x64xf32> to vector<12x32xf32>
    %c3_123 = arith.constant 3 : index
    %c0_124 = arith.constant 0 : index
    %c0_125 = arith.constant 0 : index
    %259 = vector.load %arg5[%c3_123, %c0_124, %c0_125] : memref<8x12x32xf32, #tpu.memory_space<vmem>>, vector<1x12x32xf32>
    %260 = vector.shape_cast %259 : vector<1x12x32xf32> to vector<12x32xf32>
    %261 = vector.shape_cast %258 : vector<12x32xf32> to vector<1x12x32xf32>
    tpu.vector_store %arg5[%c3_123, %c0_124, %c0_125], %261 {strides = array<i32>} : memref<8x12x32xf32, #tpu.memory_space<vmem>>, vector<1x12x32xf32>,
    %c5_126 = arith.constant 5 : index
    %c0_127 = arith.constant 0 : index
    %c0_128 = arith.constant 0 : index
    %262 = vector.load %arg1[%c5_126, %c0_127, %c0_128] : memref<8x12x256xf32, #tpu.memory_space<vmem>>, vector<1x12x256xf32>
    %263 = vector.shape_cast %262 : vector<1x12x256xf32> to vector<12x256xf32>
    %264 = vector.broadcast %4 : vector<1x256xf32> to vector<12x256xf32>
    %265 = arith.mulf %264, %263 : vector<12x256xf32>
    %cst_129 = arith.constant 1.000000e+00 : f32
    %266 = vector.broadcast %cst_129 : f32 to vector<1x256xf32>
    %267 = arith.subf %266, %4 : vector<1x256xf32>
    %c2_130 = arith.constant 2 : index
    %c0_131 = arith.constant 0 : index
    %c0_132 = arith.constant 0 : index
    %268 = vector.load %arg1[%c2_130, %c0_131, %c0_132] : memref<8x12x256xf32, #tpu.memory_space<vmem>>, vector<1x12x256xf32>
    %269 = vector.shape_cast %268 : vector<1x12x256xf32> to vector<12x256xf32>
    %270 = vector.broadcast %267 : vector<1x256xf32> to vector<12x256xf32>
    %271 = arith.mulf %270, %269 : vector<12x256xf32>
    %272 = arith.addf %265, %271 : vector<12x256xf32>
    %c0_133 = arith.constant 0 : index
    %c0_134 = arith.constant 0 : index
    %273 = vector.load %arg6[%c0_133, %c0_134] : memref<12x64xf32, #tpu.memory_space<vmem>>, vector<12x64xf32>
    %274 = arith.truncf %273 : vector<12x64xf32> to vector<12x64xbf16>
    %cst_135 = arith.constant dense<0.000000e+00> : vector<12x256xf32>
    %275 = tpu.matmul %274, %6, %cst_135 {dimension_numbers = #tpu.dot_dimension_numbers<[1], [0], [0], [1], [0, 0, 1, 1], [], []>} : vector<12x64xbf16>, vector<64x256xbf16>, vector<12x256xf32> -> vector<12x256xf32>
    %276 = arith.addf %272, %275 : vector<12x256xf32>
    %277 = vector.extract_strided_slice %276 {offsets = [0, 0], sizes = [12, 64], strides = [1, 1]} : vector<12x256xf32> to vector<12x64xf32>
    %278 = arith.negf %277 : vector<12x64xf32>
    %279 = math.exp %278 : vector<12x64xf32>
    %cst_136 = arith.constant 1.000000e+00 : f32
    %280 = vector.broadcast %cst_136 : f32 to vector<12x64xf32>
    %281 = arith.addf %280, %279 : vector<12x64xf32>
    %282 = arith.divf %280, %281 : vector<12x64xf32>
    %283 = vector.extract_strided_slice %276 {offsets = [0, 64], sizes = [12, 64], strides = [1, 1]} : vector<12x256xf32> to vector<12x64xf32>
    %284 = arith.negf %283 : vector<12x64xf32>
    %285 = math.exp %284 : vector<12x64xf32>
    %cst_137 = arith.constant 1.000000e+00 : f32
    %286 = vector.broadcast %cst_137 : f32 to vector<12x64xf32>
    %287 = arith.addf %286, %285 : vector<12x64xf32>
    %288 = arith.divf %286, %287 : vector<12x64xf32>
    %289 = vector.extract_strided_slice %276 {offsets = [0, 128], sizes = [12, 64], strides = [1, 1]} : vector<12x256xf32> to vector<12x64xf32>
    %290 = math.tanh %289 : vector<12x64xf32>
    %291 = vector.extract_strided_slice %276 {offsets = [0, 192], sizes = [12, 64], strides = [1, 1]} : vector<12x256xf32> to vector<12x64xf32>
    %292 = arith.negf %291 : vector<12x64xf32>
    %293 = math.exp %292 : vector<12x64xf32>
    %cst_138 = arith.constant 1.000000e+00 : f32
    %294 = vector.broadcast %cst_138 : f32 to vector<12x64xf32>
    %295 = arith.addf %294, %293 : vector<12x64xf32>
    %296 = arith.divf %294, %295 : vector<12x64xf32>
    %c0_139 = arith.constant 0 : index
    %c0_140 = arith.constant 0 : index
    %297 = vector.load %arg7[%c0_139, %c0_140] : memref<12x64xf32, #tpu.memory_space<vmem>>, vector<12x64xf32>
    %298 = arith.mulf %288, %297 : vector<12x64xf32>
    %299 = arith.mulf %282, %290 : vector<12x64xf32>
    %300 = arith.addf %298, %299 : vector<12x64xf32>
    %301 = math.tanh %300 : vector<12x64xf32>
    %302 = arith.mulf %296, %301 : vector<12x64xf32>
    %c0_141 = arith.constant 0 : index
    %c0_142 = arith.constant 0 : index
    %303 = vector.load %arg7[%c0_141, %c0_142] : memref<12x64xf32, #tpu.memory_space<vmem>>, vector<12x64xf32>
    tpu.vector_store %arg7[%c0_141, %c0_142], %300 {strides = array<i32>} : memref<12x64xf32, #tpu.memory_space<vmem>>, vector<12x64xf32>,
    %c0_143 = arith.constant 0 : index
    %c0_144 = arith.constant 0 : index
    %304 = vector.load %arg6[%c0_143, %c0_144] : memref<12x64xf32, #tpu.memory_space<vmem>>, vector<12x64xf32>
    tpu.vector_store %arg6[%c0_143, %c0_144], %302 {strides = array<i32>} : memref<12x64xf32, #tpu.memory_space<vmem>>, vector<12x64xf32>,
    %305 = vector.extract_strided_slice %302 {offsets = [0, 0], sizes = [12, 32], strides = [1, 1]} : vector<12x64xf32> to vector<12x32xf32>
    %c5_145 = arith.constant 5 : index
    %c0_146 = arith.constant 0 : index
    %c0_147 = arith.constant 0 : index
    %306 = vector.load %arg4[%c5_145, %c0_146, %c0_147] : memref<8x12x32xf32, #tpu.memory_space<vmem>>, vector<1x12x32xf32>
    %307 = vector.shape_cast %306 : vector<1x12x32xf32> to vector<12x32xf32>
    %308 = vector.shape_cast %305 : vector<12x32xf32> to vector<1x12x32xf32>
    tpu.vector_store %arg4[%c5_145, %c0_146, %c0_147], %308 {strides = array<i32>} : memref<8x12x32xf32, #tpu.memory_space<vmem>>, vector<1x12x32xf32>,
    %309 = vector.extract_strided_slice %302 {offsets = [0, 32], sizes = [12, 32], strides = [1, 1]} : vector<12x64xf32> to vector<12x32xf32>
    %c2_148 = arith.constant 2 : index
    %c0_149 = arith.constant 0 : index
    %c0_150 = arith.constant 0 : index
    %310 = vector.load %arg5[%c2_148, %c0_149, %c0_150] : memref<8x12x32xf32, #tpu.memory_space<vmem>>, vector<1x12x32xf32>
    %311 = vector.shape_cast %310 : vector<1x12x32xf32> to vector<12x32xf32>
    %312 = vector.shape_cast %309 : vector<12x32xf32> to vector<1x12x32xf32>
    tpu.vector_store %arg5[%c2_148, %c0_149, %c0_150], %312 {strides = array<i32>} : memref<8x12x32xf32, #tpu.memory_space<vmem>>, vector<1x12x32xf32>,
    %c6_151 = arith.constant 6 : index
    %c0_152 = arith.constant 0 : index
    %c0_153 = arith.constant 0 : index
    %313 = vector.load %arg1[%c6_151, %c0_152, %c0_153] : memref<8x12x256xf32, #tpu.memory_space<vmem>>, vector<1x12x256xf32>
    %314 = vector.shape_cast %313 : vector<1x12x256xf32> to vector<12x256xf32>
    %315 = vector.broadcast %4 : vector<1x256xf32> to vector<12x256xf32>
    %316 = arith.mulf %315, %314 : vector<12x256xf32>
    %cst_154 = arith.constant 1.000000e+00 : f32
    %317 = vector.broadcast %cst_154 : f32 to vector<1x256xf32>
    %318 = arith.subf %317, %4 : vector<1x256xf32>
    %c1_155 = arith.constant 1 : index
    %c0_156 = arith.constant 0 : index
    %c0_157 = arith.constant 0 : index
    %319 = vector.load %arg1[%c1_155, %c0_156, %c0_157] : memref<8x12x256xf32, #tpu.memory_space<vmem>>, vector<1x12x256xf32>
    %320 = vector.shape_cast %319 : vector<1x12x256xf32> to vector<12x256xf32>
    %321 = vector.broadcast %318 : vector<1x256xf32> to vector<12x256xf32>
    %322 = arith.mulf %321, %320 : vector<12x256xf32>
    %323 = arith.addf %316, %322 : vector<12x256xf32>
    %c0_158 = arith.constant 0 : index
    %c0_159 = arith.constant 0 : index
    %324 = vector.load %arg6[%c0_158, %c0_159] : memref<12x64xf32, #tpu.memory_space<vmem>>, vector<12x64xf32>
    %325 = arith.truncf %324 : vector<12x64xf32> to vector<12x64xbf16>
    %cst_160 = arith.constant dense<0.000000e+00> : vector<12x256xf32>
    %326 = tpu.matmul %325, %6, %cst_160 {dimension_numbers = #tpu.dot_dimension_numbers<[1], [0], [0], [1], [0, 0, 1, 1], [], []>} : vector<12x64xbf16>, vector<64x256xbf16>, vector<12x256xf32> -> vector<12x256xf32>
    %327 = arith.addf %323, %326 : vector<12x256xf32>
    %328 = vector.extract_strided_slice %327 {offsets = [0, 0], sizes = [12, 64], strides = [1, 1]} : vector<12x256xf32> to vector<12x64xf32>
    %329 = arith.negf %328 : vector<12x64xf32>
    %330 = math.exp %329 : vector<12x64xf32>
    %cst_161 = arith.constant 1.000000e+00 : f32
    %331 = vector.broadcast %cst_161 : f32 to vector<12x64xf32>
    %332 = arith.addf %331, %330 : vector<12x64xf32>
    %333 = arith.divf %331, %332 : vector<12x64xf32>
    %334 = vector.extract_strided_slice %327 {offsets = [0, 64], sizes = [12, 64], strides = [1, 1]} : vector<12x256xf32> to vector<12x64xf32>
    %335 = arith.negf %334 : vector<12x64xf32>
    %336 = math.exp %335 : vector<12x64xf32>
    %cst_162 = arith.constant 1.000000e+00 : f32
    %337 = vector.broadcast %cst_162 : f32 to vector<12x64xf32>
    %338 = arith.addf %337, %336 : vector<12x64xf32>
    %339 = arith.divf %337, %338 : vector<12x64xf32>
    %340 = vector.extract_strided_slice %327 {offsets = [0, 128], sizes = [12, 64], strides = [1, 1]} : vector<12x256xf32> to vector<12x64xf32>
    %341 = math.tanh %340 : vector<12x64xf32>
    %342 = vector.extract_strided_slice %327 {offsets = [0, 192], sizes = [12, 64], strides = [1, 1]} : vector<12x256xf32> to vector<12x64xf32>
    %343 = arith.negf %342 : vector<12x64xf32>
    %344 = math.exp %343 : vector<12x64xf32>
    %cst_163 = arith.constant 1.000000e+00 : f32
    %345 = vector.broadcast %cst_163 : f32 to vector<12x64xf32>
    %346 = arith.addf %345, %344 : vector<12x64xf32>
    %347 = arith.divf %345, %346 : vector<12x64xf32>
    %c0_164 = arith.constant 0 : index
    %c0_165 = arith.constant 0 : index
    %348 = vector.load %arg7[%c0_164, %c0_165] : memref<12x64xf32, #tpu.memory_space<vmem>>, vector<12x64xf32>
    %349 = arith.mulf %339, %348 : vector<12x64xf32>
    %350 = arith.mulf %333, %341 : vector<12x64xf32>
    %351 = arith.addf %349, %350 : vector<12x64xf32>
    %352 = math.tanh %351 : vector<12x64xf32>
    %353 = arith.mulf %347, %352 : vector<12x64xf32>
    %c0_166 = arith.constant 0 : index
    %c0_167 = arith.constant 0 : index
    %354 = vector.load %arg7[%c0_166, %c0_167] : memref<12x64xf32, #tpu.memory_space<vmem>>, vector<12x64xf32>
    tpu.vector_store %arg7[%c0_166, %c0_167], %351 {strides = array<i32>} : memref<12x64xf32, #tpu.memory_space<vmem>>, vector<12x64xf32>,
    %c0_168 = arith.constant 0 : index
    %c0_169 = arith.constant 0 : index
    %355 = vector.load %arg6[%c0_168, %c0_169] : memref<12x64xf32, #tpu.memory_space<vmem>>, vector<12x64xf32>
    tpu.vector_store %arg6[%c0_168, %c0_169], %353 {strides = array<i32>} : memref<12x64xf32, #tpu.memory_space<vmem>>, vector<12x64xf32>,
    %356 = vector.extract_strided_slice %353 {offsets = [0, 0], sizes = [12, 32], strides = [1, 1]} : vector<12x64xf32> to vector<12x32xf32>
    %c6_170 = arith.constant 6 : index
    %c0_171 = arith.constant 0 : index
    %c0_172 = arith.constant 0 : index
    %357 = vector.load %arg4[%c6_170, %c0_171, %c0_172] : memref<8x12x32xf32, #tpu.memory_space<vmem>>, vector<1x12x32xf32>
    %358 = vector.shape_cast %357 : vector<1x12x32xf32> to vector<12x32xf32>
    %359 = vector.shape_cast %356 : vector<12x32xf32> to vector<1x12x32xf32>
    tpu.vector_store %arg4[%c6_170, %c0_171, %c0_172], %359 {strides = array<i32>} : memref<8x12x32xf32, #tpu.memory_space<vmem>>, vector<1x12x32xf32>,
    %360 = vector.extract_strided_slice %353 {offsets = [0, 32], sizes = [12, 32], strides = [1, 1]} : vector<12x64xf32> to vector<12x32xf32>
    %c1_173 = arith.constant 1 : index
    %c0_174 = arith.constant 0 : index
    %c0_175 = arith.constant 0 : index
    %361 = vector.load %arg5[%c1_173, %c0_174, %c0_175] : memref<8x12x32xf32, #tpu.memory_space<vmem>>, vector<1x12x32xf32>
    %362 = vector.shape_cast %361 : vector<1x12x32xf32> to vector<12x32xf32>
    %363 = vector.shape_cast %360 : vector<12x32xf32> to vector<1x12x32xf32>
    tpu.vector_store %arg5[%c1_173, %c0_174, %c0_175], %363 {strides = array<i32>} : memref<8x12x32xf32, #tpu.memory_space<vmem>>, vector<1x12x32xf32>,
    %c7_176 = arith.constant 7 : index
    %c0_177 = arith.constant 0 : index
    %c0_178 = arith.constant 0 : index
    %364 = vector.load %arg1[%c7_176, %c0_177, %c0_178] : memref<8x12x256xf32, #tpu.memory_space<vmem>>, vector<1x12x256xf32>
    %365 = vector.shape_cast %364 : vector<1x12x256xf32> to vector<12x256xf32>
    %366 = vector.broadcast %4 : vector<1x256xf32> to vector<12x256xf32>
    %367 = arith.mulf %366, %365 : vector<12x256xf32>
    %cst_179 = arith.constant 1.000000e+00 : f32
    %368 = vector.broadcast %cst_179 : f32 to vector<1x256xf32>
    %369 = arith.subf %368, %4 : vector<1x256xf32>
    %c0_180 = arith.constant 0 : index
    %c0_181 = arith.constant 0 : index
    %c0_182 = arith.constant 0 : index
    %370 = vector.load %arg1[%c0_180, %c0_181, %c0_182] : memref<8x12x256xf32, #tpu.memory_space<vmem>>, vector<1x12x256xf32>
    %371 = vector.shape_cast %370 : vector<1x12x256xf32> to vector<12x256xf32>
    %372 = vector.broadcast %369 : vector<1x256xf32> to vector<12x256xf32>
    %373 = arith.mulf %372, %371 : vector<12x256xf32>
    %374 = arith.addf %367, %373 : vector<12x256xf32>
    %c0_183 = arith.constant 0 : index
    %c0_184 = arith.constant 0 : index
    %375 = vector.load %arg6[%c0_183, %c0_184] : memref<12x64xf32, #tpu.memory_space<vmem>>, vector<12x64xf32>
    %376 = arith.truncf %375 : vector<12x64xf32> to vector<12x64xbf16>
    %cst_185 = arith.constant dense<0.000000e+00> : vector<12x256xf32>
    %377 = tpu.matmul %376, %6, %cst_185 {dimension_numbers = #tpu.dot_dimension_numbers<[1], [0], [0], [1], [0, 0, 1, 1], [], []>} : vector<12x64xbf16>, vector<64x256xbf16>, vector<12x256xf32> -> vector<12x256xf32>
    %378 = arith.addf %374, %377 : vector<12x256xf32>
    %379 = vector.extract_strided_slice %378 {offsets = [0, 0], sizes = [12, 64], strides = [1, 1]} : vector<12x256xf32> to vector<12x64xf32>
    %380 = arith.negf %379 : vector<12x64xf32>
    %381 = math.exp %380 : vector<12x64xf32>
    %cst_186 = arith.constant 1.000000e+00 : f32
    %382 = vector.broadcast %cst_186 : f32 to vector<12x64xf32>
    %383 = arith.addf %382, %381 : vector<12x64xf32>
    %384 = arith.divf %382, %383 : vector<12x64xf32>
    %385 = vector.extract_strided_slice %378 {offsets = [0, 64], sizes = [12, 64], strides = [1, 1]} : vector<12x256xf32> to vector<12x64xf32>
    %386 = arith.negf %385 : vector<12x64xf32>
    %387 = math.exp %386 : vector<12x64xf32>
    %cst_187 = arith.constant 1.000000e+00 : f32
    %388 = vector.broadcast %cst_187 : f32 to vector<12x64xf32>
    %389 = arith.addf %388, %387 : vector<12x64xf32>
    %390 = arith.divf %388, %389 : vector<12x64xf32>
    %391 = vector.extract_strided_slice %378 {offsets = [0, 128], sizes = [12, 64], strides = [1, 1]} : vector<12x256xf32> to vector<12x64xf32>
    %392 = math.tanh %391 : vector<12x64xf32>
    %393 = vector.extract_strided_slice %378 {offsets = [0, 192], sizes = [12, 64], strides = [1, 1]} : vector<12x256xf32> to vector<12x64xf32>
    %394 = arith.negf %393 : vector<12x64xf32>
    %395 = math.exp %394 : vector<12x64xf32>
    %cst_188 = arith.constant 1.000000e+00 : f32
    %396 = vector.broadcast %cst_188 : f32 to vector<12x64xf32>
    %397 = arith.addf %396, %395 : vector<12x64xf32>
    %398 = arith.divf %396, %397 : vector<12x64xf32>
    %c0_189 = arith.constant 0 : index
    %c0_190 = arith.constant 0 : index
    %399 = vector.load %arg7[%c0_189, %c0_190] : memref<12x64xf32, #tpu.memory_space<vmem>>, vector<12x64xf32>
    %400 = arith.mulf %390, %399 : vector<12x64xf32>
    %401 = arith.mulf %384, %392 : vector<12x64xf32>
    %402 = arith.addf %400, %401 : vector<12x64xf32>
    %403 = math.tanh %402 : vector<12x64xf32>
    %404 = arith.mulf %398, %403 : vector<12x64xf32>
    %c0_191 = arith.constant 0 : index
    %c0_192 = arith.constant 0 : index
    %405 = vector.load %arg7[%c0_191, %c0_192] : memref<12x64xf32, #tpu.memory_space<vmem>>, vector<12x64xf32>
    tpu.vector_store %arg7[%c0_191, %c0_192], %402 {strides = array<i32>} : memref<12x64xf32, #tpu.memory_space<vmem>>, vector<12x64xf32>,
    %c0_193 = arith.constant 0 : index
    %c0_194 = arith.constant 0 : index
    %406 = vector.load %arg6[%c0_193, %c0_194] : memref<12x64xf32, #tpu.memory_space<vmem>>, vector<12x64xf32>
    tpu.vector_store %arg6[%c0_193, %c0_194], %404 {strides = array<i32>} : memref<12x64xf32, #tpu.memory_space<vmem>>, vector<12x64xf32>,
    %407 = vector.extract_strided_slice %404 {offsets = [0, 0], sizes = [12, 32], strides = [1, 1]} : vector<12x64xf32> to vector<12x32xf32>
    %c7_195 = arith.constant 7 : index
    %c0_196 = arith.constant 0 : index
    %c0_197 = arith.constant 0 : index
    %408 = vector.load %arg4[%c7_195, %c0_196, %c0_197] : memref<8x12x32xf32, #tpu.memory_space<vmem>>, vector<1x12x32xf32>
    %409 = vector.shape_cast %408 : vector<1x12x32xf32> to vector<12x32xf32>
    %410 = vector.shape_cast %407 : vector<12x32xf32> to vector<1x12x32xf32>
    tpu.vector_store %arg4[%c7_195, %c0_196, %c0_197], %410 {strides = array<i32>} : memref<8x12x32xf32, #tpu.memory_space<vmem>>, vector<1x12x32xf32>,
    %411 = vector.extract_strided_slice %404 {offsets = [0, 32], sizes = [12, 32], strides = [1, 1]} : vector<12x64xf32> to vector<12x32xf32>
    %c0_198 = arith.constant 0 : index
    %c0_199 = arith.constant 0 : index
    %c0_200 = arith.constant 0 : index
    %412 = vector.load %arg5[%c0_198, %c0_199, %c0_200] : memref<8x12x32xf32, #tpu.memory_space<vmem>>, vector<1x12x32xf32>
    %413 = vector.shape_cast %412 : vector<1x12x32xf32> to vector<12x32xf32>
    %414 = vector.shape_cast %411 : vector<12x32xf32> to vector<1x12x32xf32>
    tpu.vector_store %arg5[%c0_198, %c0_199, %c0_200], %414 {strides = array<i32>} : memref<8x12x32xf32, #tpu.memory_space<vmem>>, vector<1x12x32xf32>,
    return
  }
  func.func @transform_0(%arg0: i32) -> (i32, i32, i32) {
    %c0_i32 = arith.constant 0 : i32
    %c0_i32_0 = arith.constant 0 : i32
    %c0_i32_1 = arith.constant 0 : i32
    return %c0_i32, %arg0, %c0_i32_0 : i32, i32, i32
  }
  func.func @transform_1(%arg0: i32) -> (i32, i32) {
    %c0_i32 = arith.constant 0 : i32
    %c0_i32_0 = arith.constant 0 : i32
    %c0_i32_1 = arith.constant 0 : i32
    return %c0_i32, %c0_i32_0 : i32, i32
  }
  func.func @transform_2(%arg0: i32) -> (i32, i32) {
    %c0_i32 = arith.constant 0 : i32
    %c0_i32_0 = arith.constant 0 : i32
    %c0_i32_1 = arith.constant 0 : i32
    return %c0_i32, %c0_i32_0 : i32, i32
  }
  func.func @transform_3(%arg0: i32) -> (i32, i32, i32) {
    %c0_i32 = arith.constant 0 : i32
    %c0_i32_0 = arith.constant 0 : i32
    %c0_i32_1 = arith.constant 0 : i32
    return %c0_i32, %arg0, %c0_i32_0 : i32, i32, i32
  }
  func.func @transform_4(%arg0: i32) -> (i32, i32, i32) {
    %c0_i32 = arith.constant 0 : i32
    %c0_i32_0 = arith.constant 0 : i32
    %c0_i32_1 = arith.constant 0 : i32
    return %c0_i32, %arg0, %c0_i32_0 : i32, i32, i32
  }
}

module attributes {stable_mosaic.version = 11 : i64} {
  func.func @_prelu_matmul_kernel(%arg0: i32, %arg1: memref<96x16xf32, #tpu.memory_space<vmem>>, %arg2: memref<16x32xf32, #tpu.memory_space<vmem>>, %arg3: memref<1x32xf32, #tpu.memory_space<vmem>>, %arg4: memref<1x1xf32, #tpu.memory_space<vmem>>, %arg5: memref<96x32xf32, #tpu.memory_space<vmem>>) attributes {dimension_semantics = [#tpu.dimension_semantics<parallel>], iteration_bounds = array<i64: 1>, scalar_prefetch = 0 : i64, scratch_operands = 0 : i64, tpu.core_type = #tpu.core_type<tc>, window_params = [{transform_indices = @transform_0, window_bounds = array<i64: 96, 16>}, {pipeline_mode = #tpu.pipeline_mode<synchronous>, transform_indices = @transform_1, window_bounds = array<i64: 16, 32>}, {pipeline_mode = #tpu.pipeline_mode<synchronous>, transform_indices = @transform_2, window_bounds = array<i64: 1, 32>}, {pipeline_mode = #tpu.pipeline_mode<synchronous>, transform_indices = @transform_3, window_bounds = array<i64: 1, 1>}, {transform_indices = @transform_4, window_bounds = array<i64: 96, 32>}]} {
    %c0 = arith.constant 0 : index
    %c0_0 = arith.constant 0 : index
    %0 = vector.load %arg1[%c0, %c0_0] : memref<96x16xf32, #tpu.memory_space<vmem>>, vector<96x16xf32>
    %cst = arith.constant 0.000000e+00 : f32
    %1 = vector.broadcast %cst : f32 to vector<96x16xf32>
    %2 = arith.cmpf oge, %0, %1 : vector<96x16xf32>
    %c0_1 = arith.constant 0 : index
    %c0_2 = arith.constant 0 : index
    %3 = vector.load %arg4[%c0_1, %c0_2] : memref<1x1xf32, #tpu.memory_space<vmem>>, vector<1x1xf32>
    %4 = vector.broadcast %3 : vector<1x1xf32> to vector<96x16xf32>
    %5 = arith.mulf %4, %0 : vector<96x16xf32>
    %6 = arith.select %2, %0, %5 : vector<96x16xi1>, vector<96x16xf32>
    %7 = arith.truncf %6 : vector<96x16xf32> to vector<96x16xbf16>
    %c0_3 = arith.constant 0 : index
    %c0_4 = arith.constant 0 : index
    %8 = vector.load %arg2[%c0_3, %c0_4] : memref<16x32xf32, #tpu.memory_space<vmem>>, vector<16x32xf32>
    %9 = arith.truncf %8 : vector<16x32xf32> to vector<16x32xbf16>
    %cst_5 = arith.constant dense<0.000000e+00> : vector<96x32xf32>
    %10 = tpu.matmul %7, %9, %cst_5 {dimension_numbers = #tpu.dot_dimension_numbers<[1], [0], [0], [1], [0, 0, 1, 1], [], []>} : vector<96x16xbf16>, vector<16x32xbf16>, vector<96x32xf32> -> vector<96x32xf32>
    %c0_6 = arith.constant 0 : index
    %c0_7 = arith.constant 0 : index
    %11 = vector.load %arg3[%c0_6, %c0_7] : memref<1x32xf32, #tpu.memory_space<vmem>>, vector<1x32xf32>
    %12 = vector.broadcast %11 : vector<1x32xf32> to vector<96x32xf32>
    %13 = arith.addf %10, %12 : vector<96x32xf32>
    %c0_8 = arith.constant 0 : index
    %c0_9 = arith.constant 0 : index
    %14 = vector.load %arg5[%c0_8, %c0_9] : memref<96x32xf32, #tpu.memory_space<vmem>>, vector<96x32xf32>
    tpu.vector_store %arg5[%c0_8, %c0_9], %13 {strides = array<i32>} : memref<96x32xf32, #tpu.memory_space<vmem>>, vector<96x32xf32>,
    return
  }
  func.func @transform_0(%arg0: i32) -> (i32, i32) {
    %c0_i32 = arith.constant 0 : i32
    %c0_i32_0 = arith.constant 0 : i32
    return %arg0, %c0_i32 : i32, i32
  }
  func.func @transform_1(%arg0: i32) -> (i32, i32) {
    %c0_i32 = arith.constant 0 : i32
    %c0_i32_0 = arith.constant 0 : i32
    %c0_i32_1 = arith.constant 0 : i32
    return %c0_i32, %c0_i32_0 : i32, i32
  }
  func.func @transform_2(%arg0: i32) -> (i32, i32) {
    %c0_i32 = arith.constant 0 : i32
    %c0_i32_0 = arith.constant 0 : i32
    %c0_i32_1 = arith.constant 0 : i32
    return %c0_i32, %c0_i32_0 : i32, i32
  }
  func.func @transform_3(%arg0: i32) -> (i32, i32) {
    %c0_i32 = arith.constant 0 : i32
    %c0_i32_0 = arith.constant 0 : i32
    %c0_i32_1 = arith.constant 0 : i32
    return %c0_i32, %c0_i32_0 : i32, i32
  }
  func.func @transform_4(%arg0: i32) -> (i32, i32) {
    %c0_i32 = arith.constant 0 : i32
    %c0_i32_0 = arith.constant 0 : i32
    return %arg0, %c0_i32 : i32, i32
  }
}

module attributes {stable_mosaic.version = 11 : i64} {
  func.func @_lstm_recur_kernel(%arg0: i32, %arg1: memref<6x8x256xf32, #tpu.memory_space<vmem>>, %arg2: memref<64x256xf32, #tpu.memory_space<vmem>>, %arg3: memref<1x256xf32, #tpu.memory_space<vmem>>, %arg4: memref<6x8x32xf32, #tpu.memory_space<vmem>>, %arg5: memref<6x8x32xf32, #tpu.memory_space<vmem>>, %arg6: memref<8x64xf32, #tpu.memory_space<vmem>>, %arg7: memref<8x64xf32, #tpu.memory_space<vmem>>) attributes {dimension_semantics = [#tpu.dimension_semantics<parallel>], iteration_bounds = array<i64: 2>, scalar_prefetch = 0 : i64, scratch_operands = 2 : i64, tpu.core_type = #tpu.core_type<tc>, window_params = [{transform_indices = @transform_0, window_bounds = array<i64: 6, 8, 256>}, {pipeline_mode = #tpu.pipeline_mode<synchronous>, transform_indices = @transform_1, window_bounds = array<i64: 64, 256>}, {pipeline_mode = #tpu.pipeline_mode<synchronous>, transform_indices = @transform_2, window_bounds = array<i64: 1, 256>}, {transform_indices = @transform_3, window_bounds = array<i64: 6, 8, 32>}, {transform_indices = @transform_4, window_bounds = array<i64: 6, 8, 32>}]} {
    %cst = arith.constant 0.000000e+00 : f32
    %0 = vector.broadcast %cst : f32 to vector<8x64xf32>
    %c0 = arith.constant 0 : index
    %c0_0 = arith.constant 0 : index
    %1 = vector.load %arg6[%c0, %c0_0] : memref<8x64xf32, #tpu.memory_space<vmem>>, vector<8x64xf32>
    tpu.vector_store %arg6[%c0, %c0_0], %0 {strides = array<i32>} : memref<8x64xf32, #tpu.memory_space<vmem>>, vector<8x64xf32>,
    %cst_1 = arith.constant 0.000000e+00 : f32
    %2 = vector.broadcast %cst_1 : f32 to vector<8x64xf32>
    %c0_2 = arith.constant 0 : index
    %c0_3 = arith.constant 0 : index
    %3 = vector.load %arg7[%c0_2, %c0_3] : memref<8x64xf32, #tpu.memory_space<vmem>>, vector<8x64xf32>
    tpu.vector_store %arg7[%c0_2, %c0_3], %2 {strides = array<i32>} : memref<8x64xf32, #tpu.memory_space<vmem>>, vector<8x64xf32>,
    %c0_4 = arith.constant 0 : index
    %c0_5 = arith.constant 0 : index
    %4 = vector.load %arg3[%c0_4, %c0_5] : memref<1x256xf32, #tpu.memory_space<vmem>>, vector<1x256xf32>
    %c0_6 = arith.constant 0 : index
    %c0_7 = arith.constant 0 : index
    %5 = vector.load %arg2[%c0_6, %c0_7] : memref<64x256xf32, #tpu.memory_space<vmem>>, vector<64x256xf32>
    %6 = arith.truncf %5 : vector<64x256xf32> to vector<64x256xbf16>
    %c0_8 = arith.constant 0 : index
    %c0_9 = arith.constant 0 : index
    %c0_10 = arith.constant 0 : index
    %7 = vector.load %arg1[%c0_8, %c0_9, %c0_10] : memref<6x8x256xf32, #tpu.memory_space<vmem>>, vector<1x8x256xf32>
    %8 = vector.shape_cast %7 : vector<1x8x256xf32> to vector<8x256xf32>
    %9 = vector.broadcast %4 : vector<1x256xf32> to vector<8x256xf32>
    %10 = arith.mulf %9, %8 : vector<8x256xf32>
    %cst_11 = arith.constant 1.000000e+00 : f32
    %11 = vector.broadcast %cst_11 : f32 to vector<1x256xf32>
    %12 = arith.subf %11, %4 : vector<1x256xf32>
    %c5 = arith.constant 5 : index
    %c0_12 = arith.constant 0 : index
    %c0_13 = arith.constant 0 : index
    %13 = vector.load %arg1[%c5, %c0_12, %c0_13] : memref<6x8x256xf32, #tpu.memory_space<vmem>>, vector<1x8x256xf32>
    %14 = vector.shape_cast %13 : vector<1x8x256xf32> to vector<8x256xf32>
    %15 = vector.broadcast %12 : vector<1x256xf32> to vector<8x256xf32>
    %16 = arith.mulf %15, %14 : vector<8x256xf32>
    %17 = arith.addf %10, %16 : vector<8x256xf32>
    %c0_14 = arith.constant 0 : index
    %c0_15 = arith.constant 0 : index
    %18 = vector.load %arg6[%c0_14, %c0_15] : memref<8x64xf32, #tpu.memory_space<vmem>>, vector<8x64xf32>
    %19 = arith.truncf %18 : vector<8x64xf32> to vector<8x64xbf16>
    %cst_16 = arith.constant dense<0.000000e+00> : vector<8x256xf32>
    %20 = tpu.matmul %19, %6, %cst_16 {dimension_numbers = #tpu.dot_dimension_numbers<[1], [0], [0], [1], [0, 0, 1, 1], [], []>} : vector<8x64xbf16>, vector<64x256xbf16>, vector<8x256xf32> -> vector<8x256xf32>
    %21 = arith.addf %17, %20 : vector<8x256xf32>
    %22 = vector.extract_strided_slice %21 {offsets = [0, 0], sizes = [8, 64], strides = [1, 1]} : vector<8x256xf32> to vector<8x64xf32>
    %23 = arith.negf %22 : vector<8x64xf32>
    %24 = math.exp %23 : vector<8x64xf32>
    %cst_17 = arith.constant 1.000000e+00 : f32
    %25 = vector.broadcast %cst_17 : f32 to vector<8x64xf32>
    %26 = arith.addf %25, %24 : vector<8x64xf32>
    %27 = arith.divf %25, %26 : vector<8x64xf32>
    %28 = vector.extract_strided_slice %21 {offsets = [0, 64], sizes = [8, 64], strides = [1, 1]} : vector<8x256xf32> to vector<8x64xf32>
    %29 = arith.negf %28 : vector<8x64xf32>
    %30 = math.exp %29 : vector<8x64xf32>
    %cst_18 = arith.constant 1.000000e+00 : f32
    %31 = vector.broadcast %cst_18 : f32 to vector<8x64xf32>
    %32 = arith.addf %31, %30 : vector<8x64xf32>
    %33 = arith.divf %31, %32 : vector<8x64xf32>
    %34 = vector.extract_strided_slice %21 {offsets = [0, 128], sizes = [8, 64], strides = [1, 1]} : vector<8x256xf32> to vector<8x64xf32>
    %35 = math.tanh %34 : vector<8x64xf32>
    %36 = vector.extract_strided_slice %21 {offsets = [0, 192], sizes = [8, 64], strides = [1, 1]} : vector<8x256xf32> to vector<8x64xf32>
    %37 = arith.negf %36 : vector<8x64xf32>
    %38 = math.exp %37 : vector<8x64xf32>
    %cst_19 = arith.constant 1.000000e+00 : f32
    %39 = vector.broadcast %cst_19 : f32 to vector<8x64xf32>
    %40 = arith.addf %39, %38 : vector<8x64xf32>
    %41 = arith.divf %39, %40 : vector<8x64xf32>
    %c0_20 = arith.constant 0 : index
    %c0_21 = arith.constant 0 : index
    %42 = vector.load %arg7[%c0_20, %c0_21] : memref<8x64xf32, #tpu.memory_space<vmem>>, vector<8x64xf32>
    %43 = arith.mulf %33, %42 : vector<8x64xf32>
    %44 = arith.mulf %27, %35 : vector<8x64xf32>
    %45 = arith.addf %43, %44 : vector<8x64xf32>
    %46 = math.tanh %45 : vector<8x64xf32>
    %47 = arith.mulf %41, %46 : vector<8x64xf32>
    %c0_22 = arith.constant 0 : index
    %c0_23 = arith.constant 0 : index
    %48 = vector.load %arg7[%c0_22, %c0_23] : memref<8x64xf32, #tpu.memory_space<vmem>>, vector<8x64xf32>
    tpu.vector_store %arg7[%c0_22, %c0_23], %45 {strides = array<i32>} : memref<8x64xf32, #tpu.memory_space<vmem>>, vector<8x64xf32>,
    %c0_24 = arith.constant 0 : index
    %c0_25 = arith.constant 0 : index
    %49 = vector.load %arg6[%c0_24, %c0_25] : memref<8x64xf32, #tpu.memory_space<vmem>>, vector<8x64xf32>
    tpu.vector_store %arg6[%c0_24, %c0_25], %47 {strides = array<i32>} : memref<8x64xf32, #tpu.memory_space<vmem>>, vector<8x64xf32>,
    %50 = vector.extract_strided_slice %47 {offsets = [0, 0], sizes = [8, 32], strides = [1, 1]} : vector<8x64xf32> to vector<8x32xf32>
    %c0_26 = arith.constant 0 : index
    %c0_27 = arith.constant 0 : index
    %c0_28 = arith.constant 0 : index
    %51 = vector.load %arg4[%c0_26, %c0_27, %c0_28] : memref<6x8x32xf32, #tpu.memory_space<vmem>>, vector<1x8x32xf32>
    %52 = vector.shape_cast %51 : vector<1x8x32xf32> to vector<8x32xf32>
    %53 = vector.shape_cast %50 : vector<8x32xf32> to vector<1x8x32xf32>
    tpu.vector_store %arg4[%c0_26, %c0_27, %c0_28], %53 {strides = array<i32>} : memref<6x8x32xf32, #tpu.memory_space<vmem>>, vector<1x8x32xf32>,
    %54 = vector.extract_strided_slice %47 {offsets = [0, 32], sizes = [8, 32], strides = [1, 1]} : vector<8x64xf32> to vector<8x32xf32>
    %c5_29 = arith.constant 5 : index
    %c0_30 = arith.constant 0 : index
    %c0_31 = arith.constant 0 : index
    %55 = vector.load %arg5[%c5_29, %c0_30, %c0_31] : memref<6x8x32xf32, #tpu.memory_space<vmem>>, vector<1x8x32xf32>
    %56 = vector.shape_cast %55 : vector<1x8x32xf32> to vector<8x32xf32>
    %57 = vector.shape_cast %54 : vector<8x32xf32> to vector<1x8x32xf32>
    tpu.vector_store %arg5[%c5_29, %c0_30, %c0_31], %57 {strides = array<i32>} : memref<6x8x32xf32, #tpu.memory_space<vmem>>, vector<1x8x32xf32>,
    %c1 = arith.constant 1 : index
    %c0_32 = arith.constant 0 : index
    %c0_33 = arith.constant 0 : index
    %58 = vector.load %arg1[%c1, %c0_32, %c0_33] : memref<6x8x256xf32, #tpu.memory_space<vmem>>, vector<1x8x256xf32>
    %59 = vector.shape_cast %58 : vector<1x8x256xf32> to vector<8x256xf32>
    %60 = vector.broadcast %4 : vector<1x256xf32> to vector<8x256xf32>
    %61 = arith.mulf %60, %59 : vector<8x256xf32>
    %cst_34 = arith.constant 1.000000e+00 : f32
    %62 = vector.broadcast %cst_34 : f32 to vector<1x256xf32>
    %63 = arith.subf %62, %4 : vector<1x256xf32>
    %c4 = arith.constant 4 : index
    %c0_35 = arith.constant 0 : index
    %c0_36 = arith.constant 0 : index
    %64 = vector.load %arg1[%c4, %c0_35, %c0_36] : memref<6x8x256xf32, #tpu.memory_space<vmem>>, vector<1x8x256xf32>
    %65 = vector.shape_cast %64 : vector<1x8x256xf32> to vector<8x256xf32>
    %66 = vector.broadcast %63 : vector<1x256xf32> to vector<8x256xf32>
    %67 = arith.mulf %66, %65 : vector<8x256xf32>
    %68 = arith.addf %61, %67 : vector<8x256xf32>
    %c0_37 = arith.constant 0 : index
    %c0_38 = arith.constant 0 : index
    %69 = vector.load %arg6[%c0_37, %c0_38] : memref<8x64xf32, #tpu.memory_space<vmem>>, vector<8x64xf32>
    %70 = arith.truncf %69 : vector<8x64xf32> to vector<8x64xbf16>
    %cst_39 = arith.constant dense<0.000000e+00> : vector<8x256xf32>
    %71 = tpu.matmul %70, %6, %cst_39 {dimension_numbers = #tpu.dot_dimension_numbers<[1], [0], [0], [1], [0, 0, 1, 1], [], []>} : vector<8x64xbf16>, vector<64x256xbf16>, vector<8x256xf32> -> vector<8x256xf32>
    %72 = arith.addf %68, %71 : vector<8x256xf32>
    %73 = vector.extract_strided_slice %72 {offsets = [0, 0], sizes = [8, 64], strides = [1, 1]} : vector<8x256xf32> to vector<8x64xf32>
    %74 = arith.negf %73 : vector<8x64xf32>
    %75 = math.exp %74 : vector<8x64xf32>
    %cst_40 = arith.constant 1.000000e+00 : f32
    %76 = vector.broadcast %cst_40 : f32 to vector<8x64xf32>
    %77 = arith.addf %76, %75 : vector<8x64xf32>
    %78 = arith.divf %76, %77 : vector<8x64xf32>
    %79 = vector.extract_strided_slice %72 {offsets = [0, 64], sizes = [8, 64], strides = [1, 1]} : vector<8x256xf32> to vector<8x64xf32>
    %80 = arith.negf %79 : vector<8x64xf32>
    %81 = math.exp %80 : vector<8x64xf32>
    %cst_41 = arith.constant 1.000000e+00 : f32
    %82 = vector.broadcast %cst_41 : f32 to vector<8x64xf32>
    %83 = arith.addf %82, %81 : vector<8x64xf32>
    %84 = arith.divf %82, %83 : vector<8x64xf32>
    %85 = vector.extract_strided_slice %72 {offsets = [0, 128], sizes = [8, 64], strides = [1, 1]} : vector<8x256xf32> to vector<8x64xf32>
    %86 = math.tanh %85 : vector<8x64xf32>
    %87 = vector.extract_strided_slice %72 {offsets = [0, 192], sizes = [8, 64], strides = [1, 1]} : vector<8x256xf32> to vector<8x64xf32>
    %88 = arith.negf %87 : vector<8x64xf32>
    %89 = math.exp %88 : vector<8x64xf32>
    %cst_42 = arith.constant 1.000000e+00 : f32
    %90 = vector.broadcast %cst_42 : f32 to vector<8x64xf32>
    %91 = arith.addf %90, %89 : vector<8x64xf32>
    %92 = arith.divf %90, %91 : vector<8x64xf32>
    %c0_43 = arith.constant 0 : index
    %c0_44 = arith.constant 0 : index
    %93 = vector.load %arg7[%c0_43, %c0_44] : memref<8x64xf32, #tpu.memory_space<vmem>>, vector<8x64xf32>
    %94 = arith.mulf %84, %93 : vector<8x64xf32>
    %95 = arith.mulf %78, %86 : vector<8x64xf32>
    %96 = arith.addf %94, %95 : vector<8x64xf32>
    %97 = math.tanh %96 : vector<8x64xf32>
    %98 = arith.mulf %92, %97 : vector<8x64xf32>
    %c0_45 = arith.constant 0 : index
    %c0_46 = arith.constant 0 : index
    %99 = vector.load %arg7[%c0_45, %c0_46] : memref<8x64xf32, #tpu.memory_space<vmem>>, vector<8x64xf32>
    tpu.vector_store %arg7[%c0_45, %c0_46], %96 {strides = array<i32>} : memref<8x64xf32, #tpu.memory_space<vmem>>, vector<8x64xf32>,
    %c0_47 = arith.constant 0 : index
    %c0_48 = arith.constant 0 : index
    %100 = vector.load %arg6[%c0_47, %c0_48] : memref<8x64xf32, #tpu.memory_space<vmem>>, vector<8x64xf32>
    tpu.vector_store %arg6[%c0_47, %c0_48], %98 {strides = array<i32>} : memref<8x64xf32, #tpu.memory_space<vmem>>, vector<8x64xf32>,
    %101 = vector.extract_strided_slice %98 {offsets = [0, 0], sizes = [8, 32], strides = [1, 1]} : vector<8x64xf32> to vector<8x32xf32>
    %c1_49 = arith.constant 1 : index
    %c0_50 = arith.constant 0 : index
    %c0_51 = arith.constant 0 : index
    %102 = vector.load %arg4[%c1_49, %c0_50, %c0_51] : memref<6x8x32xf32, #tpu.memory_space<vmem>>, vector<1x8x32xf32>
    %103 = vector.shape_cast %102 : vector<1x8x32xf32> to vector<8x32xf32>
    %104 = vector.shape_cast %101 : vector<8x32xf32> to vector<1x8x32xf32>
    tpu.vector_store %arg4[%c1_49, %c0_50, %c0_51], %104 {strides = array<i32>} : memref<6x8x32xf32, #tpu.memory_space<vmem>>, vector<1x8x32xf32>,
    %105 = vector.extract_strided_slice %98 {offsets = [0, 32], sizes = [8, 32], strides = [1, 1]} : vector<8x64xf32> to vector<8x32xf32>
    %c4_52 = arith.constant 4 : index
    %c0_53 = arith.constant 0 : index
    %c0_54 = arith.constant 0 : index
    %106 = vector.load %arg5[%c4_52, %c0_53, %c0_54] : memref<6x8x32xf32, #tpu.memory_space<vmem>>, vector<1x8x32xf32>
    %107 = vector.shape_cast %106 : vector<1x8x32xf32> to vector<8x32xf32>
    %108 = vector.shape_cast %105 : vector<8x32xf32> to vector<1x8x32xf32>
    tpu.vector_store %arg5[%c4_52, %c0_53, %c0_54], %108 {strides = array<i32>} : memref<6x8x32xf32, #tpu.memory_space<vmem>>, vector<1x8x32xf32>,
    %c2 = arith.constant 2 : index
    %c0_55 = arith.constant 0 : index
    %c0_56 = arith.constant 0 : index
    %109 = vector.load %arg1[%c2, %c0_55, %c0_56] : memref<6x8x256xf32, #tpu.memory_space<vmem>>, vector<1x8x256xf32>
    %110 = vector.shape_cast %109 : vector<1x8x256xf32> to vector<8x256xf32>
    %111 = vector.broadcast %4 : vector<1x256xf32> to vector<8x256xf32>
    %112 = arith.mulf %111, %110 : vector<8x256xf32>
    %cst_57 = arith.constant 1.000000e+00 : f32
    %113 = vector.broadcast %cst_57 : f32 to vector<1x256xf32>
    %114 = arith.subf %113, %4 : vector<1x256xf32>
    %c3 = arith.constant 3 : index
    %c0_58 = arith.constant 0 : index
    %c0_59 = arith.constant 0 : index
    %115 = vector.load %arg1[%c3, %c0_58, %c0_59] : memref<6x8x256xf32, #tpu.memory_space<vmem>>, vector<1x8x256xf32>
    %116 = vector.shape_cast %115 : vector<1x8x256xf32> to vector<8x256xf32>
    %117 = vector.broadcast %114 : vector<1x256xf32> to vector<8x256xf32>
    %118 = arith.mulf %117, %116 : vector<8x256xf32>
    %119 = arith.addf %112, %118 : vector<8x256xf32>
    %c0_60 = arith.constant 0 : index
    %c0_61 = arith.constant 0 : index
    %120 = vector.load %arg6[%c0_60, %c0_61] : memref<8x64xf32, #tpu.memory_space<vmem>>, vector<8x64xf32>
    %121 = arith.truncf %120 : vector<8x64xf32> to vector<8x64xbf16>
    %cst_62 = arith.constant dense<0.000000e+00> : vector<8x256xf32>
    %122 = tpu.matmul %121, %6, %cst_62 {dimension_numbers = #tpu.dot_dimension_numbers<[1], [0], [0], [1], [0, 0, 1, 1], [], []>} : vector<8x64xbf16>, vector<64x256xbf16>, vector<8x256xf32> -> vector<8x256xf32>
    %123 = arith.addf %119, %122 : vector<8x256xf32>
    %124 = vector.extract_strided_slice %123 {offsets = [0, 0], sizes = [8, 64], strides = [1, 1]} : vector<8x256xf32> to vector<8x64xf32>
    %125 = arith.negf %124 : vector<8x64xf32>
    %126 = math.exp %125 : vector<8x64xf32>
    %cst_63 = arith.constant 1.000000e+00 : f32
    %127 = vector.broadcast %cst_63 : f32 to vector<8x64xf32>
    %128 = arith.addf %127, %126 : vector<8x64xf32>
    %129 = arith.divf %127, %128 : vector<8x64xf32>
    %130 = vector.extract_strided_slice %123 {offsets = [0, 64], sizes = [8, 64], strides = [1, 1]} : vector<8x256xf32> to vector<8x64xf32>
    %131 = arith.negf %130 : vector<8x64xf32>
    %132 = math.exp %131 : vector<8x64xf32>
    %cst_64 = arith.constant 1.000000e+00 : f32
    %133 = vector.broadcast %cst_64 : f32 to vector<8x64xf32>
    %134 = arith.addf %133, %132 : vector<8x64xf32>
    %135 = arith.divf %133, %134 : vector<8x64xf32>
    %136 = vector.extract_strided_slice %123 {offsets = [0, 128], sizes = [8, 64], strides = [1, 1]} : vector<8x256xf32> to vector<8x64xf32>
    %137 = math.tanh %136 : vector<8x64xf32>
    %138 = vector.extract_strided_slice %123 {offsets = [0, 192], sizes = [8, 64], strides = [1, 1]} : vector<8x256xf32> to vector<8x64xf32>
    %139 = arith.negf %138 : vector<8x64xf32>
    %140 = math.exp %139 : vector<8x64xf32>
    %cst_65 = arith.constant 1.000000e+00 : f32
    %141 = vector.broadcast %cst_65 : f32 to vector<8x64xf32>
    %142 = arith.addf %141, %140 : vector<8x64xf32>
    %143 = arith.divf %141, %142 : vector<8x64xf32>
    %c0_66 = arith.constant 0 : index
    %c0_67 = arith.constant 0 : index
    %144 = vector.load %arg7[%c0_66, %c0_67] : memref<8x64xf32, #tpu.memory_space<vmem>>, vector<8x64xf32>
    %145 = arith.mulf %135, %144 : vector<8x64xf32>
    %146 = arith.mulf %129, %137 : vector<8x64xf32>
    %147 = arith.addf %145, %146 : vector<8x64xf32>
    %148 = math.tanh %147 : vector<8x64xf32>
    %149 = arith.mulf %143, %148 : vector<8x64xf32>
    %c0_68 = arith.constant 0 : index
    %c0_69 = arith.constant 0 : index
    %150 = vector.load %arg7[%c0_68, %c0_69] : memref<8x64xf32, #tpu.memory_space<vmem>>, vector<8x64xf32>
    tpu.vector_store %arg7[%c0_68, %c0_69], %147 {strides = array<i32>} : memref<8x64xf32, #tpu.memory_space<vmem>>, vector<8x64xf32>,
    %c0_70 = arith.constant 0 : index
    %c0_71 = arith.constant 0 : index
    %151 = vector.load %arg6[%c0_70, %c0_71] : memref<8x64xf32, #tpu.memory_space<vmem>>, vector<8x64xf32>
    tpu.vector_store %arg6[%c0_70, %c0_71], %149 {strides = array<i32>} : memref<8x64xf32, #tpu.memory_space<vmem>>, vector<8x64xf32>,
    %152 = vector.extract_strided_slice %149 {offsets = [0, 0], sizes = [8, 32], strides = [1, 1]} : vector<8x64xf32> to vector<8x32xf32>
    %c2_72 = arith.constant 2 : index
    %c0_73 = arith.constant 0 : index
    %c0_74 = arith.constant 0 : index
    %153 = vector.load %arg4[%c2_72, %c0_73, %c0_74] : memref<6x8x32xf32, #tpu.memory_space<vmem>>, vector<1x8x32xf32>
    %154 = vector.shape_cast %153 : vector<1x8x32xf32> to vector<8x32xf32>
    %155 = vector.shape_cast %152 : vector<8x32xf32> to vector<1x8x32xf32>
    tpu.vector_store %arg4[%c2_72, %c0_73, %c0_74], %155 {strides = array<i32>} : memref<6x8x32xf32, #tpu.memory_space<vmem>>, vector<1x8x32xf32>,
    %156 = vector.extract_strided_slice %149 {offsets = [0, 32], sizes = [8, 32], strides = [1, 1]} : vector<8x64xf32> to vector<8x32xf32>
    %c3_75 = arith.constant 3 : index
    %c0_76 = arith.constant 0 : index
    %c0_77 = arith.constant 0 : index
    %157 = vector.load %arg5[%c3_75, %c0_76, %c0_77] : memref<6x8x32xf32, #tpu.memory_space<vmem>>, vector<1x8x32xf32>
    %158 = vector.shape_cast %157 : vector<1x8x32xf32> to vector<8x32xf32>
    %159 = vector.shape_cast %156 : vector<8x32xf32> to vector<1x8x32xf32>
    tpu.vector_store %arg5[%c3_75, %c0_76, %c0_77], %159 {strides = array<i32>} : memref<6x8x32xf32, #tpu.memory_space<vmem>>, vector<1x8x32xf32>,
    %c3_78 = arith.constant 3 : index
    %c0_79 = arith.constant 0 : index
    %c0_80 = arith.constant 0 : index
    %160 = vector.load %arg1[%c3_78, %c0_79, %c0_80] : memref<6x8x256xf32, #tpu.memory_space<vmem>>, vector<1x8x256xf32>
    %161 = vector.shape_cast %160 : vector<1x8x256xf32> to vector<8x256xf32>
    %162 = vector.broadcast %4 : vector<1x256xf32> to vector<8x256xf32>
    %163 = arith.mulf %162, %161 : vector<8x256xf32>
    %cst_81 = arith.constant 1.000000e+00 : f32
    %164 = vector.broadcast %cst_81 : f32 to vector<1x256xf32>
    %165 = arith.subf %164, %4 : vector<1x256xf32>
    %c2_82 = arith.constant 2 : index
    %c0_83 = arith.constant 0 : index
    %c0_84 = arith.constant 0 : index
    %166 = vector.load %arg1[%c2_82, %c0_83, %c0_84] : memref<6x8x256xf32, #tpu.memory_space<vmem>>, vector<1x8x256xf32>
    %167 = vector.shape_cast %166 : vector<1x8x256xf32> to vector<8x256xf32>
    %168 = vector.broadcast %165 : vector<1x256xf32> to vector<8x256xf32>
    %169 = arith.mulf %168, %167 : vector<8x256xf32>
    %170 = arith.addf %163, %169 : vector<8x256xf32>
    %c0_85 = arith.constant 0 : index
    %c0_86 = arith.constant 0 : index
    %171 = vector.load %arg6[%c0_85, %c0_86] : memref<8x64xf32, #tpu.memory_space<vmem>>, vector<8x64xf32>
    %172 = arith.truncf %171 : vector<8x64xf32> to vector<8x64xbf16>
    %cst_87 = arith.constant dense<0.000000e+00> : vector<8x256xf32>
    %173 = tpu.matmul %172, %6, %cst_87 {dimension_numbers = #tpu.dot_dimension_numbers<[1], [0], [0], [1], [0, 0, 1, 1], [], []>} : vector<8x64xbf16>, vector<64x256xbf16>, vector<8x256xf32> -> vector<8x256xf32>
    %174 = arith.addf %170, %173 : vector<8x256xf32>
    %175 = vector.extract_strided_slice %174 {offsets = [0, 0], sizes = [8, 64], strides = [1, 1]} : vector<8x256xf32> to vector<8x64xf32>
    %176 = arith.negf %175 : vector<8x64xf32>
    %177 = math.exp %176 : vector<8x64xf32>
    %cst_88 = arith.constant 1.000000e+00 : f32
    %178 = vector.broadcast %cst_88 : f32 to vector<8x64xf32>
    %179 = arith.addf %178, %177 : vector<8x64xf32>
    %180 = arith.divf %178, %179 : vector<8x64xf32>
    %181 = vector.extract_strided_slice %174 {offsets = [0, 64], sizes = [8, 64], strides = [1, 1]} : vector<8x256xf32> to vector<8x64xf32>
    %182 = arith.negf %181 : vector<8x64xf32>
    %183 = math.exp %182 : vector<8x64xf32>
    %cst_89 = arith.constant 1.000000e+00 : f32
    %184 = vector.broadcast %cst_89 : f32 to vector<8x64xf32>
    %185 = arith.addf %184, %183 : vector<8x64xf32>
    %186 = arith.divf %184, %185 : vector<8x64xf32>
    %187 = vector.extract_strided_slice %174 {offsets = [0, 128], sizes = [8, 64], strides = [1, 1]} : vector<8x256xf32> to vector<8x64xf32>
    %188 = math.tanh %187 : vector<8x64xf32>
    %189 = vector.extract_strided_slice %174 {offsets = [0, 192], sizes = [8, 64], strides = [1, 1]} : vector<8x256xf32> to vector<8x64xf32>
    %190 = arith.negf %189 : vector<8x64xf32>
    %191 = math.exp %190 : vector<8x64xf32>
    %cst_90 = arith.constant 1.000000e+00 : f32
    %192 = vector.broadcast %cst_90 : f32 to vector<8x64xf32>
    %193 = arith.addf %192, %191 : vector<8x64xf32>
    %194 = arith.divf %192, %193 : vector<8x64xf32>
    %c0_91 = arith.constant 0 : index
    %c0_92 = arith.constant 0 : index
    %195 = vector.load %arg7[%c0_91, %c0_92] : memref<8x64xf32, #tpu.memory_space<vmem>>, vector<8x64xf32>
    %196 = arith.mulf %186, %195 : vector<8x64xf32>
    %197 = arith.mulf %180, %188 : vector<8x64xf32>
    %198 = arith.addf %196, %197 : vector<8x64xf32>
    %199 = math.tanh %198 : vector<8x64xf32>
    %200 = arith.mulf %194, %199 : vector<8x64xf32>
    %c0_93 = arith.constant 0 : index
    %c0_94 = arith.constant 0 : index
    %201 = vector.load %arg7[%c0_93, %c0_94] : memref<8x64xf32, #tpu.memory_space<vmem>>, vector<8x64xf32>
    tpu.vector_store %arg7[%c0_93, %c0_94], %198 {strides = array<i32>} : memref<8x64xf32, #tpu.memory_space<vmem>>, vector<8x64xf32>,
    %c0_95 = arith.constant 0 : index
    %c0_96 = arith.constant 0 : index
    %202 = vector.load %arg6[%c0_95, %c0_96] : memref<8x64xf32, #tpu.memory_space<vmem>>, vector<8x64xf32>
    tpu.vector_store %arg6[%c0_95, %c0_96], %200 {strides = array<i32>} : memref<8x64xf32, #tpu.memory_space<vmem>>, vector<8x64xf32>,
    %203 = vector.extract_strided_slice %200 {offsets = [0, 0], sizes = [8, 32], strides = [1, 1]} : vector<8x64xf32> to vector<8x32xf32>
    %c3_97 = arith.constant 3 : index
    %c0_98 = arith.constant 0 : index
    %c0_99 = arith.constant 0 : index
    %204 = vector.load %arg4[%c3_97, %c0_98, %c0_99] : memref<6x8x32xf32, #tpu.memory_space<vmem>>, vector<1x8x32xf32>
    %205 = vector.shape_cast %204 : vector<1x8x32xf32> to vector<8x32xf32>
    %206 = vector.shape_cast %203 : vector<8x32xf32> to vector<1x8x32xf32>
    tpu.vector_store %arg4[%c3_97, %c0_98, %c0_99], %206 {strides = array<i32>} : memref<6x8x32xf32, #tpu.memory_space<vmem>>, vector<1x8x32xf32>,
    %207 = vector.extract_strided_slice %200 {offsets = [0, 32], sizes = [8, 32], strides = [1, 1]} : vector<8x64xf32> to vector<8x32xf32>
    %c2_100 = arith.constant 2 : index
    %c0_101 = arith.constant 0 : index
    %c0_102 = arith.constant 0 : index
    %208 = vector.load %arg5[%c2_100, %c0_101, %c0_102] : memref<6x8x32xf32, #tpu.memory_space<vmem>>, vector<1x8x32xf32>
    %209 = vector.shape_cast %208 : vector<1x8x32xf32> to vector<8x32xf32>
    %210 = vector.shape_cast %207 : vector<8x32xf32> to vector<1x8x32xf32>
    tpu.vector_store %arg5[%c2_100, %c0_101, %c0_102], %210 {strides = array<i32>} : memref<6x8x32xf32, #tpu.memory_space<vmem>>, vector<1x8x32xf32>,
    %c4_103 = arith.constant 4 : index
    %c0_104 = arith.constant 0 : index
    %c0_105 = arith.constant 0 : index
    %211 = vector.load %arg1[%c4_103, %c0_104, %c0_105] : memref<6x8x256xf32, #tpu.memory_space<vmem>>, vector<1x8x256xf32>
    %212 = vector.shape_cast %211 : vector<1x8x256xf32> to vector<8x256xf32>
    %213 = vector.broadcast %4 : vector<1x256xf32> to vector<8x256xf32>
    %214 = arith.mulf %213, %212 : vector<8x256xf32>
    %cst_106 = arith.constant 1.000000e+00 : f32
    %215 = vector.broadcast %cst_106 : f32 to vector<1x256xf32>
    %216 = arith.subf %215, %4 : vector<1x256xf32>
    %c1_107 = arith.constant 1 : index
    %c0_108 = arith.constant 0 : index
    %c0_109 = arith.constant 0 : index
    %217 = vector.load %arg1[%c1_107, %c0_108, %c0_109] : memref<6x8x256xf32, #tpu.memory_space<vmem>>, vector<1x8x256xf32>
    %218 = vector.shape_cast %217 : vector<1x8x256xf32> to vector<8x256xf32>
    %219 = vector.broadcast %216 : vector<1x256xf32> to vector<8x256xf32>
    %220 = arith.mulf %219, %218 : vector<8x256xf32>
    %221 = arith.addf %214, %220 : vector<8x256xf32>
    %c0_110 = arith.constant 0 : index
    %c0_111 = arith.constant 0 : index
    %222 = vector.load %arg6[%c0_110, %c0_111] : memref<8x64xf32, #tpu.memory_space<vmem>>, vector<8x64xf32>
    %223 = arith.truncf %222 : vector<8x64xf32> to vector<8x64xbf16>
    %cst_112 = arith.constant dense<0.000000e+00> : vector<8x256xf32>
    %224 = tpu.matmul %223, %6, %cst_112 {dimension_numbers = #tpu.dot_dimension_numbers<[1], [0], [0], [1], [0, 0, 1, 1], [], []>} : vector<8x64xbf16>, vector<64x256xbf16>, vector<8x256xf32> -> vector<8x256xf32>
    %225 = arith.addf %221, %224 : vector<8x256xf32>
    %226 = vector.extract_strided_slice %225 {offsets = [0, 0], sizes = [8, 64], strides = [1, 1]} : vector<8x256xf32> to vector<8x64xf32>
    %227 = arith.negf %226 : vector<8x64xf32>
    %228 = math.exp %227 : vector<8x64xf32>
    %cst_113 = arith.constant 1.000000e+00 : f32
    %229 = vector.broadcast %cst_113 : f32 to vector<8x64xf32>
    %230 = arith.addf %229, %228 : vector<8x64xf32>
    %231 = arith.divf %229, %230 : vector<8x64xf32>
    %232 = vector.extract_strided_slice %225 {offsets = [0, 64], sizes = [8, 64], strides = [1, 1]} : vector<8x256xf32> to vector<8x64xf32>
    %233 = arith.negf %232 : vector<8x64xf32>
    %234 = math.exp %233 : vector<8x64xf32>
    %cst_114 = arith.constant 1.000000e+00 : f32
    %235 = vector.broadcast %cst_114 : f32 to vector<8x64xf32>
    %236 = arith.addf %235, %234 : vector<8x64xf32>
    %237 = arith.divf %235, %236 : vector<8x64xf32>
    %238 = vector.extract_strided_slice %225 {offsets = [0, 128], sizes = [8, 64], strides = [1, 1]} : vector<8x256xf32> to vector<8x64xf32>
    %239 = math.tanh %238 : vector<8x64xf32>
    %240 = vector.extract_strided_slice %225 {offsets = [0, 192], sizes = [8, 64], strides = [1, 1]} : vector<8x256xf32> to vector<8x64xf32>
    %241 = arith.negf %240 : vector<8x64xf32>
    %242 = math.exp %241 : vector<8x64xf32>
    %cst_115 = arith.constant 1.000000e+00 : f32
    %243 = vector.broadcast %cst_115 : f32 to vector<8x64xf32>
    %244 = arith.addf %243, %242 : vector<8x64xf32>
    %245 = arith.divf %243, %244 : vector<8x64xf32>
    %c0_116 = arith.constant 0 : index
    %c0_117 = arith.constant 0 : index
    %246 = vector.load %arg7[%c0_116, %c0_117] : memref<8x64xf32, #tpu.memory_space<vmem>>, vector<8x64xf32>
    %247 = arith.mulf %237, %246 : vector<8x64xf32>
    %248 = arith.mulf %231, %239 : vector<8x64xf32>
    %249 = arith.addf %247, %248 : vector<8x64xf32>
    %250 = math.tanh %249 : vector<8x64xf32>
    %251 = arith.mulf %245, %250 : vector<8x64xf32>
    %c0_118 = arith.constant 0 : index
    %c0_119 = arith.constant 0 : index
    %252 = vector.load %arg7[%c0_118, %c0_119] : memref<8x64xf32, #tpu.memory_space<vmem>>, vector<8x64xf32>
    tpu.vector_store %arg7[%c0_118, %c0_119], %249 {strides = array<i32>} : memref<8x64xf32, #tpu.memory_space<vmem>>, vector<8x64xf32>,
    %c0_120 = arith.constant 0 : index
    %c0_121 = arith.constant 0 : index
    %253 = vector.load %arg6[%c0_120, %c0_121] : memref<8x64xf32, #tpu.memory_space<vmem>>, vector<8x64xf32>
    tpu.vector_store %arg6[%c0_120, %c0_121], %251 {strides = array<i32>} : memref<8x64xf32, #tpu.memory_space<vmem>>, vector<8x64xf32>,
    %254 = vector.extract_strided_slice %251 {offsets = [0, 0], sizes = [8, 32], strides = [1, 1]} : vector<8x64xf32> to vector<8x32xf32>
    %c4_122 = arith.constant 4 : index
    %c0_123 = arith.constant 0 : index
    %c0_124 = arith.constant 0 : index
    %255 = vector.load %arg4[%c4_122, %c0_123, %c0_124] : memref<6x8x32xf32, #tpu.memory_space<vmem>>, vector<1x8x32xf32>
    %256 = vector.shape_cast %255 : vector<1x8x32xf32> to vector<8x32xf32>
    %257 = vector.shape_cast %254 : vector<8x32xf32> to vector<1x8x32xf32>
    tpu.vector_store %arg4[%c4_122, %c0_123, %c0_124], %257 {strides = array<i32>} : memref<6x8x32xf32, #tpu.memory_space<vmem>>, vector<1x8x32xf32>,
    %258 = vector.extract_strided_slice %251 {offsets = [0, 32], sizes = [8, 32], strides = [1, 1]} : vector<8x64xf32> to vector<8x32xf32>
    %c1_125 = arith.constant 1 : index
    %c0_126 = arith.constant 0 : index
    %c0_127 = arith.constant 0 : index
    %259 = vector.load %arg5[%c1_125, %c0_126, %c0_127] : memref<6x8x32xf32, #tpu.memory_space<vmem>>, vector<1x8x32xf32>
    %260 = vector.shape_cast %259 : vector<1x8x32xf32> to vector<8x32xf32>
    %261 = vector.shape_cast %258 : vector<8x32xf32> to vector<1x8x32xf32>
    tpu.vector_store %arg5[%c1_125, %c0_126, %c0_127], %261 {strides = array<i32>} : memref<6x8x32xf32, #tpu.memory_space<vmem>>, vector<1x8x32xf32>,
    %c5_128 = arith.constant 5 : index
    %c0_129 = arith.constant 0 : index
    %c0_130 = arith.constant 0 : index
    %262 = vector.load %arg1[%c5_128, %c0_129, %c0_130] : memref<6x8x256xf32, #tpu.memory_space<vmem>>, vector<1x8x256xf32>
    %263 = vector.shape_cast %262 : vector<1x8x256xf32> to vector<8x256xf32>
    %264 = vector.broadcast %4 : vector<1x256xf32> to vector<8x256xf32>
    %265 = arith.mulf %264, %263 : vector<8x256xf32>
    %cst_131 = arith.constant 1.000000e+00 : f32
    %266 = vector.broadcast %cst_131 : f32 to vector<1x256xf32>
    %267 = arith.subf %266, %4 : vector<1x256xf32>
    %c0_132 = arith.constant 0 : index
    %c0_133 = arith.constant 0 : index
    %c0_134 = arith.constant 0 : index
    %268 = vector.load %arg1[%c0_132, %c0_133, %c0_134] : memref<6x8x256xf32, #tpu.memory_space<vmem>>, vector<1x8x256xf32>
    %269 = vector.shape_cast %268 : vector<1x8x256xf32> to vector<8x256xf32>
    %270 = vector.broadcast %267 : vector<1x256xf32> to vector<8x256xf32>
    %271 = arith.mulf %270, %269 : vector<8x256xf32>
    %272 = arith.addf %265, %271 : vector<8x256xf32>
    %c0_135 = arith.constant 0 : index
    %c0_136 = arith.constant 0 : index
    %273 = vector.load %arg6[%c0_135, %c0_136] : memref<8x64xf32, #tpu.memory_space<vmem>>, vector<8x64xf32>
    %274 = arith.truncf %273 : vector<8x64xf32> to vector<8x64xbf16>
    %cst_137 = arith.constant dense<0.000000e+00> : vector<8x256xf32>
    %275 = tpu.matmul %274, %6, %cst_137 {dimension_numbers = #tpu.dot_dimension_numbers<[1], [0], [0], [1], [0, 0, 1, 1], [], []>} : vector<8x64xbf16>, vector<64x256xbf16>, vector<8x256xf32> -> vector<8x256xf32>
    %276 = arith.addf %272, %275 : vector<8x256xf32>
    %277 = vector.extract_strided_slice %276 {offsets = [0, 0], sizes = [8, 64], strides = [1, 1]} : vector<8x256xf32> to vector<8x64xf32>
    %278 = arith.negf %277 : vector<8x64xf32>
    %279 = math.exp %278 : vector<8x64xf32>
    %cst_138 = arith.constant 1.000000e+00 : f32
    %280 = vector.broadcast %cst_138 : f32 to vector<8x64xf32>
    %281 = arith.addf %280, %279 : vector<8x64xf32>
    %282 = arith.divf %280, %281 : vector<8x64xf32>
    %283 = vector.extract_strided_slice %276 {offsets = [0, 64], sizes = [8, 64], strides = [1, 1]} : vector<8x256xf32> to vector<8x64xf32>
    %284 = arith.negf %283 : vector<8x64xf32>
    %285 = math.exp %284 : vector<8x64xf32>
    %cst_139 = arith.constant 1.000000e+00 : f32
    %286 = vector.broadcast %cst_139 : f32 to vector<8x64xf32>
    %287 = arith.addf %286, %285 : vector<8x64xf32>
    %288 = arith.divf %286, %287 : vector<8x64xf32>
    %289 = vector.extract_strided_slice %276 {offsets = [0, 128], sizes = [8, 64], strides = [1, 1]} : vector<8x256xf32> to vector<8x64xf32>
    %290 = math.tanh %289 : vector<8x64xf32>
    %291 = vector.extract_strided_slice %276 {offsets = [0, 192], sizes = [8, 64], strides = [1, 1]} : vector<8x256xf32> to vector<8x64xf32>
    %292 = arith.negf %291 : vector<8x64xf32>
    %293 = math.exp %292 : vector<8x64xf32>
    %cst_140 = arith.constant 1.000000e+00 : f32
    %294 = vector.broadcast %cst_140 : f32 to vector<8x64xf32>
    %295 = arith.addf %294, %293 : vector<8x64xf32>
    %296 = arith.divf %294, %295 : vector<8x64xf32>
    %c0_141 = arith.constant 0 : index
    %c0_142 = arith.constant 0 : index
    %297 = vector.load %arg7[%c0_141, %c0_142] : memref<8x64xf32, #tpu.memory_space<vmem>>, vector<8x64xf32>
    %298 = arith.mulf %288, %297 : vector<8x64xf32>
    %299 = arith.mulf %282, %290 : vector<8x64xf32>
    %300 = arith.addf %298, %299 : vector<8x64xf32>
    %301 = math.tanh %300 : vector<8x64xf32>
    %302 = arith.mulf %296, %301 : vector<8x64xf32>
    %c0_143 = arith.constant 0 : index
    %c0_144 = arith.constant 0 : index
    %303 = vector.load %arg7[%c0_143, %c0_144] : memref<8x64xf32, #tpu.memory_space<vmem>>, vector<8x64xf32>
    tpu.vector_store %arg7[%c0_143, %c0_144], %300 {strides = array<i32>} : memref<8x64xf32, #tpu.memory_space<vmem>>, vector<8x64xf32>,
    %c0_145 = arith.constant 0 : index
    %c0_146 = arith.constant 0 : index
    %304 = vector.load %arg6[%c0_145, %c0_146] : memref<8x64xf32, #tpu.memory_space<vmem>>, vector<8x64xf32>
    tpu.vector_store %arg6[%c0_145, %c0_146], %302 {strides = array<i32>} : memref<8x64xf32, #tpu.memory_space<vmem>>, vector<8x64xf32>,
    %305 = vector.extract_strided_slice %302 {offsets = [0, 0], sizes = [8, 32], strides = [1, 1]} : vector<8x64xf32> to vector<8x32xf32>
    %c5_147 = arith.constant 5 : index
    %c0_148 = arith.constant 0 : index
    %c0_149 = arith.constant 0 : index
    %306 = vector.load %arg4[%c5_147, %c0_148, %c0_149] : memref<6x8x32xf32, #tpu.memory_space<vmem>>, vector<1x8x32xf32>
    %307 = vector.shape_cast %306 : vector<1x8x32xf32> to vector<8x32xf32>
    %308 = vector.shape_cast %305 : vector<8x32xf32> to vector<1x8x32xf32>
    tpu.vector_store %arg4[%c5_147, %c0_148, %c0_149], %308 {strides = array<i32>} : memref<6x8x32xf32, #tpu.memory_space<vmem>>, vector<1x8x32xf32>,
    %309 = vector.extract_strided_slice %302 {offsets = [0, 32], sizes = [8, 32], strides = [1, 1]} : vector<8x64xf32> to vector<8x32xf32>
    %c0_150 = arith.constant 0 : index
    %c0_151 = arith.constant 0 : index
    %c0_152 = arith.constant 0 : index
    %310 = vector.load %arg5[%c0_150, %c0_151, %c0_152] : memref<6x8x32xf32, #tpu.memory_space<vmem>>, vector<1x8x32xf32>
    %311 = vector.shape_cast %310 : vector<1x8x32xf32> to vector<8x32xf32>
    %312 = vector.shape_cast %309 : vector<8x32xf32> to vector<1x8x32xf32>
    tpu.vector_store %arg5[%c0_150, %c0_151, %c0_152], %312 {strides = array<i32>} : memref<6x8x32xf32, #tpu.memory_space<vmem>>, vector<1x8x32xf32>,
    return
  }
  func.func @transform_0(%arg0: i32) -> (i32, i32, i32) {
    %c0_i32 = arith.constant 0 : i32
    %c0_i32_0 = arith.constant 0 : i32
    %c0_i32_1 = arith.constant 0 : i32
    return %c0_i32, %arg0, %c0_i32_0 : i32, i32, i32
  }
  func.func @transform_1(%arg0: i32) -> (i32, i32) {
    %c0_i32 = arith.constant 0 : i32
    %c0_i32_0 = arith.constant 0 : i32
    %c0_i32_1 = arith.constant 0 : i32
    return %c0_i32, %c0_i32_0 : i32, i32
  }
  func.func @transform_2(%arg0: i32) -> (i32, i32) {
    %c0_i32 = arith.constant 0 : i32
    %c0_i32_0 = arith.constant 0 : i32
    %c0_i32_1 = arith.constant 0 : i32
    return %c0_i32, %c0_i32_0 : i32, i32
  }
  func.func @transform_3(%arg0: i32) -> (i32, i32, i32) {
    %c0_i32 = arith.constant 0 : i32
    %c0_i32_0 = arith.constant 0 : i32
    %c0_i32_1 = arith.constant 0 : i32
    return %c0_i32, %arg0, %c0_i32_0 : i32, i32, i32
  }
  func.func @transform_4(%arg0: i32) -> (i32, i32, i32) {
    %c0_i32 = arith.constant 0 : i32
    %c0_i32_0 = arith.constant 0 : i32
    %c0_i32_1 = arith.constant 0 : i32
    return %c0_i32, %arg0, %c0_i32_0 : i32, i32, i32
  }
}

</mosaic_0001>

<llo_original>
// kernel: swave_forward.15
$region0: #{swave_forward.15}
  #allocation0 [shape = 'u32[]', space=smem, size = 0x4, offset = 0x4, fixed_abs, tag = 'smem constant byte address 0x4 - core index']
  #allocation1 [shape = 'u32[72,128]{1,0:T(1,128)}', space=vmem, size = 0x9000, scoped, tag = 'internal scratch']
  %s0 = inlined_call_operand.vmem [shape: f32[32,8], index: 0, kind: input, shape index: {}]
  %s1 = inlined_call_operand.vmem [shape: f32[8,16], index: 1, kind: input, shape index: {}]
  %s2 = inlined_call_operand.vmem [shape: f32[32,16], index: 2, kind: output, shape index: {}]
  %s3 = sld [smem:[#allocation0]]
  $region18: #{swave_forward.15} parent=0
    _
  %s5 = ssub.s32 1, %s3
  %s6 = scalar_select 0, %s5, %s3
  // Predicated region
  $region2: #{swave_forward.15} parent=0 // pred_check
    _
  $region3: #{swave_forward.15} parent=0 // pred_check_branch
    %8 = sbr.rel (0) target = $region5
  $region4: #{swave_forward.15} parent=0 // pred_region
    _
  $region5: #{swave_forward.15} parent=0 // pred_fallthru
    _
  // Predicated region
  $region6: #{swave_forward.15} parent=0 // pred_check
    _
  $region7: #{swave_forward.15} parent=0 // pred_check_branch
    %10 = sbr.rel (0) target = $region9
  $region8: #{swave_forward.15} parent=0 // pred_region
    _
  $region9: #{swave_forward.15} parent=0 // pred_fallthru
    _
  %v12 = vld [vmem:[%s0] sm:$0xff]
  %v13 = vld [vmem:[%s0 + $0x8] sm:$0xff]
  %v14 = vld [vmem:[%s0 + $0x10] sm:$0xff]
  %v15 = vld [vmem:[%s0 + $0x18] sm:$0xff]
  %v16 = vpack.c.bf16 %v13, %v12
  %v17 = vpack.c.bf16 %v15, %v14
  %v18 = vld [vmem:[%s1] sm:$0xff]
  %v19 = vpack.c.bf16 %v18, %v18
  %vm20 = vcmask 64512
  %v22 = vsel %vm20, %v16, 0
  %v25 = vsel %vm20, %v17, 0
  %vm27 = vcmask 1043456
  %v29 = vsel %vm27, %v19, 0
  %31 = vmatpush.bf16.msra.mxu0 0
  %32 = vmatpush.bf16.msra.mxu0 0
  %33 = vmatpush.bf16.msra.mxu0 0
  %34 = vmatpush.bf16.msra.mxu0 0
  %35 = vmatpush.bf16.msra.mxu0 0
  %36 = vmatpush.bf16.msra.mxu0 0
  %37 = vmatpush.bf16.msra.mxu0 0
  %38 = vmatpush.bf16.msra.mxu0 %v29
  %39 = vmatmul.bf16.gmra.mxu0 %v22
  %v40 = vpop.f32.mrf.mxu0
  %v41 = vadd.f32 0.0, %v40
  %v42 = vpop.f32.mrf.mxu0
  %v43 = vadd.f32 0.0, %v42
  %44 = vmatmul.bf16.gmra.mxu0 %v25
  %v45 = vpop.f32.mrf.mxu0
  %v46 = vadd.f32 0.0, %v45
  %v47 = vpop.f32.mrf.mxu0
  %v48 = vadd.f32 0.0, %v47
  %49 = vdwg.mxu0
  %v50 = vmax.f32 %v41, 0.0
  %v51 = vmax.f32 %v43, 0.0
  %v52 = vmax.f32 %v46, 0.0
  %v53 = vmax.f32 %v48, 0.0
  %vm54 = vcmask 130048
  %55 = vst.msk [vmem:[%s2] sm:$0xff] %vm54, %v50
  %56 = vst.msk [vmem:[%s2 + $0x8] sm:$0xff] %vm54, %v51
  %57 = vst.msk [vmem:[%s2 + $0x10] sm:$0xff] %vm54, %v52
  %58 = vst.msk [vmem:[%s2 + $0x18] sm:$0xff] %vm54, %v53
  // Predicated region
  $region10: #{swave_forward.15} parent=0 // pred_check
    _
  $region11: #{swave_forward.15} parent=0 // pred_check_branch
    %60 = sbr.rel (0) target = $region13
  $region12: #{swave_forward.15} parent=0 // pred_region
    _
  $region13: #{swave_forward.15} parent=0 // pred_fallthru
    _
  // Predicated region
  $region14: #{swave_forward.15} parent=0 // pred_check
    _
  $region15: #{swave_forward.15} parent=0 // pred_check_branch
    %62 = sbr.rel (0) target = $region17
  $region16: #{swave_forward.15} parent=0 // pred_region
    _
  $region17: #{swave_forward.15} parent=0 // pred_fallthru
    _

// kernel: swave_forward.16
$region0: #{swave_forward.16}
  #allocation0 [shape = 'u32[]', space=smem, size = 0x4, offset = 0x4, fixed_abs, tag = 'smem constant byte address 0x4 - core index']
  #allocation1 [shape = 'u32[72,128]{1,0:T(1,128)}', space=vmem, size = 0x9000, scoped, tag = 'internal scratch']
  %s0 = inlined_call_operand.vmem [shape: f32[96,16], index: 0, kind: input, shape index: {}]
  %s1 = inlined_call_operand.vmem [shape: f32[16,256], index: 1, kind: input, shape index: {}]
  %s2 = inlined_call_operand.vmem [shape: f32[1,256], index: 2, kind: input, shape index: {}]
  %s3 = inlined_call_operand.vmem [shape: f32[96,256], index: 3, kind: output, shape index: {}]
  %s4 = sld [smem:[#allocation0]]
  $region22: #{swave_forward.16} parent=0
    _
  %s6 = ssub.s32 1, %s4
  %s7 = scalar_select 0, %s6, %s4
  // Predicated region
  $region2: #{swave_forward.16} parent=0 // pred_check
    _
  $region3: #{swave_forward.16} parent=0 // pred_check_branch
    %9 = sbr.rel (0) target = $region5
  $region4: #{swave_forward.16} parent=0 // pred_region
    _
  $region5: #{swave_forward.16} parent=0 // pred_fallthru
    _
  // Predicated region
  $region6: #{swave_forward.16} parent=0 // pred_check
    _
  $region7: #{swave_forward.16} parent=0 // pred_check_branch
    %11 = sbr.rel (0) target = $region9
  $region8: #{swave_forward.16} parent=0 // pred_region
    _
  $region9: #{swave_forward.16} parent=0 // pred_fallthru
    _
  // Predicated region
  $region10: #{swave_forward.16} parent=0 // pred_check
    _
  $region11: #{swave_forward.16} parent=0 // pred_check_branch
    %13 = sbr.rel (0) target = $region13
  $region12: #{swave_forward.16} parent=0 // pred_region
    _
  $region13: #{swave_forward.16} parent=0 // pred_fallthru
    _
  %v15 = vld [vmem:[%s0] sm:$0xff]
  %v16 = vld [vmem:[%s0 + $0x8] sm:$0xff]
  %v17 = vld [vmem:[%s0 + $0x10] sm:$0xff]
  %v18 = vld [vmem:[%s0 + $0x18] sm:$0xff]
  %v19 = vld [vmem:[%s0 + $0x20] sm:$0xff]
  %v20 = vld [vmem:[%s0 + $0x28] sm:$0xff]
  %v21 = vld [vmem:[%s0 + $0x30] sm:$0xff]
  %v22 = vld [vmem:[%s0 + $0x38] sm:$0xff]
  %v23 = vld [vmem:[%s0 + $0x40] sm:$0xff]
  %v24 = vld [vmem:[%s0 + $0x48] sm:$0xff]
  %v25 = vld [vmem:[%s0 + $0x50] sm:$0xff]
  %v26 = vld [vmem:[%s0 + $0x58] sm:$0xff]
  %v27 = vpack.c.bf16 %v16, %v15
  %v28 = vpack.c.bf16 %v18, %v17
  %v29 = vpack.c.bf16 %v20, %v19
  %v30 = vpack.c.bf16 %v22, %v21
  %v31 = vpack.c.bf16 %v24, %v23
  %v32 = vpack.c.bf16 %v26, %v25
  %v33 = vld [vmem:[%s1] sm:$0xff]
  %v34 = vld [vmem:[%s1 + $0x8] sm:$0xff]
  %v35 = vld [vmem:[%s1 + $0x10] sm:$0xff]
  %v36 = vld [vmem:[%s1 + $0x18] sm:$0xff]
  %v37 = vpack.c.bf16 %v35, %v33
  %v38 = vpack.c.bf16 %v36, %v34
  %v39 = vld [vmem:[%s2] sm:$0x3]
  %v41 = vperm.slane %v39, 0
  %v42 = vperm.slane %v39, 1
  %vm45 = vcmask 130048
  %v47 = vsel %vm45, %v27, 0
  %v50 = vsel %vm45, %v28, 0
  %v53 = vsel %vm45, %v29, 0
  %v56 = vsel %vm45, %v30, 0
  %v59 = vsel %vm45, %v31, 0
  %v62 = vsel %vm45, %v32, 0
  %64 = vmatpush.bf16.msra.mxu0 0
  %65 = vmatpush.bf16.msra.mxu0 0
  %66 = vmatpush.bf16.msra.mxu0 0
  %67 = vmatpush.bf16.msra.mxu0 0
  %68 = vmatpush.bf16.msra.mxu0 0
  %69 = vmatpush.bf16.msra.mxu0 0
  %70 = vmatpush.bf16.msra.mxu0 0
  %71 = vmatpush.bf16.msra.mxu0 %v37
  %72 = vmatmul.bf16.gmra.mxu0 %v47
  %v73 = vpop.f32.mrf.mxu0
  %v74 = vadd.f32 %v41, %v73
  %v75 = vpop.f32.mrf.mxu0
  %v76 = vadd.f32 %v41, %v75
  %77 = vmatmul.bf16.gmra.mxu0 %v50
  %v78 = vpop.f32.mrf.mxu0
  %v79 = vadd.f32 %v41, %v78
  %v80 = vpop.f32.mrf.mxu0
  %v81 = vadd.f32 %v41, %v80
  %82 = vmatmul.bf16.gmra.mxu0 %v53
  %v83 = vpop.f32.mrf.mxu0
  %v84 = vadd.f32 %v41, %v83
  %v85 = vpop.f32.mrf.mxu0
  %v86 = vadd.f32 %v41, %v85
  %87 = vmatmul.bf16.gmra.mxu0 %v56
  %v88 = vpop.f32.mrf.mxu0
  %v89 = vadd.f32 %v41, %v88
  %v90 = vpop.f32.mrf.mxu0
  %v91 = vadd.f32 %v41, %v90
  %92 = vmatmul.bf16.gmra.mxu0 %v59
  %v93 = vpop.f32.mrf.mxu0
  %v94 = vadd.f32 %v41, %v93
  %v95 = vpop.f32.mrf.mxu0
  %v96 = vadd.f32 %v41, %v95
  %97 = vmatmul.bf16.gmra.mxu0 %v62
  %v98 = vpop.f32.mrf.mxu0
  %v99 = vadd.f32 %v41, %v98
  %v100 = vpop.f32.mrf.mxu0
  %v101 = vadd.f32 %v41, %v100
  %102 = vdwg.mxu0
  %103 = vmatpush.bf16.msra.mxu0 0
  %104 = vmatpush.bf16.msra.mxu0 0
  %105 = vmatpush.bf16.msra.mxu0 0
  %106 = vmatpush.bf16.msra.mxu0 0
  %107 = vmatpush.bf16.msra.mxu0 0
  %108 = vmatpush.bf16.msra.mxu0 0
  %109 = vmatpush.bf16.msra.mxu0 0
  %110 = vmatpush.bf16.msra.mxu0 %v38
  %111 = vmatmul.bf16.gmra.mxu0 %v47
  %v112 = vpop.f32.mrf.mxu0
  %v113 = vadd.f32 %v42, %v112
  %v114 = vpop.f32.mrf.mxu0
  %v115 = vadd.f32 %v42, %v114
  %116 = vmatmul.bf16.gmra.mxu0 %v50
  %v117 = vpop.f32.mrf.mxu0
  %v118 = vadd.f32 %v42, %v117
  %v119 = vpop.f32.mrf.mxu0
  %v120 = vadd.f32 %v42, %v119
  %121 = vmatmul.bf16.gmra.mxu0 %v53
  %v122 = vpop.f32.mrf.mxu0
  %v123 = vadd.f32 %v42, %v122
  %v124 = vpop.f32.mrf.mxu0
  %v125 = vadd.f32 %v42, %v124
  %126 = vmatmul.bf16.gmra.mxu0 %v56
  %v127 = vpop.f32.mrf.mxu0
  %v128 = vadd.f32 %v42, %v127
  %v129 = vpop.f32.mrf.mxu0
  %v130 = vadd.f32 %v42, %v129
  %131 = vmatmul.bf16.gmra.mxu0 %v59
  %v132 = vpop.f32.mrf.mxu0
  %v133 = vadd.f32 %v42, %v132
  %v134 = vpop.f32.mrf.mxu0
  %v135 = vadd.f32 %v42, %v134
  %136 = vmatmul.bf16.gmra.mxu0 %v62
  %v137 = vpop.f32.mrf.mxu0
  %v138 = vadd.f32 %v42, %v137
  %v139 = vpop.f32.mrf.mxu0
  %v140 = vadd.f32 %v42, %v139
  %141 = vdwg.mxu0
  %142 = vst [vmem:[%s3] sm:$0xff] %v74
  %143 = vst [vmem:[%s3 + $0x8] sm:$0xff] %v113
  %144 = vst [vmem:[%s3 + $0x10] sm:$0xff] %v76
  %145 = vst [vmem:[%s3 + $0x18] sm:$0xff] %v115
  %146 = vst [vmem:[%s3 + $0x20] sm:$0xff] %v79
  %147 = vst [vmem:[%s3 + $0x28] sm:$0xff] %v118
  %148 = vst [vmem:[%s3 + $0x30] sm:$0xff] %v81
  %149 = vst [vmem:[%s3 + $0x38] sm:$0xff] %v120
  %150 = vst [vmem:[%s3 + $0x40] sm:$0xff] %v84
  %151 = vst [vmem:[%s3 + $0x48] sm:$0xff] %v123
  %152 = vst [vmem:[%s3 + $0x50] sm:$0xff] %v86
  %153 = vst [vmem:[%s3 + $0x58] sm:$0xff] %v125
  %154 = vst [vmem:[%s3 + $0x60] sm:$0xff] %v89
  %155 = vst [vmem:[%s3 + $0x68] sm:$0xff] %v128
  %156 = vst [vmem:[%s3 + $0x70] sm:$0xff] %v91
  %157 = vst [vmem:[%s3 + $0x78] sm:$0xff] %v130
  %158 = vst [vmem:[%s3 + $0x80] sm:$0xff] %v94
  %159 = vst [vmem:[%s3 + $0x88] sm:$0xff] %v133
  %160 = vst [vmem:[%s3 + $0x90] sm:$0xff] %v96
  %161 = vst [vmem:[%s3 + $0x98] sm:$0xff] %v135
  %162 = vst [vmem:[%s3 + $0xa0] sm:$0xff] %v99
  %163 = vst [vmem:[%s3 + $0xa8] sm:$0xff] %v138
  %164 = vst [vmem:[%s3 + $0xb0] sm:$0xff] %v101
  %165 = vst [vmem:[%s3 + $0xb8] sm:$0xff] %v140
  // Predicated region
  $region14: #{swave_forward.16} parent=0 // pred_check
    _
  $region15: #{swave_forward.16} parent=0 // pred_check_branch
    %167 = sbr.rel (0) target = $region17
  $region16: #{swave_forward.16} parent=0 // pred_region
    _
  $region17: #{swave_forward.16} parent=0 // pred_fallthru
    _
  // Predicated region
  $region18: #{swave_forward.16} parent=0 // pred_check
    _
  $region19: #{swave_forward.16} parent=0 // pred_check_branch
    %169 = sbr.rel (0) target = $region21
  $region20: #{swave_forward.16} parent=0 // pred_region
    _
  $region21: #{swave_forward.16} parent=0 // pred_fallthru
    _

// kernel: swave_forward.18
$region0: #{swave_forward.18}
  #allocation0 [shape = 'u32[]', space=smem, size = 0x4, offset = 0x4, fixed_abs, tag = 'smem constant byte address 0x4 - core index']
  #allocation1 [shape = 'u32[72,128]{1,0:T(1,128)}', space=vmem, size = 0x9000, scoped, tag = 'internal scratch']
  %s0 = inlined_call_operand.vmem [shape: f32[96,32], index: 0, kind: input, shape index: {}]
  %s1 = inlined_call_operand.vmem [shape: f32[96,32], index: 1, kind: input, shape index: {}]
  %s2 = inlined_call_operand.vmem [shape: f32[96,16], index: 2, kind: input, shape index: {}]
  %s3 = inlined_call_operand.vmem [shape: f32[32,32], index: 3, kind: input, shape index: {}]
  %s4 = inlined_call_operand.vmem [shape: f32[32,32], index: 4, kind: input, shape index: {}]
  %s5 = inlined_call_operand.vmem [shape: f32[1,32], index: 5, kind: input, shape index: {}]
  %s6 = inlined_call_operand.vmem [shape: f32[16,16], index: 6, kind: input, shape index: {}]
  %s7 = inlined_call_operand.vmem [shape: f32[16,16], index: 7, kind: input, shape index: {}]
  %s8 = inlined_call_operand.vmem [shape: f32[1,16], index: 8, kind: input, shape index: {}]
  %s9 = inlined_call_operand.vmem [shape: f32[96,16], index: 9, kind: output, shape index: {}]
  %s10 = sld [smem:[#allocation0]]
  $region46: #{swave_forward.18} parent=0
    _
  %s12 = ssub.s32 1, %s10
  %s13 = scalar_select 0, %s12, %s10
  // Predicated region
  $region2: #{swave_forward.18} parent=0 // pred_check
    _
  $region3: #{swave_forward.18} parent=0 // pred_check_branch
    %15 = sbr.rel (0) target = $region5
  $region4: #{swave_forward.18} parent=0 // pred_region
    _
  $region5: #{swave_forward.18} parent=0 // pred_fallthru
    _
  // Predicated region
  $region6: #{swave_forward.18} parent=0 // pred_check
    _
  $region7: #{swave_forward.18} parent=0 // pred_check_branch
    %17 = sbr.rel (0) target = $region9
  $region8: #{swave_forward.18} parent=0 // pred_region
    _
  $region9: #{swave_forward.18} parent=0 // pred_fallthru
    _
  // Predicated region
  $region10: #{swave_forward.18} parent=0 // pred_check
    _
  $region11: #{swave_forward.18} parent=0 // pred_check_branch
    %19 = sbr.rel (0) target = $region13
  $region12: #{swave_forward.18} parent=0 // pred_region
    _
  $region13: #{swave_forward.18} parent=0 // pred_fallthru
    _
  // Predicated region
  $region14: #{swave_forward.18} parent=0 // pred_check
    _
  $region15: #{swave_forward.18} parent=0 // pred_check_branch
    %21 = sbr.rel (0) target = $region17
  $region16: #{swave_forward.18} parent=0 // pred_region
    _
  $region17: #{swave_forward.18} parent=0 // pred_fallthru
    _
  // Predicated region
  $region18: #{swave_forward.18} parent=0 // pred_check
    _
  $region19: #{swave_forward.18} parent=0 // pred_check_branch
    %23 = sbr.rel (0) target = $region21
  $region20: #{swave_forward.18} parent=0 // pred_region
    _
  $region21: #{swave_forward.18} parent=0 // pred_fallthru
    _
  // Predicated region
  $region22: #{swave_forward.18} parent=0 // pred_check
    _
  $region23: #{swave_forward.18} parent=0 // pred_check_branch
    %25 = sbr.rel (0) target = $region25
  $region24: #{swave_forward.18} parent=0 // pred_region
    _
  $region25: #{swave_forward.18} parent=0 // pred_fallthru
    _
  // Predicated region
  $region26: #{swave_forward.18} parent=0 // pred_check
    _
  $region27: #{swave_forward.18} parent=0 // pred_check_branch
    %27 = sbr.rel (0) target = $region29
  $region28: #{swave_forward.18} parent=0 // pred_region
    _
  $region29: #{swave_forward.18} parent=0 // pred_fallthru
    _
  // Predicated region
  $region30: #{swave_forward.18} parent=0 // pred_check
    _
  $region31: #{swave_forward.18} parent=0 // pred_check_branch
    %29 = sbr.rel (0) target = $region33
  $region32: #{swave_forward.18} parent=0 // pred_region
    _
  $region33: #{swave_forward.18} parent=0 // pred_fallthru
    _
  // Predicated region
  $region34: #{swave_forward.18} parent=0 // pred_check
    _
  $region35: #{swave_forward.18} parent=0 // pred_check_branch
    %31 = sbr.rel (0) target = $region37
  $region36: #{swave_forward.18} parent=0 // pred_region
    _
  $region37: #{swave_forward.18} parent=0 // pred_fallthru
    _
  %v33 = vld [vmem:[%s2] sm:$0xff]
  %v34 = vld [vmem:[%s2 + $0x8] sm:$0xff]
  %v35 = vld [vmem:[%s2 + $0x10] sm:$0xff]
  %v36 = vld [vmem:[%s2 + $0x18] sm:$0xff]
  %v37 = vld [vmem:[%s2 + $0x20] sm:$0xff]
  %v38 = vld [vmem:[%s2 + $0x28] sm:$0xff]
  %v39 = vld [vmem:[%s2 + $0x30] sm:$0xff]
  %v40 = vld [vmem:[%s2 + $0x38] sm:$0xff]
  %v41 = vld [vmem:[%s2 + $0x40] sm:$0xff]
  %v42 = vld [vmem:[%s2 + $0x48] sm:$0xff]
  %v43 = vld [vmem:[%s2 + $0x50] sm:$0xff]
  %v44 = vld [vmem:[%s2 + $0x58] sm:$0xff]
  %v45 = vld [vmem:[%s0] sm:$0xff]
  %v46 = vld [vmem:[%s0 + $0x8] sm:$0xff]
  %v47 = vld [vmem:[%s0 + $0x10] sm:$0xff]
  %v48 = vld [vmem:[%s0 + $0x18] sm:$0xff]
  %v49 = vld [vmem:[%s0 + $0x20] sm:$0xff]
  %v50 = vld [vmem:[%s0 + $0x28] sm:$0xff]
  %v51 = vld [vmem:[%s0 + $0x30] sm:$0xff]
  %v52 = vld [vmem:[%s0 + $0x38] sm:$0xff]
  %v53 = vld [vmem:[%s0 + $0x40] sm:$0xff]
  %v54 = vld [vmem:[%s0 + $0x48] sm:$0xff]
  %v55 = vld [vmem:[%s0 + $0x50] sm:$0xff]
  %v56 = vld [vmem:[%s0 + $0x58] sm:$0xff]
  %v57 = vpack.c.bf16 %v46, %v45
  %v58 = vpack.c.bf16 %v48, %v47
  %v59 = vpack.c.bf16 %v50, %v49
  %v60 = vpack.c.bf16 %v52, %v51
  %v61 = vpack.c.bf16 %v54, %v53
  %v62 = vpack.c.bf16 %v56, %v55
  %v63 = vld [vmem:[%s3] sm:$0xff]
  %v64 = vld [vmem:[%s3 + $0x8] sm:$0xff]
  %v65 = vld [vmem:[%s3 + $0x10] sm:$0xff]
  %v66 = vld [vmem:[%s3 + $0x18] sm:$0xff]
  %v67 = vpack.c.bf16 %v64, %v63
  %v68 = vpack.c.bf16 %v66, %v65
  %v69 = vld [vmem:[%s1] sm:$0xff]
  %v70 = vld [vmem:[%s1 + $0x8] sm:$0xff]
  %v71 = vld [vmem:[%s1 + $0x10] sm:$0xff]
  %v72 = vld [vmem:[%s1 + $0x18] sm:$0xff]
  %v73 = vld [vmem:[%s1 + $0x20] sm:$0xff]
  %v74 = vld [vmem:[%s1 + $0x28] sm:$0xff]
  %v75 = vld [vmem:[%s1 + $0x30] sm:$0xff]
  %v76 = vld [vmem:[%s1 + $0x38] sm:$0xff]
  %v77 = vld [vmem:[%s1 + $0x40] sm:$0xff]
  %v78 = vld [vmem:[%s1 + $0x48] sm:$0xff]
  %v79 = vld [vmem:[%s1 + $0x50] sm:$0xff]
  %v80 = vld [vmem:[%s1 + $0x58] sm:$0xff]
  %v81 = vpack.c.bf16 %v70, %v69
  %v82 = vpack.c.bf16 %v72, %v71
  %v83 = vpack.c.bf16 %v74, %v73
  %v84 = vpack.c.bf16 %v76, %v75
  %v85 = vpack.c.bf16 %v78, %v77
  %v86 = vpack.c.bf16 %v80, %v79
  %v87 = vld [vmem:[%s4] sm:$0xff]
  %v88 = vld [vmem:[%s4 + $0x8] sm:$0xff]
  %v89 = vld [vmem:[%s4 + $0x10] sm:$0xff]
  %v90 = vld [vmem:[%s4 + $0x18] sm:$0xff]
  %v91 = vpack.c.bf16 %v88, %v87
  %v92 = vpack.c.bf16 %v90, %v89
  %vm93 = vcmask 261120
  %v95 = vsel %vm93, %v81, 0
  %v98 = vsel %vm93, %v82, 0
  %v101 = vsel %vm93, %v83, 0
  %v104 = vsel %vm93, %v84, 0
  %v107 = vsel %vm93, %v85, 0
  %v110 = vsel %vm93, %v86, 0
  %112 = vmatpush.bf16.msra.mxu0 0
  %113 = vmatpush.bf16.msra.mxu0 0
  %114 = vmatpush.bf16.msra.mxu0 0
  %115 = vmatpush.bf16.msra.mxu0 0
  %116 = vmatpush.bf16.msra.mxu0 0
  %117 = vmatpush.bf16.msra.mxu0 0
  %118 = vmatpush.bf16.msra.mxu0 %v92
  %119 = vmatpush.bf16.msra.mxu0 %v91
  %120 = vmatmul.bf16.gmra.mxu0 %v95
  %v121 = vpop.f32.mrf.mxu0
  %v122 = vadd.f32 0.0, %v121
  %v123 = vpop.f32.mrf.mxu0
  %v124 = vadd.f32 0.0, %v123
  %125 = vmatmul.bf16.gmra.mxu0 %v98
  %v126 = vpop.f32.mrf.mxu0
  %v127 = vadd.f32 0.0, %v126
  %v128 = vpop.f32.mrf.mxu0
  %v129 = vadd.f32 0.0, %v128
  %130 = vmatmul.bf16.gmra.mxu0 %v101
  %v131 = vpop.f32.mrf.mxu0
  %v132 = vadd.f32 0.0, %v131
  %v133 = vpop.f32.mrf.mxu0
  %v134 = vadd.f32 0.0, %v133
  %135 = vmatmul.bf16.gmra.mxu0 %v104
  %v136 = vpop.f32.mrf.mxu0
  %v137 = vadd.f32 0.0, %v136
  %v138 = vpop.f32.mrf.mxu0
  %v139 = vadd.f32 0.0, %v138
  %140 = vmatmul.bf16.gmra.mxu0 %v107
  %v141 = vpop.f32.mrf.mxu0
  %v142 = vadd.f32 0.0, %v141
  %v143 = vpop.f32.mrf.mxu0
  %v144 = vadd.f32 0.0, %v143
  %145 = vmatmul.bf16.gmra.mxu0 %v110
  %v146 = vpop.f32.mrf.mxu0
  %v147 = vadd.f32 0.0, %v146
  %v148 = vpop.f32.mrf.mxu0
  %v149 = vadd.f32 0.0, %v148
  %150 = vdwg.mxu0
  %v152 = vsel %vm93, %v57, 0
  %v155 = vsel %vm93, %v58, 0
  %v158 = vsel %vm93, %v59, 0
  %v161 = vsel %vm93, %v60, 0
  %v164 = vsel %vm93, %v61, 0
  %v167 = vsel %vm93, %v62, 0
  %169 = vmatpush.bf16.msra.mxu0 0
  %170 = vmatpush.bf16.msra.mxu0 0
  %171 = vmatpush.bf16.msra.mxu0 0
  %172 = vmatpush.bf16.msra.mxu0 0
  %173 = vmatpush.bf16.msra.mxu0 0
  %174 = vmatpush.bf16.msra.mxu0 0
  %175 = vmatpush.bf16.msra.mxu0 %v68
  %176 = vmatpush.bf16.msra.mxu0 %v67
  %177 = vmatmul.bf16.gmra.mxu0 %v152
  %v178 = vpop.f32.mrf.mxu0
  %v179 = vadd.f32 %v122, %v178
  %v180 = vpop.f32.mrf.mxu0
  %v181 = vadd.f32 %v124, %v180
  %182 = vmatmul.bf16.gmra.mxu0 %v155
  %v183 = vpop.f32.mrf.mxu0
  %v184 = vadd.f32 %v127, %v183
  %v185 = vpop.f32.mrf.mxu0
  %v186 = vadd.f32 %v129, %v185
  %187 = vmatmul.bf16.gmra.mxu0 %v158
  %v188 = vpop.f32.mrf.mxu0
  %v189 = vadd.f32 %v132, %v188
  %v190 = vpop.f32.mrf.mxu0
  %v191 = vadd.f32 %v134, %v190
  %192 = vmatmul.bf16.gmra.mxu0 %v161
  %v193 = vpop.f32.mrf.mxu0
  %v194 = vadd.f32 %v137, %v193
  %v195 = vpop.f32.mrf.mxu0
  %v196 = vadd.f32 %v139, %v195
  %197 = vmatmul.bf16.gmra.mxu0 %v164
  %v198 = vpop.f32.mrf.mxu0
  %v199 = vadd.f32 %v142, %v198
  %v200 = vpop.f32.mrf.mxu0
  %v201 = vadd.f32 %v144, %v200
  %202 = vmatmul.bf16.gmra.mxu0 %v167
  %v203 = vpop.f32.mrf.mxu0
  %v204 = vadd.f32 %v147, %v203
  %v205 = vpop.f32.mrf.mxu0
  %v206 = vadd.f32 %v149, %v205
  %207 = vdwg.mxu0
  %v208 = vld [vmem:[%s5] sm:$0x1]
  %v210 = vperm.slane %v208, 0
  %v212 = vadd.f32 %v179, %v210
  %v213 = vadd.f32 %v181, %v210
  %v214 = vadd.f32 %v184, %v210
  %v215 = vadd.f32 %v186, %v210
  %v216 = vadd.f32 %v189, %v210
  %v217 = vadd.f32 %v191, %v210
  %v218 = vadd.f32 %v194, %v210
  %v219 = vadd.f32 %v196, %v210
  %v220 = vadd.f32 %v199, %v210
  %v221 = vadd.f32 %v201, %v210
  %v222 = vadd.f32 %v204, %v210
  %v223 = vadd.f32 %v206, %v210
  %236 = vrot.lane.b32.xlu0 %v212, 112
  %v237 = vpop.permute.xlu0 %236
  %238 = vrot.lane.b32.xlu0 %v213, 112
  %v239 = vpop.permute.xlu0 %238
  %240 = vrot.lane.b32.xlu0 %v214, 112
  %v241 = vpop.permute.xlu0 %240
  %242 = vrot.lane.b32.xlu0 %v215, 112
  %v243 = vpop.permute.xlu0 %242
  %244 = vrot.lane.b32.xlu0 %v216, 112
  %v245 = vpop.permute.xlu0 %244
  %246 = vrot.lane.b32.xlu0 %v217, 112
  %v247 = vpop.permute.xlu0 %246
  %248 = vrot.lane.b32.xlu0 %v218, 112
  %v249 = vpop.permute.xlu0 %248
  %250 = vrot.lane.b32.xlu0 %v219, 112
  %v251 = vpop.permute.xlu0 %250
  %252 = vrot.lane.b32.xlu0 %v220, 112
  %v253 = vpop.permute.xlu0 %252
  %254 = vrot.lane.b32.xlu0 %v221, 112
  %v255 = vpop.permute.xlu0 %254
  %256 = vrot.lane.b32.xlu0 %v222, 112
  %v257 = vpop.permute.xlu0 %256
  %258 = vrot.lane.b32.xlu0 %v223, 112
  %v259 = vpop.permute.xlu0 %258
  %v272 = vmul.f32 %v212, %v237
  %v273 = vmul.f32 %v213, %v239
  %v274 = vmul.f32 %v214, %v241
  %v275 = vmul.f32 %v215, %v243
  %v276 = vmul.f32 %v216, %v245
  %v277 = vmul.f32 %v217, %v247
  %v278 = vmul.f32 %v218, %v249
  %v279 = vmul.f32 %v219, %v251
  %v280 = vmul.f32 %v220, %v253
  %v281 = vmul.f32 %v221, %v255
  %v282 = vmul.f32 %v222, %v257
  %v283 = vmul.f32 %v223, %v259
  %v284 = vpack.c.bf16 %v273, %v272
  %v285 = vpack.c.bf16 %v275, %v274
  %v286 = vpack.c.bf16 %v277, %v276
  %v287 = vpack.c.bf16 %v279, %v278
  %v288 = vpack.c.bf16 %v281, %v280
  %v289 = vpack.c.bf16 %v283, %v282
  %v290 = vld [vmem:[%s6] sm:$0xff]
  %v291 = vld [vmem:[%s6 + $0x8] sm:$0xff]
  %v292 = vpack.c.bf16 %v291, %v290
  %v293 = vpack.c.bf16 %v34, %v33
  %v294 = vpack.c.bf16 %v36, %v35
  %v295 = vpack.c.bf16 %v38, %v37
  %v296 = vpack.c.bf16 %v40, %v39
  %v297 = vpack.c.bf16 %v42, %v41
  %v298 = vpack.c.bf16 %v44, %v43
  %v299 = vld [vmem:[%s7] sm:$0xff]
  %v300 = vld [vmem:[%s7 + $0x8] sm:$0xff]
  %v301 = vpack.c.bf16 %v300, %v299
  %vm302 = vcmask 130048
  %v304 = vsel %vm302, %v293, 0
  %v307 = vsel %vm302, %v294, 0
  %v310 = vsel %vm302, %v295, 0
  %v313 = vsel %vm302, %v296, 0
  %v316 = vsel %vm302, %v297, 0
  %v319 = vsel %vm302, %v298, 0
  %321 = vmatpush.bf16.msra.mxu0 0
  %322 = vmatpush.bf16.msra.mxu0 0
  %323 = vmatpush.bf16.msra.mxu0 0
  %324 = vmatpush.bf16.msra.mxu0 0
  %325 = vmatpush.bf16.msra.mxu0 0
  %326 = vmatpush.bf16.msra.mxu0 0
  %327 = vmatpush.bf16.msra.mxu0 0
  %328 = vmatpush.bf16.msra.mxu0 %v301
  %329 = vmatmul.bf16.gmra.mxu0 %v304
  %v330 = vpop.f32.mrf.mxu0
  %v331 = vadd.f32 0.0, %v330
  %v332 = vpop.f32.mrf.mxu0
  %v333 = vadd.f32 0.0, %v332
  %334 = vmatmul.bf16.gmra.mxu0 %v307
  %v335 = vpop.f32.mrf.mxu0
  %v336 = vadd.f32 0.0, %v335
  %v337 = vpop.f32.mrf.mxu0
  %v338 = vadd.f32 0.0, %v337
  %339 = vmatmul.bf16.gmra.mxu0 %v310
  %v340 = vpop.f32.mrf.mxu0
  %v341 = vadd.f32 0.0, %v340
  %v342 = vpop.f32.mrf.mxu0
  %v343 = vadd.f32 0.0, %v342
  %344 = vmatmul.bf16.gmra.mxu0 %v313
  %v345 = vpop.f32.mrf.mxu0
  %v346 = vadd.f32 0.0, %v345
  %v347 = vpop.f32.mrf.mxu0
  %v348 = vadd.f32 0.0, %v347
  %349 = vmatmul.bf16.gmra.mxu0 %v316
  %v350 = vpop.f32.mrf.mxu0
  %v351 = vadd.f32 0.0, %v350
  %v352 = vpop.f32.mrf.mxu0
  %v353 = vadd.f32 0.0, %v352
  %354 = vmatmul.bf16.gmra.mxu0 %v319
  %v355 = vpop.f32.mrf.mxu0
  %v356 = vadd.f32 0.0, %v355
  %v357 = vpop.f32.mrf.mxu0
  %v358 = vadd.f32 0.0, %v357
  %359 = vdwg.mxu0
  %v361 = vsel %vm302, %v284, 0
  %v364 = vsel %vm302, %v285, 0
  %v367 = vsel %vm302, %v286, 0
  %v370 = vsel %vm302, %v287, 0
  %v373 = vsel %vm302, %v288, 0
  %v376 = vsel %vm302, %v289, 0
  %378 = vmatpush.bf16.msra.mxu0 0
  %379 = vmatpush.bf16.msra.mxu0 0
  %380 = vmatpush.bf16.msra.mxu0 0
  %381 = vmatpush.bf16.msra.mxu0 0
  %382 = vmatpush.bf16.msra.mxu0 0
  %383 = vmatpush.bf16.msra.mxu0 0
  %384 = vmatpush.bf16.msra.mxu0 0
  %385 = vmatpush.bf16.msra.mxu0 %v292
  %386 = vmatmul.bf16.gmra.mxu0 %v361
  %v387 = vpop.f32.mrf.mxu0
  %v388 = vadd.f32 %v331, %v387
  %v389 = vpop.f32.mrf.mxu0
  %v390 = vadd.f32 %v333, %v389
  %391 = vmatmul.bf16.gmra.mxu0 %v364
  %v392 = vpop.f32.mrf.mxu0
  %v393 = vadd.f32 %v336, %v392
  %v394 = vpop.f32.mrf.mxu0
  %v395 = vadd.f32 %v338, %v394
  %396 = vmatmul.bf16.gmra.mxu0 %v367
  %v397 = vpop.f32.mrf.mxu0
  %v398 = vadd.f32 %v341, %v397
  %v399 = vpop.f32.mrf.mxu0
  %v400 = vadd.f32 %v343, %v399
  %401 = vmatmul.bf16.gmra.mxu0 %v370
  %v402 = vpop.f32.mrf.mxu0
  %v403 = vadd.f32 %v346, %v402
  %v404 = vpop.f32.mrf.mxu0
  %v405 = vadd.f32 %v348, %v404
  %406 = vmatmul.bf16.gmra.mxu0 %v373
  %v407 = vpop.f32.mrf.mxu0
  %v408 = vadd.f32 %v351, %v407
  %v409 = vpop.f32.mrf.mxu0
  %v410 = vadd.f32 %v353, %v409
  %411 = vmatmul.bf16.gmra.mxu0 %v376
  %v412 = vpop.f32.mrf.mxu0
  %v413 = vadd.f32 %v356, %v412
  %v414 = vpop.f32.mrf.mxu0
  %v415 = vadd.f32 %v358, %v414
  %416 = vdwg.mxu0
  %v417 = vld [vmem:[%s8] sm:$0x1]
  %v419 = vperm.slane %v417, 0
  %v421 = vadd.f32 %v388, %v419
  %v422 = vadd.f32 %v390, %v419
  %v423 = vadd.f32 %v393, %v419
  %v424 = vadd.f32 %v395, %v419
  %v425 = vadd.f32 %v398, %v419
  %v426 = vadd.f32 %v400, %v419
  %v427 = vadd.f32 %v403, %v419
  %v428 = vadd.f32 %v405, %v419
  %v429 = vadd.f32 %v408, %v419
  %v430 = vadd.f32 %v410, %v419
  %v431 = vadd.f32 %v413, %v419
  %v432 = vadd.f32 %v415, %v419
  %v433 = vadd.f32 %v421, %v33
  %v434 = vadd.f32 %v422, %v34
  %v435 = vadd.f32 %v423, %v35
  %v436 = vadd.f32 %v424, %v36
  %v437 = vadd.f32 %v425, %v37
  %v438 = vadd.f32 %v426, %v38
  %v439 = vadd.f32 %v427, %v39
  %v440 = vadd.f32 %v428, %v40
  %v441 = vadd.f32 %v429, %v41
  %v442 = vadd.f32 %v430, %v42
  %v443 = vadd.f32 %v431, %v43
  %v444 = vadd.f32 %v432, %v44
  %445 = vst.msk [vmem:[%s9] sm:$0xff] %vm302, %v433
  %446 = vst.msk [vmem:[%s9 + $0x8] sm:$0xff] %vm302, %v434
  %447 = vst.msk [vmem:[%s9 + $0x10] sm:$0xff] %vm302, %v435
  %448 = vst.msk [vmem:[%s9 + $0x18] sm:$0xff] %vm302, %v436
  %449 = vst.msk [vmem:[%s9 + $0x20] sm:$0xff] %vm302, %v437
  %450 = vst.msk [vmem:[%s9 + $0x28] sm:$0xff] %vm302, %v438
  %451 = vst.msk [vmem:[%s9 + $0x30] sm:$0xff] %vm302, %v439
  %452 = vst.msk [vmem:[%s9 + $0x38] sm:$0xff] %vm302, %v440
  %453 = vst.msk [vmem:[%s9 + $0x40] sm:$0xff] %vm302, %v441
  %454 = vst.msk [vmem:[%s9 + $0x48] sm:$0xff] %vm302, %v442
  %455 = vst.msk [vmem:[%s9 + $0x50] sm:$0xff] %vm302, %v443
  %456 = vst.msk [vmem:[%s9 + $0x58] sm:$0xff] %vm302, %v444
  // Predicated region
  $region38: #{swave_forward.18} parent=0 // pred_check
    _
  $region39: #{swave_forward.18} parent=0 // pred_check_branch
    %458 = sbr.rel (0) target = $region41
  $region40: #{swave_forward.18} parent=0 // pred_region
    _
  $region41: #{swave_forward.18} parent=0 // pred_fallthru
    _
  // Predicated region
  $region42: #{swave_forward.18} parent=0 // pred_check
    _
  $region43: #{swave_forward.18} parent=0 // pred_check_branch
    %460 = sbr.rel (0) target = $region45
  $region44: #{swave_forward.18} parent=0 // pred_region
    _
  $region45: #{swave_forward.18} parent=0 // pred_fallthru
    _

// kernel: swave_forward.17
$region0: #{swave_forward.17}
  #allocation0 [shape = 'u32[]', space=smem, size = 0x4, offset = 0x4, fixed_abs, tag = 'smem constant byte address 0x4 - core index']
  #allocation1 [shape = 'u32[72,128]{1,0:T(1,128)}', space=vmem, size = 0x9000, scoped, tag = 'internal scratch']
  #allocation2 [shape = 'f32[12,64]{1,0:T(8,128)}', space=vmem, size = 0x2000, scoped, tag = 'scratch operand']
  #allocation3 [shape = 'f32[12,64]{1,0:T(8,128)}', space=vmem, size = 0x2000, scoped, tag = 'scratch operand']
  %s0 = inlined_call_operand.vmem [shape: f32[8,12,256], index: 0, kind: input, shape index: {}]
  %s1 = inlined_call_operand.vmem [shape: f32[64,256], index: 1, kind: input, shape index: {}]
  %s2 = inlined_call_operand.vmem [shape: f32[1,256], index: 2, kind: input, shape index: {}]
  %s3 = inlined_call_operand.vmem [shape: f32[8,12,32], index: 3, kind: output, shape index: {0}]
  %s4 = inlined_call_operand.vmem [shape: f32[8,12,32], index: 4, kind: output, shape index: {1}]
  %5 = xla_tuple %s3, %s4
  %s6 = sld [smem:[#allocation0]]
  $region30: #{swave_forward.17} parent=0
    _
  %s8 = ssub.s32 1, %s6
  %s9 = scalar_select 0, %s8, %s6
  // Predicated region
  $region2: #{swave_forward.17} parent=0 // pred_check
    _
  $region3: #{swave_forward.17} parent=0 // pred_check_branch
    %11 = sbr.rel (0) target = $region5
  $region4: #{swave_forward.17} parent=0 // pred_region
    _
  $region5: #{swave_forward.17} parent=0 // pred_fallthru
    _
  // Predicated region
  $region6: #{swave_forward.17} parent=0 // pred_check
    _
  $region7: #{swave_forward.17} parent=0 // pred_check_branch
    %13 = sbr.rel (0) target = $region9
  $region8: #{swave_forward.17} parent=0 // pred_region
    _
  $region9: #{swave_forward.17} parent=0 // pred_fallthru
    _
  // Predicated region
  $region10: #{swave_forward.17} parent=0 // pred_check
    _
  $region11: #{swave_forward.17} parent=0 // pred_check_branch
    %15 = sbr.rel (0) target = $region13
  $region12: #{swave_forward.17} parent=0 // pred_region
    _
  $region13: #{swave_forward.17} parent=0 // pred_fallthru
    _
  %vm17 = vcmask 523264
  %18 = vst.msk [vmem:[#allocation2] sm:$0xff] %vm17, 0.0
  %vm19 = vcmask 519168
  %20 = vst.msk [vmem:[#allocation2 + $0x8] sm:$0xf] %vm19, 0.0
  %21 = vst.msk [vmem:[#allocation3] sm:$0xff] %vm17, 0.0
  %22 = vst.msk [vmem:[#allocation3 + $0x8] sm:$0xf] %vm19, 0.0
  %v23 = vld [vmem:[%s2] sm:$0x3]
  %v24 = vld [vmem:[%s1] sm:$0xff]
  %v25 = vld [vmem:[%s1 + $0x8] sm:$0xff]
  %v26 = vld [vmem:[%s1 + $0x10] sm:$0xff]
  %v27 = vld [vmem:[%s1 + $0x18] sm:$0xff]
  %v28 = vld [vmem:[%s1 + $0x20] sm:$0xff]
  %v29 = vld [vmem:[%s1 + $0x28] sm:$0xff]
  %v30 = vld [vmem:[%s1 + $0x30] sm:$0xff]
  %v31 = vld [vmem:[%s1 + $0x38] sm:$0xff]
  %v32 = vld [vmem:[%s1 + $0x40] sm:$0xff]
  %v33 = vld [vmem:[%s1 + $0x48] sm:$0xff]
  %v34 = vld [vmem:[%s1 + $0x50] sm:$0xff]
  %v35 = vld [vmem:[%s1 + $0x58] sm:$0xff]
  %v36 = vld [vmem:[%s1 + $0x60] sm:$0xff]
  %v37 = vld [vmem:[%s1 + $0x68] sm:$0xff]
  %v38 = vld [vmem:[%s1 + $0x70] sm:$0xff]
  %v39 = vld [vmem:[%s1 + $0x78] sm:$0xff]
  %v40 = vpack.c.bf16 %v26, %v24
  %v41 = vpack.c.bf16 %v27, %v25
  %v42 = vpack.c.bf16 %v30, %v28
  %v43 = vpack.c.bf16 %v31, %v29
  %v44 = vpack.c.bf16 %v34, %v32
  %v45 = vpack.c.bf16 %v35, %v33
  %v46 = vpack.c.bf16 %v38, %v36
  %v47 = vpack.c.bf16 %v39, %v37
  %v48 = vld [vmem:[%s0] sm:$0xff]
  %v49 = vld [vmem:[%s0 + $0x8] sm:$0xff]
  %v50 = vld [vmem:[%s0 + $0x10] sm:$0xf]
  %v51 = vld [vmem:[%s0 + $0x18] sm:$0xf]
  %v53 = vperm.slane %v23, 0
  %v54 = vperm.slane %v23, 1
  %v57 = vmul.f32 %v53, %v48
  %v58 = vmul.f32 %v54, %v49
  %v59 = vmul.f32 %v53, %v50
  %v60 = vmul.f32 %v54, %v51
  %v61 = vsub.f32 1.0, %v23
  %s62 = scalar_lea.vmem %s0, 224
  %v63 = vld [vmem:[%s62] sm:$0xff]
  %v64 = vld [vmem:[%s62 + $0x8] sm:$0xff]
  %v65 = vld [vmem:[%s62 + $0x10] sm:$0xf]
  %v66 = vld [vmem:[%s62 + $0x18] sm:$0xf]
  %v68 = vperm.slane %v61, 0
  %v69 = vperm.slane %v61, 1
  %v72 = vmul.f32 %v68, %v63
  %v73 = vmul.f32 %v69, %v64
  %v74 = vmul.f32 %v68, %v65
  %v75 = vmul.f32 %v69, %v66
  %v76 = vadd.f32 %v57, %v72
  %v77 = vadd.f32 %v58, %v73
  %v78 = vadd.f32 %v59, %v74
  %v79 = vadd.f32 %v60, %v75
  %v80 = vld [vmem:[#allocation2] sm:$0xff]
  %v81 = vld [vmem:[#allocation2 + $0x8] sm:$0xf]
  %v82 = vpack.c.bf16 %v81, %v80
  %v84 = vsel %vm17, %v82, 0
  %86 = vmatpush.bf16.msra.mxu0 0
  %87 = vmatpush.bf16.msra.mxu0 0
  %88 = vmatpush.bf16.msra.mxu0 0
  %89 = vmatpush.bf16.msra.mxu0 0
  %90 = vmatpush.bf16.msra.mxu0 %v46
  %91 = vmatpush.bf16.msra.mxu0 %v44
  %92 = vmatpush.bf16.msra.mxu0 %v42
  %93 = vmatpush.bf16.msra.mxu0 %v40
  %94 = vmatmul.bf16.gmra.mxu0 %v84
  %v95 = vpop.f32.mrf.mxu0
  %v96 = vadd.f32 0.0, %v95
  %v97 = vpop.f32.mrf.mxu0
  %v98 = vadd.f32 0.0, %v97
  %99 = vdwg.mxu0
  %100 = vmatpush.bf16.msra.mxu0 0
  %101 = vmatpush.bf16.msra.mxu0 0
  %102 = vmatpush.bf16.msra.mxu0 0
  %103 = vmatpush.bf16.msra.mxu0 0
  %104 = vmatpush.bf16.msra.mxu0 %v47
  %105 = vmatpush.bf16.msra.mxu0 %v45
  %106 = vmatpush.bf16.msra.mxu0 %v43
  %107 = vmatpush.bf16.msra.mxu0 %v41
  %108 = vmatmul.bf16.gmra.mxu0 %v84
  %v109 = vpop.f32.mrf.mxu0
  %v110 = vadd.f32 0.0, %v109
  %v111 = vpop.f32.mrf.mxu0
  %v112 = vadd.f32 0.0, %v111
  %113 = vdwg.mxu0
  %v114 = vadd.f32 %v76, %v96
  %v115 = vadd.f32 %v77, %v110
  %v116 = vadd.f32 %v78, %v98
  %v117 = vadd.f32 %v79, %v112
  %v118 = vxor.u32 %v114, 2147483648
  %v119 = vxor.u32 %v116, 2147483648
  %v120 = vmul.f32 %v118, 1.442695
  %v121 = vpow.pop %v120
  %v122 = vmul.f32 %v119, 1.442695
  %v123 = vpow.pop %v122
  %v124 = vadd.f32 %v121, 1.0
  %v125 = vadd.f32 %v123, 1.0
  %v126 = vrcp.pop %v124
  %v127 = vmul.f32 %v124, %v126
  %v128 = vsub.f32 1.0, %v127
  %v129 = vmul.f32 %v126, %v128
  %v130 = vadd.f32 %v126, %v129
  %vm131 = vweird.f32 %v124
  %vm132 = vweird.f32 %v126
  %vm133 = vmor %vm131, %vm132
  %v134 = vsel %vm133, %v126, %v130
  %v135 = vand.u32 2147483647, %v124
  %vm136 = vcmp.eq.f32.partialorder %v135, 8.507059e+37
  %v137 = vand.u32 %v124, 2147483648
  %v138 = vor.u32 1.1754944e-38, %v137
  %v139 = vsel %vm136, %v138, %v134
  %v140 = vmul.f32 1.0, %v139
  %v141 = vrcp.pop %v125
  %v142 = vmul.f32 %v125, %v141
  %v143 = vsub.f32 1.0, %v142
  %v144 = vmul.f32 %v141, %v143
  %v145 = vadd.f32 %v141, %v144
  %vm146 = vweird.f32 %v125
  %vm147 = vweird.f32 %v141
  %vm148 = vmor %vm146, %vm147
  %v149 = vsel %vm148, %v141, %v145
  %v150 = vand.u32 2147483647, %v125
  %vm151 = vcmp.eq.f32.partialorder %v150, 8.507059e+37
  %v152 = vand.u32 %v125, 2147483648
  %v153 = vor.u32 1.1754944e-38, %v152
  %v154 = vsel %vm151, %v153, %v149
  %v155 = vmul.f32 1.0, %v154
  %v156 = vtanh.pop %v115
  %v157 = vtanh.pop %v117
  %v158 = vxor.u32 %v115, 2147483648
  %v159 = vxor.u32 %v117, 2147483648
  %v160 = vmul.f32 %v158, 1.442695
  %v161 = vpow.pop %v160
  %v162 = vmul.f32 %v159, 1.442695
  %v163 = vpow.pop %v162
  %v164 = vadd.f32 %v161, 1.0
  %v165 = vadd.f32 %v163, 1.0
  %v166 = vrcp.pop %v164
  %v167 = vmul.f32 %v164, %v166
  %v168 = vsub.f32 1.0, %v167
  %v169 = vmul.f32 %v166, %v168
  %v170 = vadd.f32 %v166, %v169
  %vm171 = vweird.f32 %v164
  %vm172 = vweird.f32 %v166
  %vm173 = vmor %vm171, %vm172
  %v174 = vsel %vm173, %v166, %v170
  %v175 = vand.u32 2147483647, %v164
  %vm176 = vcmp.eq.f32.partialorder %v175, 8.507059e+37
  %v177 = vand.u32 %v164, 2147483648
  %v178 = vor.u32 1.1754944e-38, %v177
  %v179 = vsel %vm176, %v178, %v174
  %v180 = vmul.f32 1.0, %v179
  %v181 = vrcp.pop %v165
  %v182 = vmul.f32 %v165, %v181
  %v183 = vsub.f32 1.0, %v182
  %v184 = vmul.f32 %v181, %v183
  %v185 = vadd.f32 %v181, %v184
  %vm186 = vweird.f32 %v165
  %vm187 = vweird.f32 %v181
  %vm188 = vmor %vm186, %vm187
  %v189 = vsel %vm188, %v181, %v185
  %v190 = vand.u32 2147483647, %v165
  %vm191 = vcmp.eq.f32.partialorder %v190, 8.507059e+37
  %v192 = vand.u32 %v165, 2147483648
  %v193 = vor.u32 1.1754944e-38, %v192
  %v194 = vsel %vm191, %v193, %v189
  %v195 = vmul.f32 1.0, %v194
  %v196 = vld [vmem:[#allocation3] sm:$0xff]
  %v197 = vld [vmem:[#allocation3 + $0x8] sm:$0xf]
  %200 = vrot.lane.b32.xlu0 %v196, 64
  %v201 = vpop.permute.xlu0 %200
  %202 = vrot.lane.b32.xlu0 %v197, 64
  %v203 = vpop.permute.xlu0 %202
  %v206 = vmul.f32 %v140, %v201
  %v207 = vmul.f32 %v155, %v203
  %v208 = vmul.f32 %v140, %v156
  %v209 = vmul.f32 %v155, %v157
  %212 = vrot.lane.b32.xlu0 %v208, 64
  %v213 = vpop.permute.xlu0 %212
  %214 = vrot.lane.b32.xlu0 %v209, 64
  %v215 = vpop.permute.xlu0 %214
  %v218 = vadd.f32 %v206, %v213
  %v219 = vadd.f32 %v207, %v215
  %v220 = vtanh.pop %v218
  %v221 = vtanh.pop %v219
  %v222 = vmul.f32 %v180, %v220
  %v223 = vmul.f32 %v195, %v221
  %226 = vrot.lane.b32.xlu0 %v218, 64
  %v227 = vpop.permute.xlu0 %226
  %228 = vrot.lane.b32.xlu0 %v219, 64
  %v229 = vpop.permute.xlu0 %228
  %232 = vst.msk [vmem:[#allocation3] sm:$0xff] %vm17, %v227
  %233 = vst.msk [vmem:[#allocation3 + $0x8] sm:$0xf] %vm19, %v229
  %236 = vrot.lane.b32.xlu0 %v222, 64
  %v237 = vpop.permute.xlu0 %236
  %238 = vrot.lane.b32.xlu0 %v223, 64
  %v239 = vpop.permute.xlu0 %238
  %242 = vst.msk [vmem:[#allocation2] sm:$0xff] %vm17, %v237
  %243 = vst.msk [vmem:[#allocation2 + $0x8] sm:$0xf] %vm19, %v239
  %vm244 = vcmask 261120
  %245 = vst.msk [vmem:[%s3] sm:$0xff] %vm244, %v237
  %vm246 = vcmask 257024
  %247 = vst.msk [vmem:[%s3 + $0x8] sm:$0xf] %vm246, %v239
  %248 = vrot.lane.b32.xlu0 %v222, 32
  %v249 = vpop.permute.xlu0 %248
  %250 = vrot.lane.b32.xlu0 %v223, 32
  %v251 = vpop.permute.xlu0 %250
  %s254 = scalar_lea.vmem %s4, 112
  %255 = vst.msk [vmem:[%s254] sm:$0xff] %vm244, %v249
  %256 = vst.msk [vmem:[%s254 + $0x8] sm:$0xf] %vm246, %v251
  %s257 = scalar_lea.vmem %s0, 32
  %v258 = vld [vmem:[%s257] sm:$0xff]
  %v259 = vld [vmem:[%s257 + $0x8] sm:$0xff]
  %v260 = vld [vmem:[%s257 + $0x10] sm:$0xf]
  %v261 = vld [vmem:[%s257 + $0x18] sm:$0xf]
  %v262 = vmul.f32 %v53, %v258
  %v263 = vmul.f32 %v54, %v259
  %v264 = vmul.f32 %v53, %v260
  %v265 = vmul.f32 %v54, %v261
  %s266 = scalar_lea.vmem %s0, 192
  %v267 = vld [vmem:[%s266] sm:$0xff]
  %v268 = vld [vmem:[%s266 + $0x8] sm:$0xff]
  %v269 = vld [vmem:[%s266 + $0x10] sm:$0xf]
  %v270 = vld [vmem:[%s266 + $0x18] sm:$0xf]
  %v271 = vmul.f32 %v68, %v267
  %v272 = vmul.f32 %v69, %v268
  %v273 = vmul.f32 %v68, %v269
  %v274 = vmul.f32 %v69, %v270
  %v275 = vadd.f32 %v262, %v271
  %v276 = vadd.f32 %v263, %v272
  %v277 = vadd.f32 %v264, %v273
  %v278 = vadd.f32 %v265, %v274
  %v279 = vld [vmem:[#allocation2] sm:$0xff]
  %v280 = vld [vmem:[#allocation2 + $0x8] sm:$0xf]
  %v281 = vpack.c.bf16 %v280, %v279
  %v283 = vsel %vm17, %v281, 0
  %285 = vmatpush.bf16.msra.mxu0 0
  %286 = vmatpush.bf16.msra.mxu0 0
  %287 = vmatpush.bf16.msra.mxu0 0
  %288 = vmatpush.bf16.msra.mxu0 0
  %289 = vmatpush.bf16.msra.mxu0 %v46
  %290 = vmatpush.bf16.msra.mxu0 %v44
  %291 = vmatpush.bf16.msra.mxu0 %v42
  %292 = vmatpush.bf16.msra.mxu0 %v40
  %293 = vmatmul.bf16.gmra.mxu0 %v283
  %v294 = vpop.f32.mrf.mxu0
  %v295 = vadd.f32 0.0, %v294
  %v296 = vpop.f32.mrf.mxu0
  %v297 = vadd.f32 0.0, %v296
  %298 = vdwg.mxu0
  %299 = vmatpush.bf16.msra.mxu0 0
  %300 = vmatpush.bf16.msra.mxu0 0
  %301 = vmatpush.bf16.msra.mxu0 0
  %302 = vmatpush.bf16.msra.mxu0 0
  %303 = vmatpush.bf16.msra.mxu0 %v47
  %304 = vmatpush.bf16.msra.mxu0 %v45
  %305 = vmatpush.bf16.msra.mxu0 %v43
  %306 = vmatpush.bf16.msra.mxu0 %v41
  %307 = vmatmul.bf16.gmra.mxu0 %v283
  %v308 = vpop.f32.mrf.mxu0
  %v309 = vadd.f32 0.0, %v308
  %v310 = vpop.f32.mrf.mxu0
  %v311 = vadd.f32 0.0, %v310
  %312 = vdwg.mxu0
  %v313 = vadd.f32 %v275, %v295
  %v314 = vadd.f32 %v276, %v309
  %v315 = vadd.f32 %v277, %v297
  %v316 = vadd.f32 %v278, %v311
  %v317 = vxor.u32 %v313, 2147483648
  %v318 = vxor.u32 %v315, 2147483648
  %v319 = vmul.f32 %v317, 1.442695
  %v320 = vpow.pop %v319
  %v321 = vmul.f32 %v318, 1.442695
  %v322 = vpow.pop %v321
  %v323 = vadd.f32 %v320, 1.0
  %v324 = vadd.f32 %v322, 1.0
  %v325 = vrcp.pop %v323
  %v326 = vmul.f32 %v323, %v325
  %v327 = vsub.f32 1.0, %v326
  %v328 = vmul.f32 %v325, %v327
  %v329 = vadd.f32 %v325, %v328
  %vm330 = vweird.f32 %v323
  %vm331 = vweird.f32 %v325
  %vm332 = vmor %vm330, %vm331
  %v333 = vsel %vm332, %v325, %v329
  %v334 = vand.u32 2147483647, %v323
  %vm335 = vcmp.eq.f32.partialorder %v334, 8.507059e+37
  %v336 = vand.u32 %v323, 2147483648
  %v337 = vor.u32 1.1754944e-38, %v336
  %v338 = vsel %vm335, %v337, %v333
  %v339 = vmul.f32 1.0, %v338
  %v340 = vrcp.pop %v324
  %v341 = vmul.f32 %v324, %v340
  %v342 = vsub.f32 1.0, %v341
  %v343 = vmul.f32 %v340, %v342
  %v344 = vadd.f32 %v340, %v343
  %vm345 = vweird.f32 %v324
  %vm346 = vweird.f32 %v340
  %vm347 = vmor %vm345, %vm346
  %v348 = vsel %vm347, %v340, %v344
  %v349 = vand.u32 2147483647, %v324
  %vm350 = vcmp.eq.f32.partialorder %v349, 8.507059e+37
  %v351 = vand.u32 %v324, 2147483648
  %v352 = vor.u32 1.1754944e-38, %v351
  %v353 = vsel %vm350, %v352, %v348
  %v354 = vmul.f32 1.0, %v353
  %v355 = vtanh.pop %v314
  %v356 = vtanh.pop %v316
  %v357 = vxor.u32 %v314, 2147483648
  %v358 = vxor.u32 %v316, 2147483648
  %v359 = vmul.f32 %v357, 1.442695
  %v360 = vpow.pop %v359
  %v361 = vmul.f32 %v358, 1.442695
  %v362 = vpow.pop %v361
  %v363 = vadd.f32 %v360, 1.0
  %v364 = vadd.f32 %v362, 1.0
  %v365 = vrcp.pop %v363
  %v366 = vmul.f32 %v363, %v365
  %v367 = vsub.f32 1.0, %v366
  %v368 = vmul.f32 %v365, %v367
  %v369 = vadd.f32 %v365, %v368
  %vm370 = vweird.f32 %v363
  %vm371 = vweird.f32 %v365
  %vm372 = vmor %vm370, %vm371
  %v373 = vsel %vm372, %v365, %v369
  %v374 = vand.u32 2147483647, %v363
  %vm375 = vcmp.eq.f32.partialorder %v374, 8.507059e+37
  %v376 = vand.u32 %v363, 2147483648
  %v377 = vor.u32 1.1754944e-38, %v376
  %v378 = vsel %vm375, %v377, %v373
  %v379 = vmul.f32 1.0, %v378
  %v380 = vrcp.pop %v364
  %v381 = vmul.f32 %v364, %v380
  %v382 = vsub.f32 1.0, %v381
  %v383 = vmul.f32 %v380, %v382
  %v384 = vadd.f32 %v380, %v383
  %vm385 = vweird.f32 %v364
  %vm386 = vweird.f32 %v380
  %vm387 = vmor %vm385, %vm386
  %v388 = vsel %vm387, %v380, %v384
  %v389 = vand.u32 2147483647, %v364
  %vm390 = vcmp.eq.f32.partialorder %v389, 8.507059e+37
  %v391 = vand.u32 %v364, 2147483648
  %v392 = vor.u32 1.1754944e-38, %v391
  %v393 = vsel %vm390, %v392, %v388
  %v394 = vmul.f32 1.0, %v393
  %v395 = vld [vmem:[#allocation3] sm:$0xff]
  %v396 = vld [vmem:[#allocation3 + $0x8] sm:$0xf]
  %399 = vrot.lane.b32.xlu0 %v395, 64
  %v400 = vpop.permute.xlu0 %399
  %401 = vrot.lane.b32.xlu0 %v396, 64
  %v402 = vpop.permute.xlu0 %401
  %v405 = vmul.f32 %v339, %v400
  %v406 = vmul.f32 %v354, %v402
  %v407 = vmul.f32 %v339, %v355
  %v408 = vmul.f32 %v354, %v356
  %411 = vrot.lane.b32.xlu0 %v407, 64
  %v412 = vpop.permute.xlu0 %411
  %413 = vrot.lane.b32.xlu0 %v408, 64
  %v414 = vpop.permute.xlu0 %413
  %v417 = vadd.f32 %v405, %v412
  %v418 = vadd.f32 %v406, %v414
  %v419 = vtanh.pop %v417
  %v420 = vtanh.pop %v418
  %v421 = vmul.f32 %v379, %v419
  %v422 = vmul.f32 %v394, %v420
  %425 = vrot.lane.b32.xlu0 %v417, 64
  %v426 = vpop.permute.xlu0 %425
  %427 = vrot.lane.b32.xlu0 %v418, 64
  %v428 = vpop.permute.xlu0 %427
  %431 = vst.msk [vmem:[#allocation3] sm:$0xff] %vm17, %v426
  %432 = vst.msk [vmem:[#allocation3 + $0x8] sm:$0xf] %vm19, %v428
  %435 = vrot.lane.b32.xlu0 %v421, 64
  %v436 = vpop.permute.xlu0 %435
  %437 = vrot.lane.b32.xlu0 %v422, 64
  %v438 = vpop.permute.xlu0 %437
  %441 = vst.msk [vmem:[#allocation2] sm:$0xff] %vm17, %v436
  %442 = vst.msk [vmem:[#allocation2 + $0x8] sm:$0xf] %vm19, %v438
  %s443 = scalar_lea.vmem %s3, 16
  %444 = vst.msk [vmem:[%s443] sm:$0xff] %vm244, %v436
  %445 = vst.msk [vmem:[%s443 + $0x8] sm:$0xf] %vm246, %v438
  %446 = vrot.lane.b32.xlu0 %v421, 32
  %v447 = vpop.permute.xlu0 %446
  %448 = vrot.lane.b32.xlu0 %v422, 32
  %v449 = vpop.permute.xlu0 %448
  %s452 = scalar_lea.vmem %s4, 96
  %453 = vst.msk [vmem:[%s452] sm:$0xff] %vm244, %v447
  %454 = vst.msk [vmem:[%s452 + $0x8] sm:$0xf] %vm246, %v449
  %s455 = scalar_lea.vmem %s0, 64
  %v456 = vld [vmem:[%s455] sm:$0xff]
  %v457 = vld [vmem:[%s455 + $0x8] sm:$0xff]
  %v458 = vld [vmem:[%s455 + $0x10] sm:$0xf]
  %v459 = vld [vmem:[%s455 + $0x18] sm:$0xf]
  %v460 = vmul.f32 %v53, %v456
  %v461 = vmul.f32 %v54, %v457
  %v462 = vmul.f32 %v53, %v458
  %v463 = vmul.f32 %v54, %v459
  %s464 = scalar_lea.vmem %s0, 160
  %v465 = vld [vmem:[%s464] sm:$0xff]
  %v466 = vld [vmem:[%s464 + $0x8] sm:$0xff]
  %v467 = vld [vmem:[%s464 + $0x10] sm:$0xf]
  %v468 = vld [vmem:[%s464 + $0x18] sm:$0xf]
  %v469 = vmul.f32 %v68, %v465
  %v470 = vmul.f32 %v69, %v466
  %v471 = vmul.f32 %v68, %v467
  %v472 = vmul.f32 %v69, %v468
  %v473 = vadd.f32 %v460, %v469
  %v474 = vadd.f32 %v461, %v470
  %v475 = vadd.f32 %v462, %v471
  %v476 = vadd.f32 %v463, %v472
  %v477 = vld [vmem:[#allocation2] sm:$0xff]
  %v478 = vld [vmem:[#allocation2 + $0x8] sm:$0xf]
  %v479 = vpack.c.bf16 %v478, %v477
  %v481 = vsel %vm17, %v479, 0
  %483 = vmatpush.bf16.msra.mxu0 0
  %484 = vmatpush.bf16.msra.mxu0 0
  %485 = vmatpush.bf16.msra.mxu0 0
  %486 = vmatpush.bf16.msra.mxu0 0
  %487 = vmatpush.bf16.msra.mxu0 %v46
  %488 = vmatpush.bf16.msra.mxu0 %v44
  %489 = vmatpush.bf16.msra.mxu0 %v42
  %490 = vmatpush.bf16.msra.mxu0 %v40
  %491 = vmatmul.bf16.gmra.mxu0 %v481
  %v492 = vpop.f32.mrf.mxu0
  %v493 = vadd.f32 0.0, %v492
  %v494 = vpop.f32.mrf.mxu0
  %v495 = vadd.f32 0.0, %v494
  %496 = vdwg.mxu0
  %497 = vmatpush.bf16.msra.mxu0 0
  %498 = vmatpush.bf16.msra.mxu0 0
  %499 = vmatpush.bf16.msra.mxu0 0
  %500 = vmatpush.bf16.msra.mxu0 0
  %501 = vmatpush.bf16.msra.mxu0 %v47
  %502 = vmatpush.bf16.msra.mxu0 %v45
  %503 = vmatpush.bf16.msra.mxu0 %v43
  %504 = vmatpush.bf16.msra.mxu0 %v41
  %505 = vmatmul.bf16.gmra.mxu0 %v481
  %v506 = vpop.f32.mrf.mxu0
  %v507 = vadd.f32 0.0, %v506
  %v508 = vpop.f32.mrf.mxu0
  %v509 = vadd.f32 0.0, %v508
  %510 = vdwg.mxu0
  %v511 = vadd.f32 %v473, %v493
  %v512 = vadd.f32 %v474, %v507
  %v513 = vadd.f32 %v475, %v495
  %v514 = vadd.f32 %v476, %v509
  %v515 = vxor.u32 %v511, 2147483648
  %v516 = vxor.u32 %v513, 2147483648
  %v517 = vmul.f32 %v515, 1.442695
  %v518 = vpow.pop %v517
  %v519 = vmul.f32 %v516, 1.442695
  %v520 = vpow.pop %v519
  %v521 = vadd.f32 %v518, 1.0
  %v522 = vadd.f32 %v520, 1.0
  %v523 = vrcp.pop %v521
  %v524 = vmul.f32 %v521, %v523
  %v525 = vsub.f32 1.0, %v524
  %v526 = vmul.f32 %v523, %v525
  %v527 = vadd.f32 %v523, %v526
  %vm528 = vweird.f32 %v521
  %vm529 = vweird.f32 %v523
  %vm530 = vmor %vm528, %vm529
  %v531 = vsel %vm530, %v523, %v527
  %v532 = vand.u32 2147483647, %v521
  %vm533 = vcmp.eq.f32.partialorder %v532, 8.507059e+37
  %v534 = vand.u32 %v521, 2147483648
  %v535 = vor.u32 1.1754944e-38, %v534
  %v536 = vsel %vm533, %v535, %v531
  %v537 = vmul.f32 1.0, %v536
  %v538 = vrcp.pop %v522
  %v539 = vmul.f32 %v522, %v538
  %v540 = vsub.f32 1.0, %v539
  %v541 = vmul.f32 %v538, %v540
  %v542 = vadd.f32 %v538, %v541
  %vm543 = vweird.f32 %v522
  %vm544 = vweird.f32 %v538
  %vm545 = vmor %vm543, %vm544
  %v546 = vsel %vm545, %v538, %v542
  %v547 = vand.u32 2147483647, %v522
  %vm548 = vcmp.eq.f32.partialorder %v547, 8.507059e+37
  %v549 = vand.u32 %v522, 2147483648
  %v550 = vor.u32 1.1754944e-38, %v549
  %v551 = vsel %vm548, %v550, %v546
  %v552 = vmul.f32 1.0, %v551
  %v553 = vtanh.pop %v512
  %v554 = vtanh.pop %v514
  %v555 = vxor.u32 %v512, 2147483648
  %v556 = vxor.u32 %v514, 2147483648
  %v557 = vmul.f32 %v555, 1.442695
  %v558 = vpow.pop %v557
  %v559 = vmul.f32 %v556, 1.442695
  %v560 = vpow.pop %v559
  %v561 = vadd.f32 %v558, 1.0
  %v562 = vadd.f32 %v560, 1.0
  %v563 = vrcp.pop %v561
  %v564 = vmul.f32 %v561, %v563
  %v565 = vsub.f32 1.0, %v564
  %v566 = vmul.f32 %v563, %v565
  %v567 = vadd.f32 %v563, %v566
  %vm568 = vweird.f32 %v561
  %vm569 = vweird.f32 %v563
  %vm570 = vmor %vm568, %vm569
  %v571 = vsel %vm570, %v563, %v567
  %v572 = vand.u32 2147483647, %v561
  %vm573 = vcmp.eq.f32.partialorder %v572, 8.507059e+37
  %v574 = vand.u32 %v561, 2147483648
  %v575 = vor.u32 1.1754944e-38, %v574
  %v576 = vsel %vm573, %v575, %v571
  %v577 = vmul.f32 1.0, %v576
  %v578 = vrcp.pop %v562
  %v579 = vmul.f32 %v562, %v578
  %v580 = vsub.f32 1.0, %v579
  %v581 = vmul.f32 %v578, %v580
  %v582 = vadd.f32 %v578, %v581
  %vm583 = vweird.f32 %v562
  %vm584 = vweird.f32 %v578
  %vm585 = vmor %vm583, %vm584
  %v586 = vsel %vm585, %v578, %v582
  %v587 = vand.u32 2147483647, %v562
  %vm588 = vcmp.eq.f32.partialorder %v587, 8.507059e+37
  %v589 = vand.u32 %v562, 2147483648
  %v590 = vor.u32 1.1754944e-38, %v589
  %v591 = vsel %vm588, %v590, %v586
  %v592 = vmul.f32 1.0, %v591
  %v593 = vld [vmem:[#allocation3] sm:$0xff]
  %v594 = vld [vmem:[#allocation3 + $0x8] sm:$0xf]
  %597 = vrot.lane.b32.xlu0 %v593, 64
  %v598 = vpop.permute.xlu0 %597
  %599 = vrot.lane.b32.xlu0 %v594, 64
  %v600 = vpop.permute.xlu0 %599
  %v603 = vmul.f32 %v537, %v598
  %v604 = vmul.f32 %v552, %v600
  %v605 = vmul.f32 %v537, %v553
  %v606 = vmul.f32 %v552, %v554
  %609 = vrot.lane.b32.xlu0 %v605, 64
  %v610 = vpop.permute.xlu0 %609
  %611 = vrot.lane.b32.xlu0 %v606, 64
  %v612 = vpop.permute.xlu0 %611
  %v615 = vadd.f32 %v603, %v610
  %v616 = vadd.f32 %v604, %v612
  %v617 = vtanh.pop %v615
  %v618 = vtanh.pop %v616
  %v619 = vmul.f32 %v577, %v617
  %v620 = vmul.f32 %v592, %v618
  %623 = vrot.lane.b32.xlu0 %v615, 64
  %v624 = vpop.permute.xlu0 %623
  %625 = vrot.lane.b32.xlu0 %v616, 64
  %v626 = vpop.permute.xlu0 %625
  %629 = vst.msk [vmem:[#allocation3] sm:$0xff] %vm17, %v624
  %630 = vst.msk [vmem:[#allocation3 + $0x8] sm:$0xf] %vm19, %v626
  %633 = vrot.lane.b32.xlu0 %v619, 64
  %v634 = vpop.permute.xlu0 %633
  %635 = vrot.lane.b32.xlu0 %v620, 64
  %v636 = vpop.permute.xlu0 %635
  %639 = vst.msk [vmem:[#allocation2] sm:$0xff] %vm17, %v634
  %640 = vst.msk [vmem:[#allocation2 + $0x8] sm:$0xf] %vm19, %v636
  %s641 = scalar_lea.vmem %s3, 32
  %642 = vst.msk [vmem:[%s641] sm:$0xff] %vm244, %v634
  %643 = vst.msk [vmem:[%s641 + $0x8] sm:$0xf] %vm246, %v636
  %644 = vrot.lane.b32.xlu0 %v619, 32
  %v645 = vpop.permute.xlu0 %644
  %646 = vrot.lane.b32.xlu0 %v620, 32
  %v647 = vpop.permute.xlu0 %646
  %s650 = scalar_lea.vmem %s4, 80
  %651 = vst.msk [vmem:[%s650] sm:$0xff] %vm244, %v645
  %652 = vst.msk [vmem:[%s650 + $0x8] sm:$0xf] %vm246, %v647
  %s653 = scalar_lea.vmem %s0, 96
  %v654 = vld [vmem:[%s653] sm:$0xff]
  %v655 = vld [vmem:[%s653 + $0x8] sm:$0xff]
  %v656 = vld [vmem:[%s653 + $0x10] sm:$0xf]
  %v657 = vld [vmem:[%s653 + $0x18] sm:$0xf]
  %v658 = vmul.f32 %v53, %v654
  %v659 = vmul.f32 %v54, %v655
  %v660 = vmul.f32 %v53, %v656
  %v661 = vmul.f32 %v54, %v657
  %s662 = scalar_lea.vmem %s0, 128
  %v663 = vld [vmem:[%s662] sm:$0xff]
  %v664 = vld [vmem:[%s662 + $0x8] sm:$0xff]
  %v665 = vld [vmem:[%s662 + $0x10] sm:$0xf]
  %v666 = vld [vmem:[%s662 + $0x18] sm:$0xf]
  %v667 = vmul.f32 %v68, %v663
  %v668 = vmul.f32 %v69, %v664
  %v669 = vmul.f32 %v68, %v665
  %v670 = vmul.f32 %v69, %v666
  %v671 = vadd.f32 %v658, %v667
  %v672 = vadd.f32 %v659, %v668
  %v673 = vadd.f32 %v660, %v669
  %v674 = vadd.f32 %v661, %v670
  %v675 = vld [vmem:[#allocation2] sm:$0xff]
  %v676 = vld [vmem:[#allocation2 + $0x8] sm:$0xf]
  %v677 = vpack.c.bf16 %v676, %v675
  %v679 = vsel %vm17, %v677, 0
  %681 = vmatpush.bf16.msra.mxu0 0
  %682 = vmatpush.bf16.msra.mxu0 0
  %683 = vmatpush.bf16.msra.mxu0 0
  %684 = vmatpush.bf16.msra.mxu0 0
  %685 = vmatpush.bf16.msra.mxu0 %v46
  %686 = vmatpush.bf16.msra.mxu0 %v44
  %687 = vmatpush.bf16.msra.mxu0 %v42
  %688 = vmatpush.bf16.msra.mxu0 %v40
  %689 = vmatmul.bf16.gmra.mxu0 %v679
  %v690 = vpop.f32.mrf.mxu0
  %v691 = vadd.f32 0.0, %v690
  %v692 = vpop.f32.mrf.mxu0
  %v693 = vadd.f32 0.0, %v692
  %694 = vdwg.mxu0
  %695 = vmatpush.bf16.msra.mxu0 0
  %696 = vmatpush.bf16.msra.mxu0 0
  %697 = vmatpush.bf16.msra.mxu0 0
  %698 = vmatpush.bf16.msra.mxu0 0
  %699 = vmatpush.bf16.msra.mxu0 %v47
  %700 = vmatpush.bf16.msra.mxu0 %v45
  %701 = vmatpush.bf16.msra.mxu0 %v43
  %702 = vmatpush.bf16.msra.mxu0 %v41
  %703 = vmatmul.bf16.gmra.mxu0 %v679
  %v704 = vpop.f32.mrf.mxu0
  %v705 = vadd.f32 0.0, %v704
  %v706 = vpop.f32.mrf.mxu0
  %v707 = vadd.f32 0.0, %v706
  %708 = vdwg.mxu0
  %v709 = vadd.f32 %v671, %v691
  %v710 = vadd.f32 %v672, %v705
  %v711 = vadd.f32 %v673, %v693
  %v712 = vadd.f32 %v674, %v707
  %v713 = vxor.u32 %v709, 2147483648
  %v714 = vxor.u32 %v711, 2147483648
  %v715 = vmul.f32 %v713, 1.442695
  %v716 = vpow.pop %v715
  %v717 = vmul.f32 %v714, 1.442695
  %v718 = vpow.pop %v717
  %v719 = vadd.f32 %v716, 1.0
  %v720 = vadd.f32 %v718, 1.0
  %v721 = vrcp.pop %v719
  %v722 = vmul.f32 %v719, %v721
  %v723 = vsub.f32 1.0, %v722
  %v724 = vmul.f32 %v721, %v723
  %v725 = vadd.f32 %v721, %v724
  %vm726 = vweird.f32 %v719
  %vm727 = vweird.f32 %v721
  %vm728 = vmor %vm726, %vm727
  %v729 = vsel %vm728, %v721, %v725
  %v730 = vand.u32 2147483647, %v719
  %vm731 = vcmp.eq.f32.partialorder %v730, 8.507059e+37
  %v732 = vand.u32 %v719, 2147483648
  %v733 = vor.u32 1.1754944e-38, %v732
  %v734 = vsel %vm731, %v733, %v729
  %v735 = vmul.f32 1.0, %v734
  %v736 = vrcp.pop %v720
  %v737 = vmul.f32 %v720, %v736
  %v738 = vsub.f32 1.0, %v737
  %v739 = vmul.f32 %v736, %v738
  %v740 = vadd.f32 %v736, %v739
  %vm741 = vweird.f32 %v720
  %vm742 = vweird.f32 %v736
  %vm743 = vmor %vm741, %vm742
  %v744 = vsel %vm743, %v736, %v740
  %v745 = vand.u32 2147483647, %v720
  %vm746 = vcmp.eq.f32.partialorder %v745, 8.507059e+37
  %v747 = vand.u32 %v720, 2147483648
  %v748 = vor.u32 1.1754944e-38, %v747
  %v749 = vsel %vm746, %v748, %v744
  %v750 = vmul.f32 1.0, %v749
  %v751 = vtanh.pop %v710
  %v752 = vtanh.pop %v712
  %v753 = vxor.u32 %v710, 2147483648
  %v754 = vxor.u32 %v712, 2147483648
  %v755 = vmul.f32 %v753, 1.442695
  %v756 = vpow.pop %v755
  %v757 = vmul.f32 %v754, 1.442695
  %v758 = vpow.pop %v757
  %v759 = vadd.f32 %v756, 1.0
  %v760 = vadd.f32 %v758, 1.0
  %v761 = vrcp.pop %v759
  %v762 = vmul.f32 %v759, %v761
  %v763 = vsub.f32 1.0, %v762
  %v764 = vmul.f32 %v761, %v763
  %v765 = vadd.f32 %v761, %v764
  %vm766 = vweird.f32 %v759
  %vm767 = vweird.f32 %v761
  %vm768 = vmor %vm766, %vm767
  %v769 = vsel %vm768, %v761, %v765
  %v770 = vand.u32 2147483647, %v759
  %vm771 = vcmp.eq.f32.partialorder %v770, 8.507059e+37
  %v772 = vand.u32 %v759, 2147483648
  %v773 = vor.u32 1.1754944e-38, %v772
  %v774 = vsel %vm771, %v773, %v769
  %v775 = vmul.f32 1.0, %v774
  %v776 = vrcp.pop %v760
  %v777 = vmul.f32 %v760, %v776
  %v778 = vsub.f32 1.0, %v777
  %v779 = vmul.f32 %v776, %v778
  %v780 = vadd.f32 %v776, %v779
  %vm781 = vweird.f32 %v760
  %vm782 = vweird.f32 %v776
  %vm783 = vmor %vm781, %vm782
  %v784 = vsel %vm783, %v776, %v780
  %v785 = vand.u32 2147483647, %v760
  %vm786 = vcmp.eq.f32.partialorder %v785, 8.507059e+37
  %v787 = vand.u32 %v760, 2147483648
  %v788 = vor.u32 1.1754944e-38, %v787
  %v789 = vsel %vm786, %v788, %v784
  %v790 = vmul.f32 1.0, %v789
  %v791 = vld [vmem:[#allocation3] sm:$0xff]
  %v792 = vld [vmem:[#allocation3 + $0x8] sm:$0xf]
  %795 = vrot.lane.b32.xlu0 %v791, 64
  %v796 = vpop.permute.xlu0 %795
  %797 = vrot.lane.b32.xlu0 %v792, 64
  %v798 = vpop.permute.xlu0 %797
  %v801 = vmul.f32 %v735, %v796
  %v802 = vmul.f32 %v750, %v798
  %v803 = vmul.f32 %v735, %v751
  %v804 = vmul.f32 %v750, %v752
  %807 = vrot.lane.b32.xlu0 %v803, 64
  %v808 = vpop.permute.xlu0 %807
  %809 = vrot.lane.b32.xlu0 %v804, 64
  %v810 = vpop.permute.xlu0 %809
  %v813 = vadd.f32 %v801, %v808
  %v814 = vadd.f32 %v802, %v810
  %v815 = vtanh.pop %v813
  %v816 = vtanh.pop %v814
  %v817 = vmul.f32 %v775, %v815
  %v818 = vmul.f32 %v790, %v816
  %821 = vrot.lane.b32.xlu0 %v813, 64
  %v822 = vpop.permute.xlu0 %821
  %823 = vrot.lane.b32.xlu0 %v814, 64
  %v824 = vpop.permute.xlu0 %823
  %827 = vst.msk [vmem:[#allocation3] sm:$0xff] %vm17, %v822
  %828 = vst.msk [vmem:[#allocation3 + $0x8] sm:$0xf] %vm19, %v824
  %831 = vrot.lane.b32.xlu0 %v817, 64
  %v832 = vpop.permute.xlu0 %831
  %833 = vrot.lane.b32.xlu0 %v818, 64
  %v834 = vpop.permute.xlu0 %833
  %837 = vst.msk [vmem:[#allocation2] sm:$0xff] %vm17, %v832
  %838 = vst.msk [vmem:[#allocation2 + $0x8] sm:$0xf] %vm19, %v834
  %s839 = scalar_lea.vmem %s3, 48
  %840 = vst.msk [vmem:[%s839] sm:$0xff] %vm244, %v832
  %841 = vst.msk [vmem:[%s839 + $0x8] sm:$0xf] %vm246, %v834
  %842 = vrot.lane.b32.xlu0 %v817, 32
  %v843 = vpop.permute.xlu0 %842
  %844 = vrot.lane.b32.xlu0 %v818, 32
  %v845 = vpop.permute.xlu0 %844
  %s848 = scalar_lea.vmem %s4, 64
  %849 = vst.msk [vmem:[%s848] sm:$0xff] %vm244, %v843
  %850 = vst.msk [vmem:[%s848 + $0x8] sm:$0xf] %vm246, %v845
  %v851 = vld [vmem:[%s662] sm:$0xff]
  %v852 = vld [vmem:[%s662 + $0x8] sm:$0xff]
  %v853 = vld [vmem:[%s662 + $0x10] sm:$0xf]
  %v854 = vld [vmem:[%s662 + $0x18] sm:$0xf]
  %v855 = vmul.f32 %v53, %v851
  %v856 = vmul.f32 %v54, %v852
  %v857 = vmul.f32 %v53, %v853
  %v858 = vmul.f32 %v54, %v854
  %v859 = vld [vmem:[%s653] sm:$0xff]
  %v860 = vld [vmem:[%s653 + $0x8] sm:$0xff]
  %v861 = vld [vmem:[%s653 + $0x10] sm:$0xf]
  %v862 = vld [vmem:[%s653 + $0x18] sm:$0xf]
  %v863 = vmul.f32 %v68, %v859
  %v864 = vmul.f32 %v69, %v860
  %v865 = vmul.f32 %v68, %v861
  %v866 = vmul.f32 %v69, %v862
  %v867 = vadd.f32 %v855, %v863
  %v868 = vadd.f32 %v856, %v864
  %v869 = vadd.f32 %v857, %v865
  %v870 = vadd.f32 %v858, %v866
  %v871 = vld [vmem:[#allocation2] sm:$0xff]
  %v872 = vld [vmem:[#allocation2 + $0x8] sm:$0xf]
  %v873 = vpack.c.bf16 %v872, %v871
  %v875 = vsel %vm17, %v873, 0
  %877 = vmatpush.bf16.msra.mxu0 0
  %878 = vmatpush.bf16.msra.mxu0 0
  %879 = vmatpush.bf16.msra.mxu0 0
  %880 = vmatpush.bf16.msra.mxu0 0
  %881 = vmatpush.bf16.msra.mxu0 %v46
  %882 = vmatpush.bf16.msra.mxu0 %v44
  %883 = vmatpush.bf16.msra.mxu0 %v42
  %884 = vmatpush.bf16.msra.mxu0 %v40
  %885 = vmatmul.bf16.gmra.mxu0 %v875
  %v886 = vpop.f32.mrf.mxu0
  %v887 = vadd.f32 0.0, %v886
  %v888 = vpop.f32.mrf.mxu0
  %v889 = vadd.f32 0.0, %v888
  %890 = vdwg.mxu0
  %891 = vmatpush.bf16.msra.mxu0 0
  %892 = vmatpush.bf16.msra.mxu0 0
  %893 = vmatpush.bf16.msra.mxu0 0
  %894 = vmatpush.bf16.msra.mxu0 0
  %895 = vmatpush.bf16.msra.mxu0 %v47
  %896 = vmatpush.bf16.msra.mxu0 %v45
  %897 = vmatpush.bf16.msra.mxu0 %v43
  %898 = vmatpush.bf16.msra.mxu0 %v41
  %899 = vmatmul.bf16.gmra.mxu0 %v875
  %v900 = vpop.f32.mrf.mxu0
  %v901 = vadd.f32 0.0, %v900
  %v902 = vpop.f32.mrf.mxu0
  %v903 = vadd.f32 0.0, %v902
  %904 = vdwg.mxu0
  %v905 = vadd.f32 %v867, %v887
  %v906 = vadd.f32 %v868, %v901
  %v907 = vadd.f32 %v869, %v889
  %v908 = vadd.f32 %v870, %v903
  %v909 = vxor.u32 %v905, 2147483648
  %v910 = vxor.u32 %v907, 2147483648
  %v911 = vmul.f32 %v909, 1.442695
  %v912 = vpow.pop %v911
  %v913 = vmul.f32 %v910, 1.442695
  %v914 = vpow.pop %v913
  %v915 = vadd.f32 %v912, 1.0
  %v916 = vadd.f32 %v914, 1.0
  %v917 = vrcp.pop %v915
  %v918 = vmul.f32 %v915, %v917
  %v919 = vsub.f32 1.0, %v918
  %v920 = vmul.f32 %v917, %v919
  %v921 = vadd.f32 %v917, %v920
  %vm922 = vweird.f32 %v915
  %vm923 = vweird.f32 %v917
  %vm924 = vmor %vm922, %vm923
  %v925 = vsel %vm924, %v917, %v921
  %v926 = vand.u32 2147483647, %v915
  %vm927 = vcmp.eq.f32.partialorder %v926, 8.507059e+37
  %v928 = vand.u32 %v915, 2147483648
  %v929 = vor.u32 1.1754944e-38, %v928
  %v930 = vsel %vm927, %v929, %v925
  %v931 = vmul.f32 1.0, %v930
  %v932 = vrcp.pop %v916
  %v933 = vmul.f32 %v916, %v932
  %v934 = vsub.f32 1.0, %v933
  %v935 = vmul.f32 %v932, %v934
  %v936 = vadd.f32 %v932, %v935
  %vm937 = vweird.f32 %v916
  %vm938 = vweird.f32 %v932
  %vm939 = vmor %vm937, %vm938
  %v940 = vsel %vm939, %v932, %v936
  %v941 = vand.u32 2147483647, %v916
  %vm942 = vcmp.eq.f32.partialorder %v941, 8.507059e+37
  %v943 = vand.u32 %v916, 2147483648
  %v944 = vor.u32 1.1754944e-38, %v943
  %v945 = vsel %vm942, %v944, %v940
  %v946 = vmul.f32 1.0, %v945
  %v947 = vtanh.pop %v906
  %v948 = vtanh.pop %v908
  %v949 = vxor.u32 %v906, 2147483648
  %v950 = vxor.u32 %v908, 2147483648
  %v951 = vmul.f32 %v949, 1.442695
  %v952 = vpow.pop %v951
  %v953 = vmul.f32 %v950, 1.442695
  %v954 = vpow.pop %v953
  %v955 = vadd.f32 %v952, 1.0
  %v956 = vadd.f32 %v954, 1.0
  %v957 = vrcp.pop %v955
  %v958 = vmul.f32 %v955, %v957
  %v959 = vsub.f32 1.0, %v958
  %v960 = vmul.f32 %v957, %v959
  %v961 = vadd.f32 %v957, %v960
  %vm962 = vweird.f32 %v955
  %vm963 = vweird.f32 %v957
  %vm964 = vmor %vm962, %vm963
  %v965 = vsel %vm964, %v957, %v961
  %v966 = vand.u32 2147483647, %v955
  %vm967 = vcmp.eq.f32.partialorder %v966, 8.507059e+37
  %v968 = vand.u32 %v955, 2147483648
  %v969 = vor.u32 1.1754944e-38, %v968
  %v970 = vsel %vm967, %v969, %v965
  %v971 = vmul.f32 1.0, %v970
  %v972 = vrcp.pop %v956
  %v973 = vmul.f32 %v956, %v972
  %v974 = vsub.f32 1.0, %v973
  %v975 = vmul.f32 %v972, %v974
  %v976 = vadd.f32 %v972, %v975
  %vm977 = vweird.f32 %v956
  %vm978 = vweird.f32 %v972
  %vm979 = vmor %vm977, %vm978
  %v980 = vsel %vm979, %v972, %v976
  %v981 = vand.u32 2147483647, %v956
  %vm982 = vcmp.eq.f32.partialorder %v981, 8.507059e+37
  %v983 = vand.u32 %v956, 2147483648
  %v984 = vor.u32 1.1754944e-38, %v983
  %v985 = vsel %vm982, %v984, %v980
  %v986 = vmul.f32 1.0, %v985
  %v987 = vld [vmem:[#allocation3] sm:$0xff]
  %v988 = vld [vmem:[#allocation3 + $0x8] sm:$0xf]
  %991 = vrot.lane.b32.xlu0 %v987, 64
  %v992 = vpop.permute.xlu0 %991
  %993 = vrot.lane.b32.xlu0 %v988, 64
  %v994 = vpop.permute.xlu0 %993
  %v997 = vmul.f32 %v931, %v992
  %v998 = vmul.f32 %v946, %v994
  %v999 = vmul.f32 %v931, %v947
  %v1000 = vmul.f32 %v946, %v948
  %1003 = vrot.lane.b32.xlu0 %v999, 64
  %v1004 = vpop.permute.xlu0 %1003
  %1005 = vrot.lane.b32.xlu0 %v1000, 64
  %v1006 = vpop.permute.xlu0 %1005
  %v1009 = vadd.f32 %v997, %v1004
  %v1010 = vadd.f32 %v998, %v1006
  %v1011 = vtanh.pop %v1009
  %v1012 = vtanh.pop %v1010
  %v1013 = vmul.f32 %v971, %v1011
  %v1014 = vmul.f32 %v986, %v1012
  %1017 = vrot.lane.b32.xlu0 %v1009, 64
  %v1018 = vpop.permute.xlu0 %1017
  %1019 = vrot.lane.b32.xlu0 %v1010, 64
  %v1020 = vpop.permute.xlu0 %1019
  %1023 = vst.msk [vmem:[#allocation3] sm:$0xff] %vm17, %v1018
  %1024 = vst.msk [vmem:[#allocation3 + $0x8] sm:$0xf] %vm19, %v1020
  %1027 = vrot.lane.b32.xlu0 %v1013, 64
  %v1028 = vpop.permute.xlu0 %1027
  %1029 = vrot.lane.b32.xlu0 %v1014, 64
  %v1030 = vpop.permute.xlu0 %1029
  %1033 = vst.msk [vmem:[#allocation2] sm:$0xff] %vm17, %v1028
  %1034 = vst.msk [vmem:[#allocation2 + $0x8] sm:$0xf] %vm19, %v1030
  %s1035 = scalar_lea.vmem %s3, 64
  %1036 = vst.msk [vmem:[%s1035] sm:$0xff] %vm244, %v1028
  %1037 = vst.msk [vmem:[%s1035 + $0x8] sm:$0xf] %vm246, %v1030
  %1038 = vrot.lane.b32.xlu0 %v1013, 32
  %v1039 = vpop.permute.xlu0 %1038
  %1040 = vrot.lane.b32.xlu0 %v1014, 32
  %v1041 = vpop.permute.xlu0 %1040
  %s1044 = scalar_lea.vmem %s4, 48
  %1045 = vst.msk [vmem:[%s1044] sm:$0xff] %vm244, %v1039
  %1046 = vst.msk [vmem:[%s1044 + $0x8] sm:$0xf] %vm246, %v1041
  %v1047 = vld [vmem:[%s464] sm:$0xff]
  %v1048 = vld [vmem:[%s464 + $0x8] sm:$0xff]
  %v1049 = vld [vmem:[%s464 + $0x10] sm:$0xf]
  %v1050 = vld [vmem:[%s464 + $0x18] sm:$0xf]
  %v1051 = vmul.f32 %v53, %v1047
  %v1052 = vmul.f32 %v54, %v1048
  %v1053 = vmul.f32 %v53, %v1049
  %v1054 = vmul.f32 %v54, %v1050
  %v1055 = vld [vmem:[%s455] sm:$0xff]
  %v1056 = vld [vmem:[%s455 + $0x8] sm:$0xff]
  %v1057 = vld [vmem:[%s455 + $0x10] sm:$0xf]
  %v1058 = vld [vmem:[%s455 + $0x18] sm:$0xf]
  %v1059 = vmul.f32 %v68, %v1055
  %v1060 = vmul.f32 %v69, %v1056
  %v1061 = vmul.f32 %v68, %v1057
  %v1062 = vmul.f32 %v69, %v1058
  %v1063 = vadd.f32 %v1051, %v1059
  %v1064 = vadd.f32 %v1052, %v1060
  %v1065 = vadd.f32 %v1053, %v1061
  %v1066 = vadd.f32 %v1054, %v1062
  %v1067 = vld [vmem:[#allocation2] sm:$0xff]
  %v1068 = vld [vmem:[#allocation2 + $0x8] sm:$0xf]
  %v1069 = vpack.c.bf16 %v1068, %v1067
  %v1071 = vsel %vm17, %v1069, 0
  %1073 = vmatpush.bf16.msra.mxu0 0
  %1074 = vmatpush.bf16.msra.mxu0 0
  %1075 = vmatpush.bf16.msra.mxu0 0
  %1076 = vmatpush.bf16.msra.mxu0 0
  %1077 = vmatpush.bf16.msra.mxu0 %v46
  %1078 = vmatpush.bf16.msra.mxu0 %v44
  %1079 = vmatpush.bf16.msra.mxu0 %v42
  %1080 = vmatpush.bf16.msra.mxu0 %v40
  %1081 = vmatmul.bf16.gmra.mxu0 %v1071
  %v1082 = vpop.f32.mrf.mxu0
  %v1083 = vadd.f32 0.0, %v1082
  %v1084 = vpop.f32.mrf.mxu0
  %v1085 = vadd.f32 0.0, %v1084
  %1086 = vdwg.mxu0
  %1087 = vmatpush.bf16.msra.mxu0 0
  %1088 = vmatpush.bf16.msra.mxu0 0
  %1089 = vmatpush.bf16.msra.mxu0 0
  %1090 = vmatpush.bf16.msra.mxu0 0
  %1091 = vmatpush.bf16.msra.mxu0 %v47
  %1092 = vmatpush.bf16.msra.mxu0 %v45
  %1093 = vmatpush.bf16.msra.mxu0 %v43
  %1094 = vmatpush.bf16.msra.mxu0 %v41
  %1095 = vmatmul.bf16.gmra.mxu0 %v1071
  %v1096 = vpop.f32.mrf.mxu0
  %v1097 = vadd.f32 0.0, %v1096
  %v1098 = vpop.f32.mrf.mxu0
  %v1099 = vadd.f32 0.0, %v1098
  %1100 = vdwg.mxu0
  %v1101 = vadd.f32 %v1063, %v1083
  %v1102 = vadd.f32 %v1064, %v1097
  %v1103 = vadd.f32 %v1065, %v1085
  %v1104 = vadd.f32 %v1066, %v1099
  %v1105 = vxor.u32 %v1101, 2147483648
  %v1106 = vxor.u32 %v1103, 2147483648
  %v1107 = vmul.f32 %v1105, 1.442695
  %v1108 = vpow.pop %v1107
  %v1109 = vmul.f32 %v1106, 1.442695
  %v1110 = vpow.pop %v1109
  %v1111 = vadd.f32 %v1108, 1.0
  %v1112 = vadd.f32 %v1110, 1.0
  %v1113 = vrcp.pop %v1111
  %v1114 = vmul.f32 %v1111, %v1113
  %v1115 = vsub.f32 1.0, %v1114
  %v1116 = vmul.f32 %v1113, %v1115
  %v1117 = vadd.f32 %v1113, %v1116
  %vm1118 = vweird.f32 %v1111
  %vm1119 = vweird.f32 %v1113
  %vm1120 = vmor %vm1118, %vm1119
  %v1121 = vsel %vm1120, %v1113, %v1117
  %v1122 = vand.u32 2147483647, %v1111
  %vm1123 = vcmp.eq.f32.partialorder %v1122, 8.507059e+37
  %v1124 = vand.u32 %v1111, 2147483648
  %v1125 = vor.u32 1.1754944e-38, %v1124
  %v1126 = vsel %vm1123, %v1125, %v1121
  %v1127 = vmul.f32 1.0, %v1126
  %v1128 = vrcp.pop %v1112
  %v1129 = vmul.f32 %v1112, %v1128
  %v1130 = vsub.f32 1.0, %v1129
  %v1131 = vmul.f32 %v1128, %v1130
  %v1132 = vadd.f32 %v1128, %v1131
  %vm1133 = vweird.f32 %v1112
  %vm1134 = vweird.f32 %v1128
  %vm1135 = vmor %vm1133, %vm1134
  %v1136 = vsel %vm1135, %v1128, %v1132
  %v1137 = vand.u32 2147483647, %v1112
  %vm1138 = vcmp.eq.f32.partialorder %v1137, 8.507059e+37
  %v1139 = vand.u32 %v1112, 2147483648
  %v1140 = vor.u32 1.1754944e-38, %v1139
  %v1141 = vsel %vm1138, %v1140, %v1136
  %v1142 = vmul.f32 1.0, %v1141
  %v1143 = vtanh.pop %v1102
  %v1144 = vtanh.pop %v1104
  %v1145 = vxor.u32 %v1102, 2147483648
  %v1146 = vxor.u32 %v1104, 2147483648
  %v1147 = vmul.f32 %v1145, 1.442695
  %v1148 = vpow.pop %v1147
  %v1149 = vmul.f32 %v1146, 1.442695
  %v1150 = vpow.pop %v1149
  %v1151 = vadd.f32 %v1148, 1.0
  %v1152 = vadd.f32 %v1150, 1.0
  %v1153 = vrcp.pop %v1151
  %v1154 = vmul.f32 %v1151, %v1153
  %v1155 = vsub.f32 1.0, %v1154
  %v1156 = vmul.f32 %v1153, %v1155
  %v1157 = vadd.f32 %v1153, %v1156
  %vm1158 = vweird.f32 %v1151
  %vm1159 = vweird.f32 %v1153
  %vm1160 = vmor %vm1158, %vm1159
  %v1161 = vsel %vm1160, %v1153, %v1157
  %v1162 = vand.u32 2147483647, %v1151
  %vm1163 = vcmp.eq.f32.partialorder %v1162, 8.507059e+37
  %v1164 = vand.u32 %v1151, 2147483648
  %v1165 = vor.u32 1.1754944e-38, %v1164
  %v1166 = vsel %vm1163, %v1165, %v1161
  %v1167 = vmul.f32 1.0, %v1166
  %v1168 = vrcp.pop %v1152
  %v1169 = vmul.f32 %v1152, %v1168
  %v1170 = vsub.f32 1.0, %v1169
  %v1171 = vmul.f32 %v1168, %v1170
  %v1172 = vadd.f32 %v1168, %v1171
  %vm1173 = vweird.f32 %v1152
  %vm1174 = vweird.f32 %v1168
  %vm1175 = vmor %vm1173, %vm1174
  %v1176 = vsel %vm1175, %v1168, %v1172
  %v1177 = vand.u32 2147483647, %v1152
  %vm1178 = vcmp.eq.f32.partialorder %v1177, 8.507059e+37
  %v1179 = vand.u32 %v1152, 2147483648
  %v1180 = vor.u32 1.1754944e-38, %v1179
  %v1181 = vsel %vm1178, %v1180, %v1176
  %v1182 = vmul.f32 1.0, %v1181
  %v1183 = vld [vmem:[#allocation3] sm:$0xff]
  %v1184 = vld [vmem:[#allocation3 + $0x8] sm:$0xf]
  %1187 = vrot.lane.b32.xlu0 %v1183, 64
  %v1188 = vpop.permute.xlu0 %1187
  %1189 = vrot.lane.b32.xlu0 %v1184, 64
  %v1190 = vpop.permute.xlu0 %1189
  %v1193 = vmul.f32 %v1127, %v1188
  %v1194 = vmul.f32 %v1142, %v1190
  %v1195 = vmul.f32 %v1127, %v1143
  %v1196 = vmul.f32 %v1142, %v1144
  %1199 = vrot.lane.b32.xlu0 %v1195, 64
  %v1200 = vpop.permute.xlu0 %1199
  %1201 = vrot.lane.b32.xlu0 %v1196, 64
  %v1202 = vpop.permute.xlu0 %1201
  %v1205 = vadd.f32 %v1193, %v1200
  %v1206 = vadd.f32 %v1194, %v1202
  %v1207 = vtanh.pop %v1205
  %v1208 = vtanh.pop %v1206
  %v1209 = vmul.f32 %v1167, %v1207
  %v1210 = vmul.f32 %v1182, %v1208
  %1213 = vrot.lane.b32.xlu0 %v1205, 64
  %v1214 = vpop.permute.xlu0 %1213
  %1215 = vrot.lane.b32.xlu0 %v1206, 64
  %v1216 = vpop.permute.xlu0 %1215
  %1219 = vst.msk [vmem:[#allocation3] sm:$0xff] %vm17, %v1214
  %1220 = vst.msk [vmem:[#allocation3 + $0x8] sm:$0xf] %vm19, %v1216
  %1223 = vrot.lane.b32.xlu0 %v1209, 64
  %v1224 = vpop.permute.xlu0 %1223
  %1225 = vrot.lane.b32.xlu0 %v1210, 64
  %v1226 = vpop.permute.xlu0 %1225
  %1229 = vst.msk [vmem:[#allocation2] sm:$0xff] %vm17, %v1224
  %1230 = vst.msk [vmem:[#allocation2 + $0x8] sm:$0xf] %vm19, %v1226
  %s1231 = scalar_lea.vmem %s3, 80
  %1232 = vst.msk [vmem:[%s1231] sm:$0xff] %vm244, %v1224
  %1233 = vst.msk [vmem:[%s1231 + $0x8] sm:$0xf] %vm246, %v1226
  %1234 = vrot.lane.b32.xlu0 %v1209, 32
  %v1235 = vpop.permute.xlu0 %1234
  %1236 = vrot.lane.b32.xlu0 %v1210, 32
  %v1237 = vpop.permute.xlu0 %1236
  %s1240 = scalar_lea.vmem %s4, 32
  %1241 = vst.msk [vmem:[%s1240] sm:$0xff] %vm244, %v1235
  %1242 = vst.msk [vmem:[%s1240 + $0x8] sm:$0xf] %vm246, %v1237
  %v1243 = vld [vmem:[%s266] sm:$0xff]
  %v1244 = vld [vmem:[%s266 + $0x8] sm:$0xff]
  %v1245 = vld [vmem:[%s266 + $0x10] sm:$0xf]
  %v1246 = vld [vmem:[%s266 + $0x18] sm:$0xf]
  %v1247 = vmul.f32 %v53, %v1243
  %v1248 = vmul.f32 %v54, %v1244
  %v1249 = vmul.f32 %v53, %v1245
  %v1250 = vmul.f32 %v54, %v1246
  %v1251 = vld [vmem:[%s257] sm:$0xff]
  %v1252 = vld [vmem:[%s257 + $0x8] sm:$0xff]
  %v1253 = vld [vmem:[%s257 + $0x10] sm:$0xf]
  %v1254 = vld [vmem:[%s257 + $0x18] sm:$0xf]
  %v1255 = vmul.f32 %v68, %v1251
  %v1256 = vmul.f32 %v69, %v1252
  %v1257 = vmul.f32 %v68, %v1253
  %v1258 = vmul.f32 %v69, %v1254
  %v1259 = vadd.f32 %v1247, %v1255
  %v1260 = vadd.f32 %v1248, %v1256
  %v1261 = vadd.f32 %v1249, %v1257
  %v1262 = vadd.f32 %v1250, %v1258
  %v1263 = vld [vmem:[#allocation2] sm:$0xff]
  %v1264 = vld [vmem:[#allocation2 + $0x8] sm:$0xf]
  %v1265 = vpack.c.bf16 %v1264, %v1263
  %v1267 = vsel %vm17, %v1265, 0
  %1269 = vmatpush.bf16.msra.mxu0 0
  %1270 = vmatpush.bf16.msra.mxu0 0
  %1271 = vmatpush.bf16.msra.mxu0 0
  %1272 = vmatpush.bf16.msra.mxu0 0
  %1273 = vmatpush.bf16.msra.mxu0 %v46
  %1274 = vmatpush.bf16.msra.mxu0 %v44
  %1275 = vmatpush.bf16.msra.mxu0 %v42
  %1276 = vmatpush.bf16.msra.mxu0 %v40
  %1277 = vmatmul.bf16.gmra.mxu0 %v1267
  %v1278 = vpop.f32.mrf.mxu0
  %v1279 = vadd.f32 0.0, %v1278
  %v1280 = vpop.f32.mrf.mxu0
  %v1281 = vadd.f32 0.0, %v1280
  %1282 = vdwg.mxu0
  %1283 = vmatpush.bf16.msra.mxu0 0
  %1284 = vmatpush.bf16.msra.mxu0 0
  %1285 = vmatpush.bf16.msra.mxu0 0
  %1286 = vmatpush.bf16.msra.mxu0 0
  %1287 = vmatpush.bf16.msra.mxu0 %v47
  %1288 = vmatpush.bf16.msra.mxu0 %v45
  %1289 = vmatpush.bf16.msra.mxu0 %v43
  %1290 = vmatpush.bf16.msra.mxu0 %v41
  %1291 = vmatmul.bf16.gmra.mxu0 %v1267
  %v1292 = vpop.f32.mrf.mxu0
  %v1293 = vadd.f32 0.0, %v1292
  %v1294 = vpop.f32.mrf.mxu0
  %v1295 = vadd.f32 0.0, %v1294
  %1296 = vdwg.mxu0
  %v1297 = vadd.f32 %v1259, %v1279
  %v1298 = vadd.f32 %v1260, %v1293
  %v1299 = vadd.f32 %v1261, %v1281
  %v1300 = vadd.f32 %v1262, %v1295
  %v1301 = vxor.u32 %v1297, 2147483648
  %v1302 = vxor.u32 %v1299, 2147483648
  %v1303 = vmul.f32 %v1301, 1.442695
  %v1304 = vpow.pop %v1303
  %v1305 = vmul.f32 %v1302, 1.442695
  %v1306 = vpow.pop %v1305
  %v1307 = vadd.f32 %v1304, 1.0
  %v1308 = vadd.f32 %v1306, 1.0
  %v1309 = vrcp.pop %v1307
  %v1310 = vmul.f32 %v1307, %v1309
  %v1311 = vsub.f32 1.0, %v1310
  %v1312 = vmul.f32 %v1309, %v1311
  %v1313 = vadd.f32 %v1309, %v1312
  %vm1314 = vweird.f32 %v1307
  %vm1315 = vweird.f32 %v1309
  %vm1316 = vmor %vm1314, %vm1315
  %v1317 = vsel %vm1316, %v1309, %v1313
  %v1318 = vand.u32 2147483647, %v1307
  %vm1319 = vcmp.eq.f32.partialorder %v1318, 8.507059e+37
  %v1320 = vand.u32 %v1307, 2147483648
  %v1321 = vor.u32 1.1754944e-38, %v1320
  %v1322 = vsel %vm1319, %v1321, %v1317
  %v1323 = vmul.f32 1.0, %v1322
  %v1324 = vrcp.pop %v1308
  %v1325 = vmul.f32 %v1308, %v1324
  %v1326 = vsub.f32 1.0, %v1325
  %v1327 = vmul.f32 %v1324, %v1326
  %v1328 = vadd.f32 %v1324, %v1327
  %vm1329 = vweird.f32 %v1308
  %vm1330 = vweird.f32 %v1324
  %vm1331 = vmor %vm1329, %vm1330
  %v1332 = vsel %vm1331, %v1324, %v1328
  %v1333 = vand.u32 2147483647, %v1308
  %vm1334 = vcmp.eq.f32.partialorder %v1333, 8.507059e+37
  %v1335 = vand.u32 %v1308, 2147483648
  %v1336 = vor.u32 1.1754944e-38, %v1335
  %v1337 = vsel %vm1334, %v1336, %v1332
  %v1338 = vmul.f32 1.0, %v1337
  %v1339 = vtanh.pop %v1298
  %v1340 = vtanh.pop %v1300
  %v1341 = vxor.u32 %v1298, 2147483648
  %v1342 = vxor.u32 %v1300, 2147483648
  %v1343 = vmul.f32 %v1341, 1.442695
  %v1344 = vpow.pop %v1343
  %v1345 = vmul.f32 %v1342, 1.442695
  %v1346 = vpow.pop %v1345
  %v1347 = vadd.f32 %v1344, 1.0
  %v1348 = vadd.f32 %v1346, 1.0
  %v1349 = vrcp.pop %v1347
  %v1350 = vmul.f32 %v1347, %v1349
  %v1351 = vsub.f32 1.0, %v1350
  %v1352 = vmul.f32 %v1349, %v1351
  %v1353 = vadd.f32 %v1349, %v1352
  %vm1354 = vweird.f32 %v1347
  %vm1355 = vweird.f32 %v1349
  %vm1356 = vmor %vm1354, %vm1355
  %v1357 = vsel %vm1356, %v1349, %v1353
  %v1358 = vand.u32 2147483647, %v1347
  %vm1359 = vcmp.eq.f32.partialorder %v1358, 8.507059e+37
  %v1360 = vand.u32 %v1347, 2147483648
  %v1361 = vor.u32 1.1754944e-38, %v1360
  %v1362 = vsel %vm1359, %v1361, %v1357
  %v1363 = vmul.f32 1.0, %v1362
  %v1364 = vrcp.pop %v1348
  %v1365 = vmul.f32 %v1348, %v1364
  %v1366 = vsub.f32 1.0, %v1365
  %v1367 = vmul.f32 %v1364, %v1366
  %v1368 = vadd.f32 %v1364, %v1367
  %vm1369 = vweird.f32 %v1348
  %vm1370 = vweird.f32 %v1364
  %vm1371 = vmor %vm1369, %vm1370
  %v1372 = vsel %vm1371, %v1364, %v1368
  %v1373 = vand.u32 2147483647, %v1348
  %vm1374 = vcmp.eq.f32.partialorder %v1373, 8.507059e+37
  %v1375 = vand.u32 %v1348, 2147483648
  %v1376 = vor.u32 1.1754944e-38, %v1375
  %v1377 = vsel %vm1374, %v1376, %v1372
  %v1378 = vmul.f32 1.0, %v1377
  %v1379 = vld [vmem:[#allocation3] sm:$0xff]
  %v1380 = vld [vmem:[#allocation3 + $0x8] sm:$0xf]
  %1383 = vrot.lane.b32.xlu0 %v1379, 64
  %v1384 = vpop.permute.xlu0 %1383
  %1385 = vrot.lane.b32.xlu0 %v1380, 64
  %v1386 = vpop.permute.xlu0 %1385
  %v1389 = vmul.f32 %v1323, %v1384
  %v1390 = vmul.f32 %v1338, %v1386
  %v1391 = vmul.f32 %v1323, %v1339
  %v1392 = vmul.f32 %v1338, %v1340
  %1395 = vrot.lane.b32.xlu0 %v1391, 64
  %v1396 = vpop.permute.xlu0 %1395
  %1397 = vrot.lane.b32.xlu0 %v1392, 64
  %v1398 = vpop.permute.xlu0 %1397
  %v1401 = vadd.f32 %v1389, %v1396
  %v1402 = vadd.f32 %v1390, %v1398
  %v1403 = vtanh.pop %v1401
  %v1404 = vtanh.pop %v1402
  %v1405 = vmul.f32 %v1363, %v1403
  %v1406 = vmul.f32 %v1378, %v1404
  %1409 = vrot.lane.b32.xlu0 %v1401, 64
  %v1410 = vpop.permute.xlu0 %1409
  %1411 = vrot.lane.b32.xlu0 %v1402, 64
  %v1412 = vpop.permute.xlu0 %1411
  %1415 = vst.msk [vmem:[#allocation3] sm:$0xff] %vm17, %v1410
  %1416 = vst.msk [vmem:[#allocation3 + $0x8] sm:$0xf] %vm19, %v1412
  %1419 = vrot.lane.b32.xlu0 %v1405, 64
  %v1420 = vpop.permute.xlu0 %1419
  %1421 = vrot.lane.b32.xlu0 %v1406, 64
  %v1422 = vpop.permute.xlu0 %1421
  %1425 = vst.msk [vmem:[#allocation2] sm:$0xff] %vm17, %v1420
  %1426 = vst.msk [vmem:[#allocation2 + $0x8] sm:$0xf] %vm19, %v1422
  %s1427 = scalar_lea.vmem %s3, 96
  %1428 = vst.msk [vmem:[%s1427] sm:$0xff] %vm244, %v1420
  %1429 = vst.msk [vmem:[%s1427 + $0x8] sm:$0xf] %vm246, %v1422
  %1430 = vrot.lane.b32.xlu0 %v1405, 32
  %v1431 = vpop.permute.xlu0 %1430
  %1432 = vrot.lane.b32.xlu0 %v1406, 32
  %v1433 = vpop.permute.xlu0 %1432
  %s1436 = scalar_lea.vmem %s4, 16
  %1437 = vst.msk [vmem:[%s1436] sm:$0xff] %vm244, %v1431
  %1438 = vst.msk [vmem:[%s1436 + $0x8] sm:$0xf] %vm246, %v1433
  %v1439 = vld [vmem:[%s62] sm:$0xff]
  %v1440 = vld [vmem:[%s62 + $0x8] sm:$0xff]
  %v1441 = vld [vmem:[%s62 + $0x10] sm:$0xf]
  %v1442 = vld [vmem:[%s62 + $0x18] sm:$0xf]
  %v1443 = vmul.f32 %v53, %v1439
  %v1444 = vmul.f32 %v54, %v1440
  %v1445 = vmul.f32 %v53, %v1441
  %v1446 = vmul.f32 %v54, %v1442
  %v1447 = vld [vmem:[%s0] sm:$0xff]
  %v1448 = vld [vmem:[%s0 + $0x8] sm:$0xff]
  %v1449 = vld [vmem:[%s0 + $0x10] sm:$0xf]
  %v1450 = vld [vmem:[%s0 + $0x18] sm:$0xf]
  %v1451 = vmul.f32 %v68, %v1447
  %v1452 = vmul.f32 %v69, %v1448
  %v1453 = vmul.f32 %v68, %v1449
  %v1454 = vmul.f32 %v69, %v1450
  %v1455 = vadd.f32 %v1443, %v1451
  %v1456 = vadd.f32 %v1444, %v1452
  %v1457 = vadd.f32 %v1445, %v1453
  %v1458 = vadd.f32 %v1446, %v1454
  %v1459 = vld [vmem:[#allocation2] sm:$0xff]
  %v1460 = vld [vmem:[#allocation2 + $0x8] sm:$0xf]
  %v1461 = vpack.c.bf16 %v1460, %v1459
  %v1463 = vsel %vm17, %v1461, 0
  %1465 = vmatpush.bf16.msra.mxu0 0
  %1466 = vmatpush.bf16.msra.mxu0 0
  %1467 = vmatpush.bf16.msra.mxu0 0
  %1468 = vmatpush.bf16.msra.mxu0 0
  %1469 = vmatpush.bf16.msra.mxu0 %v46
  %1470 = vmatpush.bf16.msra.mxu0 %v44
  %1471 = vmatpush.bf16.msra.mxu0 %v42
  %1472 = vmatpush.bf16.msra.mxu0 %v40
  %1473 = vmatmul.bf16.gmra.mxu0 %v1463
  %v1474 = vpop.f32.mrf.mxu0
  %v1475 = vadd.f32 0.0, %v1474
  %v1476 = vpop.f32.mrf.mxu0
  %v1477 = vadd.f32 0.0, %v1476
  %1478 = vdwg.mxu0
  %1479 = vmatpush.bf16.msra.mxu0 0
  %1480 = vmatpush.bf16.msra.mxu0 0
  %1481 = vmatpush.bf16.msra.mxu0 0
  %1482 = vmatpush.bf16.msra.mxu0 0
  %1483 = vmatpush.bf16.msra.mxu0 %v47
  %1484 = vmatpush.bf16.msra.mxu0 %v45
  %1485 = vmatpush.bf16.msra.mxu0 %v43
  %1486 = vmatpush.bf16.msra.mxu0 %v41
  %1487 = vmatmul.bf16.gmra.mxu0 %v1463
  %v1488 = vpop.f32.mrf.mxu0
  %v1489 = vadd.f32 0.0, %v1488
  %v1490 = vpop.f32.mrf.mxu0
  %v1491 = vadd.f32 0.0, %v1490
  %1492 = vdwg.mxu0
  %v1493 = vadd.f32 %v1455, %v1475
  %v1494 = vadd.f32 %v1456, %v1489
  %v1495 = vadd.f32 %v1457, %v1477
  %v1496 = vadd.f32 %v1458, %v1491
  %v1497 = vxor.u32 %v1493, 2147483648
  %v1498 = vxor.u32 %v1495, 2147483648
  %v1499 = vmul.f32 %v1497, 1.442695
  %v1500 = vpow.pop %v1499
  %v1501 = vmul.f32 %v1498, 1.442695
  %v1502 = vpow.pop %v1501
  %v1503 = vadd.f32 %v1500, 1.0
  %v1504 = vadd.f32 %v1502, 1.0
  %v1505 = vrcp.pop %v1503
  %v1506 = vmul.f32 %v1503, %v1505
  %v1507 = vsub.f32 1.0, %v1506
  %v1508 = vmul.f32 %v1505, %v1507
  %v1509 = vadd.f32 %v1505, %v1508
  %vm1510 = vweird.f32 %v1503
  %vm1511 = vweird.f32 %v1505
  %vm1512 = vmor %vm1510, %vm1511
  %v1513 = vsel %vm1512, %v1505, %v1509
  %v1514 = vand.u32 2147483647, %v1503
  %vm1515 = vcmp.eq.f32.partialorder %v1514, 8.507059e+37
  %v1516 = vand.u32 %v1503, 2147483648
  %v1517 = vor.u32 1.1754944e-38, %v1516
  %v1518 = vsel %vm1515, %v1517, %v1513
  %v1519 = vmul.f32 1.0, %v1518
  %v1520 = vrcp.pop %v1504
  %v1521 = vmul.f32 %v1504, %v1520
  %v1522 = vsub.f32 1.0, %v1521
  %v1523 = vmul.f32 %v1520, %v1522
  %v1524 = vadd.f32 %v1520, %v1523
  %vm1525 = vweird.f32 %v1504
  %vm1526 = vweird.f32 %v1520
  %vm1527 = vmor %vm1525, %vm1526
  %v1528 = vsel %vm1527, %v1520, %v1524
  %v1529 = vand.u32 2147483647, %v1504
  %vm1530 = vcmp.eq.f32.partialorder %v1529, 8.507059e+37
  %v1531 = vand.u32 %v1504, 2147483648
  %v1532 = vor.u32 1.1754944e-38, %v1531
  %v1533 = vsel %vm1530, %v1532, %v1528
  %v1534 = vmul.f32 1.0, %v1533
  %v1535 = vtanh.pop %v1494
  %v1536 = vtanh.pop %v1496
  %v1537 = vxor.u32 %v1494, 2147483648
  %v1538 = vxor.u32 %v1496, 2147483648
  %v1539 = vmul.f32 %v1537, 1.442695
  %v1540 = vpow.pop %v1539
  %v1541 = vmul.f32 %v1538, 1.442695
  %v1542 = vpow.pop %v1541
  %v1543 = vadd.f32 %v1540, 1.0
  %v1544 = vadd.f32 %v1542, 1.0
  %v1545 = vrcp.pop %v1543
  %v1546 = vmul.f32 %v1543, %v1545
  %v1547 = vsub.f32 1.0, %v1546
  %v1548 = vmul.f32 %v1545, %v1547
  %v1549 = vadd.f32 %v1545, %v1548
  %vm1550 = vweird.f32 %v1543
  %vm1551 = vweird.f32 %v1545
  %vm1552 = vmor %vm1550, %vm1551
  %v1553 = vsel %vm1552, %v1545, %v1549
  %v1554 = vand.u32 2147483647, %v1543
  %vm1555 = vcmp.eq.f32.partialorder %v1554, 8.507059e+37
  %v1556 = vand.u32 %v1543, 2147483648
  %v1557 = vor.u32 1.1754944e-38, %v1556
  %v1558 = vsel %vm1555, %v1557, %v1553
  %v1559 = vmul.f32 1.0, %v1558
  %v1560 = vrcp.pop %v1544
  %v1561 = vmul.f32 %v1544, %v1560
  %v1562 = vsub.f32 1.0, %v1561
  %v1563 = vmul.f32 %v1560, %v1562
  %v1564 = vadd.f32 %v1560, %v1563
  %vm1565 = vweird.f32 %v1544
  %vm1566 = vweird.f32 %v1560
  %vm1567 = vmor %vm1565, %vm1566
  %v1568 = vsel %vm1567, %v1560, %v1564
  %v1569 = vand.u32 2147483647, %v1544
  %vm1570 = vcmp.eq.f32.partialorder %v1569, 8.507059e+37
  %v1571 = vand.u32 %v1544, 2147483648
  %v1572 = vor.u32 1.1754944e-38, %v1571
  %v1573 = vsel %vm1570, %v1572, %v1568
  %v1574 = vmul.f32 1.0, %v1573
  %v1575 = vld [vmem:[#allocation3] sm:$0xff]
  %v1576 = vld [vmem:[#allocation3 + $0x8] sm:$0xf]
  %1579 = vrot.lane.b32.xlu0 %v1575, 64
  %v1580 = vpop.permute.xlu0 %1579
  %1581 = vrot.lane.b32.xlu0 %v1576, 64
  %v1582 = vpop.permute.xlu0 %1581
  %v1585 = vmul.f32 %v1519, %v1580
  %v1586 = vmul.f32 %v1534, %v1582
  %v1587 = vmul.f32 %v1519, %v1535
  %v1588 = vmul.f32 %v1534, %v1536
  %1591 = vrot.lane.b32.xlu0 %v1587, 64
  %v1592 = vpop.permute.xlu0 %1591
  %1593 = vrot.lane.b32.xlu0 %v1588, 64
  %v1594 = vpop.permute.xlu0 %1593
  %v1597 = vadd.f32 %v1585, %v1592
  %v1598 = vadd.f32 %v1586, %v1594
  %v1599 = vtanh.pop %v1597
  %v1600 = vtanh.pop %v1598
  %v1601 = vmul.f32 %v1559, %v1599
  %v1602 = vmul.f32 %v1574, %v1600
  %1605 = vrot.lane.b32.xlu0 %v1597, 64
  %v1606 = vpop.permute.xlu0 %1605
  %1607 = vrot.lane.b32.xlu0 %v1598, 64
  %v1608 = vpop.permute.xlu0 %1607
  %1611 = vst.msk [vmem:[#allocation3] sm:$0xff] %vm17, %v1606
  %1612 = vst.msk [vmem:[#allocation3 + $0x8] sm:$0xf] %vm19, %v1608
  %1615 = vrot.lane.b32.xlu0 %v1601, 64
  %v1616 = vpop.permute.xlu0 %1615
  %1617 = vrot.lane.b32.xlu0 %v1602, 64
  %v1618 = vpop.permute.xlu0 %1617
  %1621 = vst.msk [vmem:[#allocation2] sm:$0xff] %vm17, %v1616
  %1622 = vst.msk [vmem:[#allocation2 + $0x8] sm:$0xf] %vm19, %v1618
  %s1623 = scalar_lea.vmem %s3, 112
  %1624 = vst.msk [vmem:[%s1623] sm:$0xff] %vm244, %v1616
  %1625 = vst.msk [vmem:[%s1623 + $0x8] sm:$0xf] %vm246, %v1618
  %1626 = vrot.lane.b32.xlu0 %v1601, 32
  %v1627 = vpop.permute.xlu0 %1626
  %1628 = vrot.lane.b32.xlu0 %v1602, 32
  %v1629 = vpop.permute.xlu0 %1628
  %1632 = vst.msk [vmem:[%s4] sm:$0xff] %vm244, %v1627
  %1633 = vst.msk [vmem:[%s4 + $0x8] sm:$0xf] %vm246, %v1629
  // Predicated region
  $region14: #{swave_forward.17} parent=0 // pred_check
    _
  $region15: #{swave_forward.17} parent=0 // pred_check_branch
    %1635 = sbr.rel (0) target = $region17
  $region16: #{swave_forward.17} parent=0 // pred_region
    _
  $region17: #{swave_forward.17} parent=0 // pred_fallthru
    _
  // Predicated region
  $region18: #{swave_forward.17} parent=0 // pred_check
    _
  $region19: #{swave_forward.17} parent=0 // pred_check_branch
    %1637 = sbr.rel (0) target = $region21
  $region20: #{swave_forward.17} parent=0 // pred_region
    _
  $region21: #{swave_forward.17} parent=0 // pred_fallthru
    _
  // Predicated region
  $region22: #{swave_forward.17} parent=0 // pred_check
    _
  $region23: #{swave_forward.17} parent=0 // pred_check_branch
    %1639 = sbr.rel (0) target = $region25
  $region24: #{swave_forward.17} parent=0 // pred_region
    _
  $region25: #{swave_forward.17} parent=0 // pred_fallthru
    _
  // Predicated region
  $region26: #{swave_forward.17} parent=0 // pred_check
    _
  $region27: #{swave_forward.17} parent=0 // pred_check_branch
    %1641 = sbr.rel (0) target = $region29
  $region28: #{swave_forward.17} parent=0 // pred_region
    _
  $region29: #{swave_forward.17} parent=0 // pred_fallthru
    _

// kernel: swave_forward.22
$region0: #{swave_forward.22}
  #allocation0 [shape = 'u32[]', space=smem, size = 0x4, offset = 0x4, fixed_abs, tag = 'smem constant byte address 0x4 - core index']
  #allocation1 [shape = 'u32[72,128]{1,0:T(1,128)}', space=vmem, size = 0x9000, scoped, tag = 'internal scratch']
  #allocation2 [shape = 'f32[1,1]{1,0:T(1,128)S(1)}', space=vmem, size = 0x200, scoped, tag = 'scoped memory for swave_forward.22']
  %s0 = inlined_call_operand.vmem [shape: f32[96,16], index: 0, kind: input, shape index: {}]
  %s1 = inlined_call_operand.vmem [shape: f32[16,32], index: 1, kind: input, shape index: {}]
  %s2 = inlined_call_operand.vmem [shape: f32[1,32], index: 2, kind: input, shape index: {}]
  %s3 = inlined_call_operand.<no memory space> [shape: f32[1,1], index: 3, kind: input, shape index: {}]
  %s4 = inlined_call_operand.vmem [shape: f32[96,32], index: 4, kind: output, shape index: {}]
  %s5 = sld [smem:[#allocation0]]
  $region26: #{swave_forward.22} parent=0
    _
  %s7 = ssub.s32 1, %s5
  %s8 = scalar_select 0, %s7, %s5
  %v9 = vstv %s3
  %10 = vst [vmem:[#allocation2] sm:$0x1] %v9
  // Predicated region
  $region2: #{swave_forward.22} parent=0 // pred_check
    _
  $region3: #{swave_forward.22} parent=0 // pred_check_branch
    %12 = sbr.rel (0) target = $region5
  $region4: #{swave_forward.22} parent=0 // pred_region
    _
  $region5: #{swave_forward.22} parent=0 // pred_fallthru
    _
  // Predicated region
  $region6: #{swave_forward.22} parent=0 // pred_check
    _
  $region7: #{swave_forward.22} parent=0 // pred_check_branch
    %14 = sbr.rel (0) target = $region9
  $region8: #{swave_forward.22} parent=0 // pred_region
    _
  $region9: #{swave_forward.22} parent=0 // pred_fallthru
    _
  // Predicated region
  $region10: #{swave_forward.22} parent=0 // pred_check
    _
  $region11: #{swave_forward.22} parent=0 // pred_check_branch
    %16 = sbr.rel (0) target = $region13
  $region12: #{swave_forward.22} parent=0 // pred_region
    _
  $region13: #{swave_forward.22} parent=0 // pred_fallthru
    _
  // Predicated region
  $region14: #{swave_forward.22} parent=0 // pred_check
    _
  $region15: #{swave_forward.22} parent=0 // pred_check_branch
    %18 = sbr.rel (0) target = $region17
  $region16: #{swave_forward.22} parent=0 // pred_region
    _
  $region17: #{swave_forward.22} parent=0 // pred_fallthru
    _
  %v20 = vld [vmem:[%s0] sm:$0xff]
  %v21 = vld [vmem:[%s0 + $0x8] sm:$0xff]
  %v22 = vld [vmem:[%s0 + $0x10] sm:$0xff]
  %v23 = vld [vmem:[%s0 + $0x18] sm:$0xff]
  %v24 = vld [vmem:[%s0 + $0x20] sm:$0xff]
  %v25 = vld [vmem:[%s0 + $0x28] sm:$0xff]
  %v26 = vld [vmem:[%s0 + $0x30] sm:$0xff]
  %v27 = vld [vmem:[%s0 + $0x38] sm:$0xff]
  %v28 = vld [vmem:[%s0 + $0x40] sm:$0xff]
  %v29 = vld [vmem:[%s0 + $0x48] sm:$0xff]
  %v30 = vld [vmem:[%s0 + $0x50] sm:$0xff]
  %v31 = vld [vmem:[%s0 + $0x58] sm:$0xff]
  %vm32 = vcmp.ge.f32.partialorder %v20, 0.0
  %vm33 = vcmp.ge.f32.partialorder %v21, 0.0
  %vm34 = vcmp.ge.f32.partialorder %v22, 0.0
  %vm35 = vcmp.ge.f32.partialorder %v23, 0.0
  %vm36 = vcmp.ge.f32.partialorder %v24, 0.0
  %vm37 = vcmp.ge.f32.partialorder %v25, 0.0
  %vm38 = vcmp.ge.f32.partialorder %v26, 0.0
  %vm39 = vcmp.ge.f32.partialorder %v27, 0.0
  %vm40 = vcmp.ge.f32.partialorder %v28, 0.0
  %vm41 = vcmp.ge.f32.partialorder %v29, 0.0
  %vm42 = vcmp.ge.f32.partialorder %v30, 0.0
  %vm43 = vcmp.ge.f32.partialorder %v31, 0.0
  %v44 = vld [vmem:[#allocation2] sm:$0x1]
  %v46 = vperm.slane %v44, 0
  %47 = vset.pattern.permute.xlu0 0
  %48 = vperm.xlu0 %47, %v46
  %v49 = vpop.permute.xlu0 %48
  %v51 = vmul.f32 %v49, %v20
  %v52 = vmul.f32 %v49, %v21
  %v53 = vmul.f32 %v49, %v22
  %v54 = vmul.f32 %v49, %v23
  %v55 = vmul.f32 %v49, %v24
  %v56 = vmul.f32 %v49, %v25
  %v57 = vmul.f32 %v49, %v26
  %v58 = vmul.f32 %v49, %v27
  %v59 = vmul.f32 %v49, %v28
  %v60 = vmul.f32 %v49, %v29
  %v61 = vmul.f32 %v49, %v30
  %v62 = vmul.f32 %v49, %v31
  %v63 = vsel %vm32, %v20, %v51
  %v64 = vsel %vm33, %v21, %v52
  %v65 = vsel %vm34, %v22, %v53
  %v66 = vsel %vm35, %v23, %v54
  %v67 = vsel %vm36, %v24, %v55
  %v68 = vsel %vm37, %v25, %v56
  %v69 = vsel %vm38, %v26, %v57
  %v70 = vsel %vm39, %v27, %v58
  %v71 = vsel %vm40, %v28, %v59
  %v72 = vsel %vm41, %v29, %v60
  %v73 = vsel %vm42, %v30, %v61
  %v74 = vsel %vm43, %v31, %v62
  %v75 = vpack.c.bf16 %v64, %v63
  %v76 = vpack.c.bf16 %v66, %v65
  %v77 = vpack.c.bf16 %v68, %v67
  %v78 = vpack.c.bf16 %v70, %v69
  %v79 = vpack.c.bf16 %v72, %v71
  %v80 = vpack.c.bf16 %v74, %v73
  %v81 = vld [vmem:[%s1] sm:$0xff]
  %v82 = vld [vmem:[%s1 + $0x8] sm:$0xff]
  %v83 = vpack.c.bf16 %v82, %v81
  %v84 = vld [vmem:[%s2] sm:$0x1]
  %v86 = vperm.slane %v84, 0
  %vm88 = vcmask 130048
  %v90 = vsel %vm88, %v75, 0
  %v93 = vsel %vm88, %v76, 0
  %v96 = vsel %vm88, %v77, 0
  %v99 = vsel %vm88, %v78, 0
  %v102 = vsel %vm88, %v79, 0
  %v105 = vsel %vm88, %v80, 0
  %107 = vmatpush.bf16.msra.mxu0 0
  %108 = vmatpush.bf16.msra.mxu0 0
  %109 = vmatpush.bf16.msra.mxu0 0
  %110 = vmatpush.bf16.msra.mxu0 0
  %111 = vmatpush.bf16.msra.mxu0 0
  %112 = vmatpush.bf16.msra.mxu0 0
  %113 = vmatpush.bf16.msra.mxu0 0
  %114 = vmatpush.bf16.msra.mxu0 %v83
  %115 = vmatmul.bf16.gmra.mxu0 %v90
  %v116 = vpop.f32.mrf.mxu0
  %v117 = vadd.f32 %v86, %v116
  %v118 = vpop.f32.mrf.mxu0
  %v119 = vadd.f32 %v86, %v118
  %120 = vmatmul.bf16.gmra.mxu0 %v93
  %v121 = vpop.f32.mrf.mxu0
  %v122 = vadd.f32 %v86, %v121
  %v123 = vpop.f32.mrf.mxu0
  %v124 = vadd.f32 %v86, %v123
  %125 = vmatmul.bf16.gmra.mxu0 %v96
  %v126 = vpop.f32.mrf.mxu0
  %v127 = vadd.f32 %v86, %v126
  %v128 = vpop.f32.mrf.mxu0
  %v129 = vadd.f32 %v86, %v128
  %130 = vmatmul.bf16.gmra.mxu0 %v99
  %v131 = vpop.f32.mrf.mxu0
  %v132 = vadd.f32 %v86, %v131
  %v133 = vpop.f32.mrf.mxu0
  %v134 = vadd.f32 %v86, %v133
  %135 = vmatmul.bf16.gmra.mxu0 %v102
  %v136 = vpop.f32.mrf.mxu0
  %v137 = vadd.f32 %v86, %v136
  %v138 = vpop.f32.mrf.mxu0
  %v139 = vadd.f32 %v86, %v138
  %140 = vmatmul.bf16.gmra.mxu0 %v105
  %v141 = vpop.f32.mrf.mxu0
  %v142 = vadd.f32 %v86, %v141
  %v143 = vpop.f32.mrf.mxu0
  %v144 = vadd.f32 %v86, %v143
  %145 = vdwg.mxu0
  %vm146 = vcmask 261120
  %147 = vst.msk [vmem:[%s4] sm:$0xff] %vm146, %v117
  %148 = vst.msk [vmem:[%s4 + $0x8] sm:$0xff] %vm146, %v119
  %149 = vst.msk [vmem:[%s4 + $0x10] sm:$0xff] %vm146, %v122
  %150 = vst.msk [vmem:[%s4 + $0x18] sm:$0xff] %vm146, %v124
  %151 = vst.msk [vmem:[%s4 + $0x20] sm:$0xff] %vm146, %v127
  %152 = vst.msk [vmem:[%s4 + $0x28] sm:$0xff] %vm146, %v129
  %153 = vst.msk [vmem:[%s4 + $0x30] sm:$0xff] %vm146, %v132
  %154 = vst.msk [vmem:[%s4 + $0x38] sm:$0xff] %vm146, %v134
  %155 = vst.msk [vmem:[%s4 + $0x40] sm:$0xff] %vm146, %v137
  %156 = vst.msk [vmem:[%s4 + $0x48] sm:$0xff] %vm146, %v139
  %157 = vst.msk [vmem:[%s4 + $0x50] sm:$0xff] %vm146, %v142
  %158 = vst.msk [vmem:[%s4 + $0x58] sm:$0xff] %vm146, %v144
  // Predicated region
  $region18: #{swave_forward.22} parent=0 // pred_check
    _
  $region19: #{swave_forward.22} parent=0 // pred_check_branch
    %160 = sbr.rel (0) target = $region21
  $region20: #{swave_forward.22} parent=0 // pred_region
    _
  $region21: #{swave_forward.22} parent=0 // pred_fallthru
    _
  // Predicated region
  $region22: #{swave_forward.22} parent=0 // pred_check
    _
  $region23: #{swave_forward.22} parent=0 // pred_check_branch
    %162 = sbr.rel (0) target = $region25
  $region24: #{swave_forward.22} parent=0 // pred_region
    _
  $region25: #{swave_forward.22} parent=0 // pred_fallthru
    _

// kernel: swave_forward.20
$region0: #{swave_forward.20}
  #allocation0 [shape = 'u32[]', space=smem, size = 0x4, offset = 0x4, fixed_abs, tag = 'smem constant byte address 0x4 - core index']
  #allocation1 [shape = 'u32[72,128]{1,0:T(1,128)}', space=vmem, size = 0x9000, scoped, tag = 'internal scratch']
  #allocation2 [shape = 'f32[8,64]{1,0:T(8,128)}', space=vmem, size = 0x1000, scoped, tag = 'scratch operand']
  #allocation3 [shape = 'f32[8,64]{1,0:T(8,128)}', space=vmem, size = 0x1000, scoped, tag = 'scratch operand']
  %s0 = inlined_call_operand.vmem [shape: f32[6,16,256], index: 0, kind: input, shape index: {}]
  %s1 = inlined_call_operand.vmem [shape: f32[64,256], index: 1, kind: input, shape index: {}]
  %s2 = inlined_call_operand.vmem [shape: f32[1,256], index: 2, kind: input, shape index: {}]
  %s3 = inlined_call_operand.vmem [shape: f32[6,16,32], index: 3, kind: output, shape index: {0}]
  %s4 = inlined_call_operand.vmem [shape: f32[6,16,32], index: 4, kind: output, shape index: {1}]
  %5 = xla_tuple %s3, %s4
  %s6 = sld [smem:[#allocation0]]
  $region144: #{swave_forward.20} parent=0
    _
  %s8 = ssub.s32 1, %s6
  %s9 = scalar_select 0, %s8, %s6
  $region1: #{swave_forward.20} parent=0
    #allocation4 [shape = 'u8[98304]{0}', space=vmem, size = 0x18000, scoped, tag = 'input window, operand 0']
    #allocation5 [shape = 'u8[49152]{0}', space=vmem, size = 0xc000, scoped, tag = 'output window, operand 0']
    #allocation6 [shape = 'u8[49152]{0}', space=vmem, size = 0xc000, scoped, tag = 'output window, operand 1']
    loop: start=0, step=1, limit=4
    $region2: #{swave_forward.20} parent=1 // loop_pre_header
      _
    $region3: #{swave_forward.20} parent=1 // loop_header
      %s11 = sphi 0, %s15
      %p12 = scmp.ge.s32.totalorder %s11, 4
      %s21 = sphi 0, %s23
      %s24 = sphi 0, %s21
      %s25 = sphi 0, %s24
      %s41 = sphi 0, %s25
      %s45 = sphi 0, %s45
      %s47 = sphi 0, %s45
      %s48 = sphi 0, %s47
      %s62 = sphi 0, %s48
      %s66 = sphi 0, %s66
      %s68 = sphi 0, %s66
      %s69 = sphi 0, %s68
      %s83 = sphi 0, %s69
      %s89 = sphi 0, %s91
      %s92 = sphi 0, %s89
      %s93 = sphi 0, %s92
      %s109 = sphi 0, %s93
      %s115 = sphi 0, %s117
      %s118 = sphi 0, %s115
      %s119 = sphi 0, %s118
      %s135 = sphi 0, %s119
    $region4: #{swave_forward.20} parent=1 // loop_header_branch
      %14 = sbr.rel (%p12) target = $region8
    $region5: #{swave_forward.20} parent=1 // loop_body
      %s16 = ssub.s32 %s11, 1
      %s17 = ssub.s32 %s11, 2
      %s18 = sadd.s32 %s11, 1
      %s19 = ssub.s32 %s11, %s18
      %p20 = scmp.eq.s32.totalorder %s19, 0
      %s22 = sadd.s32 %s21, 1
      %s23 = scalar_select %p20, %s21, %s22
      %p26 = pneg %p20
      %p27 = scmp.eq.s32.totalorder %s11, 1
      %p28 = por %p26, %p27
      %p29 = scmp.ne.s32.totalorder %s21, %s24
      %p30 = scmp.eq.s32.totalorder %s11, 0
      %p31 = por %p29, %p30
      %p32 = scmp.ne.s32.totalorder %s21, %s24
      %p33 = scmp.eq.s32.totalorder %s16, 1
      %p34 = por %p32, %p33
      %p35 = scmp.ne.s32.totalorder %s24, %s25
      %p36 = scmp.eq.s32.totalorder %s16, 0
      %p37 = por %p35, %p36
      %p38 = scmp.ne.s32.totalorder %s24, %s25
      %p39 = scmp.eq.s32.totalorder %s17, 1
      %p40 = por %p38, %p39
      %p42 = scmp.ne.s32.totalorder %s25, %s41
      %p43 = scmp.eq.s32.totalorder %s17, 0
      %p44 = por %p42, %p43
      %s46 = sadd.s32 %s45, 1
      %p49 = scmp.eq.s32.totalorder %s11, 1
      %p50 = scmp.ne.s32.totalorder %s45, %s47
      %p51 = scmp.eq.s32.totalorder %s11, 0
      %p52 = por %p50, %p51
      %p53 = scmp.ne.s32.totalorder %s45, %s47
      %p54 = scmp.eq.s32.totalorder %s16, 1
      %p55 = por %p53, %p54
      %p56 = scmp.ne.s32.totalorder %s47, %s48
      %p57 = scmp.eq.s32.totalorder %s16, 0
      %p58 = por %p56, %p57
      %p59 = scmp.ne.s32.totalorder %s47, %s48
      %p60 = scmp.eq.s32.totalorder %s17, 1
      %p61 = por %p59, %p60
      %p63 = scmp.ne.s32.totalorder %s48, %s62
      %p64 = scmp.eq.s32.totalorder %s17, 0
      %p65 = por %p63, %p64
      %s67 = sadd.s32 %s66, 1
      %p70 = scmp.eq.s32.totalorder %s11, 1
      %p71 = scmp.ne.s32.totalorder %s66, %s68
      %p72 = scmp.eq.s32.totalorder %s11, 0
      %p73 = por %p71, %p72
      %p74 = scmp.ne.s32.totalorder %s66, %s68
      %p75 = scmp.eq.s32.totalorder %s16, 1
      %p76 = por %p74, %p75
      %p77 = scmp.ne.s32.totalorder %s68, %s69
      %p78 = scmp.eq.s32.totalorder %s16, 0
      %p79 = por %p77, %p78
      %p80 = scmp.ne.s32.totalorder %s68, %s69
      %p81 = scmp.eq.s32.totalorder %s17, 1
      %p82 = por %p80, %p81
      %p84 = scmp.ne.s32.totalorder %s69, %s83
      %p85 = scmp.eq.s32.totalorder %s17, 0
      %p86 = por %p84, %p85
      %s87 = ssub.s32 %s11, %s18
      %p88 = scmp.eq.s32.totalorder %s87, 0
      %s90 = sadd.s32 %s89, 1
      %s91 = scalar_select %p88, %s89, %s90
      %p94 = pneg %p88
      %p95 = scmp.eq.s32.totalorder %s11, 1
      %p96 = por %p94, %p95
      %p97 = scmp.ne.s32.totalorder %s89, %s92
      %p98 = scmp.eq.s32.totalorder %s11, 0
      %p99 = por %p97, %p98
      %p100 = scmp.ne.s32.totalorder %s89, %s92
      %p101 = scmp.eq.s32.totalorder %s16, 1
      %p102 = por %p100, %p101
      %p103 = scmp.ne.s32.totalorder %s92, %s93
      %p104 = scmp.eq.s32.totalorder %s16, 0
      %p105 = por %p103, %p104
      %p106 = scmp.ne.s32.totalorder %s92, %s93
      %p107 = scmp.eq.s32.totalorder %s17, 1
      %p108 = por %p106, %p107
      %p110 = scmp.ne.s32.totalorder %s93, %s109
      %p111 = scmp.eq.s32.totalorder %s17, 0
      %p112 = por %p110, %p111
      %s113 = ssub.s32 %s11, %s18
      %p114 = scmp.eq.s32.totalorder %s113, 0
      %s116 = sadd.s32 %s115, 1
      %s117 = scalar_select %p114, %s115, %s116
      %p120 = pneg %p114
      %p121 = scmp.eq.s32.totalorder %s11, 1
      %p122 = por %p120, %p121
      %p123 = scmp.ne.s32.totalorder %s115, %s118
      %p124 = scmp.eq.s32.totalorder %s11, 0
      %p125 = por %p123, %p124
      %p126 = scmp.ne.s32.totalorder %s115, %s118
      %p127 = scmp.eq.s32.totalorder %s16, 1
      %p128 = por %p126, %p127
      %p129 = scmp.ne.s32.totalorder %s118, %s119
      %p130 = scmp.eq.s32.totalorder %s16, 0
      %p131 = por %p129, %p130
      %p132 = scmp.ne.s32.totalorder %s118, %s119
      %p133 = scmp.eq.s32.totalorder %s17, 1
      %p134 = por %p132, %p133
      %p136 = scmp.ne.s32.totalorder %s119, %s135
      %p137 = scmp.eq.s32.totalorder %s17, 0
      %p138 = por %p136, %p137
      %p139 = scmp.le.s32.totalorder 1, %s11
      %p140 = scmp.lt.s32.totalorder %s11, 3
      %p141 = pnand %p139, %p140
      %p142 = pneg %p141
      // Predicated region
      $region9: #{swave_forward.20} parent=5 // pred_check
        _
      $region10: #{swave_forward.20} parent=5 // pred_check_branch
        %144 = sbr.rel (%p141) target = $region12
      $region11: #{swave_forward.20} parent=5 // pred_region
        %s145 = ssub.s32 %s11, 1
        // Predicated region
        $region13: #{swave_forward.20} parent=11 // pred_check
          %p146 = pneg %p58
        $region14: #{swave_forward.20} parent=11 // pred_check_branch
          %148 = sbr.rel (%p146) target = $region16
        $region15: #{swave_forward.20} parent=11 // pred_region
          _
        $region16: #{swave_forward.20} parent=11 // pred_fallthru
          _
        // Predicated region
        $region17: #{swave_forward.20} parent=11 // pred_check
          %p149 = pneg %p79
        $region18: #{swave_forward.20} parent=11 // pred_check_branch
          %151 = sbr.rel (%p149) target = $region20
        $region19: #{swave_forward.20} parent=11 // pred_region
          _
        $region20: #{swave_forward.20} parent=11 // pred_fallthru
          _
      $region12: #{swave_forward.20} parent=5 // pred_fallthru
        _
      %p152 = scmp.lt.s32.totalorder %s11, 2
      // Predicated region
      $region21: #{swave_forward.20} parent=5 // pred_check
        %p153 = pneg %p152
      $region22: #{swave_forward.20} parent=5 // pred_check_branch
        %155 = sbr.rel (%p153) target = $region24
      $region23: #{swave_forward.20} parent=5 // pred_region
        // Predicated region
        $region25: #{swave_forward.20} parent=23 // pred_check
          %p156 = pneg %p31
        $region26: #{swave_forward.20} parent=23 // pred_check_branch
          %158 = sbr.rel (%p156) target = $region28
        $region27: #{swave_forward.20} parent=23 // pred_region
          %s159 = sand.u32 %s21, 1
          %s160 = sand.u32 %s21, 1
          %s161 = smul.addr %s160, 96
          %s162 = scalar_lea.vmem [#allocation4], %s161
          %s163 = smul.addr %s11, 2
          %s164 = smul.addr %s163, 8
          %s165 = scalar_lea.vmem %s0, %s164
          // Predicated region
          $region29: #{swave_forward.20} parent=27 // pred_check
            _
          $region30: #{swave_forward.20} parent=27 // pred_check_branch
            %167 = sbr.rel (0) target = $region32
          $region31: #{swave_forward.20} parent=27 // pred_region
            // Predicated region
            $region33: #{swave_forward.20} parent=31 // pred_check
              _
            $region34: #{swave_forward.20} parent=31 // pred_check_branch
              %169 = sbr.rel (0) target = $region36
            $region35: #{swave_forward.20} parent=31 // pred_region
              loop: start=0, step=1, limit=1
              $region37: #{swave_forward.20} parent=35 // loop_pre_header
                _
              $region38: #{swave_forward.20} parent=35 // loop_header
                %s171 = sphi 0, %s175
                %p172 = scmp.ge.s32.totalorder %s171, 1
                %s176 = sphi %s165, %s165
                %s177 = sphi %s162, %s162
              $region39: #{swave_forward.20} parent=35 // loop_header_branch
                %174 = sbr.rel (%p172) target = $region43
              $region40: #{swave_forward.20} parent=35 // loop_body
                %v178 = vld [vmem:[%s176] sm:$0xff]
                %179 = vst [vmem:[%s177] sm:$0xff] %v178
                %v180 = vld [vmem:[%s176 + $0x8] sm:$0xff]
                %181 = vst [vmem:[%s177 + $0x8] sm:$0xff] %v180
                %v182 = vld [vmem:[%s176 + $0x20] sm:$0xff]
                %183 = vst [vmem:[%s177 + $0x10] sm:$0xff] %v182
                %v184 = vld [vmem:[%s176 + $0x28] sm:$0xff]
                %185 = vst [vmem:[%s177 + $0x18] sm:$0xff] %v184
                %v186 = vld [vmem:[%s176 + $0x40] sm:$0xff]
                %187 = vst [vmem:[%s177 + $0x20] sm:$0xff] %v186
                %v188 = vld [vmem:[%s176 + $0x48] sm:$0xff]
                %189 = vst [vmem:[%s177 + $0x28] sm:$0xff] %v188
                %v190 = vld [vmem:[%s176 + $0x60] sm:$0xff]
                %191 = vst [vmem:[%s177 + $0x30] sm:$0xff] %v190
                %v192 = vld [vmem:[%s176 + $0x68] sm:$0xff]
                %193 = vst [vmem:[%s177 + $0x38] sm:$0xff] %v192
                %v194 = vld [vmem:[%s176 + $0x80] sm:$0xff]
                %195 = vst [vmem:[%s177 + $0x40] sm:$0xff] %v194
                %v196 = vld [vmem:[%s176 + $0x88] sm:$0xff]
                %197 = vst [vmem:[%s177 + $0x48] sm:$0xff] %v196
                %v198 = vld [vmem:[%s176 + $0xa0] sm:$0xff]
                %199 = vst [vmem:[%s177 + $0x50] sm:$0xff] %v198
                %v200 = vld [vmem:[%s176 + $0xa8] sm:$0xff]
                %201 = vst [vmem:[%s177 + $0x58] sm:$0xff] %v200
              $region41: #{swave_forward.20} parent=35 // loop_footer
                %s175 = sadd.s32 1, %s171
              $region42: #{swave_forward.20} parent=35 // loop_footer_branch
                %170 = sbr.rel target = $region38
              $region43: #{swave_forward.20} parent=35 // loop_exit
                _
            $region36: #{swave_forward.20} parent=31 // pred_fallthru
              _
            // Predicated region
            $region44: #{swave_forward.20} parent=31 // pred_check
              _
            $region45: #{swave_forward.20} parent=31 // pred_check_branch
              %203 = sbr.rel target = $region47
            $region46: #{swave_forward.20} parent=31 // pred_region
              _
            $region47: #{swave_forward.20} parent=31 // pred_fallthru
              _
          $region32: #{swave_forward.20} parent=27 // pred_fallthru
            _
          %204 = vnop
        $region28: #{swave_forward.20} parent=23 // pred_fallthru
          _
      $region24: #{swave_forward.20} parent=5 // pred_fallthru
        _
      %p205 = scmp.le.s32.totalorder 1, %s11
      %p206 = scmp.lt.s32.totalorder %s11, 3
      %p207 = pnand %p205, %p206
      %p208 = pneg %p207
      // Predicated region
      $region48: #{swave_forward.20} parent=5 // pred_check
        _
      $region49: #{swave_forward.20} parent=5 // pred_check_branch
        %210 = sbr.rel (%p207) target = $region51
      $region50: #{swave_forward.20} parent=5 // pred_region
        %s211 = ssub.s32 %s11, 1
        %s212 = sand.u32 %s24, 1
        %s213 = sand.u32 %s24, 1
        %s214 = smul.addr %s213, 96
        %s215 = scalar_lea.vmem [#allocation4], %s214
        // Predicated region
        $region52: #{swave_forward.20} parent=50 // pred_check
          %p216 = pneg %p37
        $region53: #{swave_forward.20} parent=50 // pred_check_branch
          %218 = sbr.rel (%p216) target = $region55
        $region54: #{swave_forward.20} parent=50 // pred_region
          _
        $region55: #{swave_forward.20} parent=50 // pred_fallthru
          _
        %s219 = sand.u32 %s24, 1
        %s220 = sand.u32 %s24, 1
        %s221 = smul.addr %s220, 96
        %s222 = scalar_lea.vmem [#allocation4], %s221
        %p223 = pneg %p37
        %p224 = pneg %p34
        %p225 = pneg %p58
        %p226 = pneg %p55
        %p227 = pneg %p79
        %p228 = pneg %p76
        %p229 = pneg %p105
        %p230 = pneg %p102
        %s231 = sand.u32 %s92, 1
        %s232 = sand.u32 %s92, 1
        %s233 = smul.addr %s232, 48
        %s234 = scalar_lea.vmem [#allocation5], %s233
        %p235 = pneg %p131
        %p236 = pneg %p128
        %s237 = sand.u32 %s118, 1
        %s238 = sand.u32 %s118, 1
        %s239 = smul.addr %s238, 48
        %s240 = scalar_lea.vmem [#allocation6], %s239
        %vm242 = vcmask 523264
        %243 = vst.msk [vmem:[#allocation2] sm:$0xff] %vm242, 0.0
        %244 = vst.msk [vmem:[#allocation3] sm:$0xff] %vm242, 0.0
        %v245 = vld [vmem:[%s2] sm:$0x3]
        %v246 = vld [vmem:[%s1] sm:$0xff]
        %v247 = vld [vmem:[%s1 + $0x8] sm:$0xff]
        %v248 = vld [vmem:[%s1 + $0x10] sm:$0xff]
        %v249 = vld [vmem:[%s1 + $0x18] sm:$0xff]
        %v250 = vld [vmem:[%s1 + $0x20] sm:$0xff]
        %v251 = vld [vmem:[%s1 + $0x28] sm:$0xff]
        %v252 = vld [vmem:[%s1 + $0x30] sm:$0xff]
        %v253 = vld [vmem:[%s1 + $0x38] sm:$0xff]
        %v254 = vld [vmem:[%s1 + $0x40] sm:$0xff]
        %v255 = vld [vmem:[%s1 + $0x48] sm:$0xff]
        %v256 = vld [vmem:[%s1 + $0x50] sm:$0xff]
        %v257 = vld [vmem:[%s1 + $0x58] sm:$0xff]
        %v258 = vld [vmem:[%s1 + $0x60] sm:$0xff]
        %v259 = vld [vmem:[%s1 + $0x68] sm:$0xff]
        %v260 = vld [vmem:[%s1 + $0x70] sm:$0xff]
        %v261 = vld [vmem:[%s1 + $0x78] sm:$0xff]
        %v262 = vpack.c.bf16 %v248, %v246
        %v263 = vpack.c.bf16 %v249, %v247
        %v264 = vpack.c.bf16 %v252, %v250
        %v265 = vpack.c.bf16 %v253, %v251
        %v266 = vpack.c.bf16 %v256, %v254
        %v267 = vpack.c.bf16 %v257, %v255
        %v268 = vpack.c.bf16 %v260, %v258
        %v269 = vpack.c.bf16 %v261, %v259
        %v270 = vld [vmem:[%s215] sm:$0xff]
        %v271 = vld [vmem:[%s215 + $0x8] sm:$0xff]
        %v273 = vperm.slane %v245, 0
        %v274 = vperm.slane %v245, 1
        %v277 = vmul.f32 %v273, %v270
        %v278 = vmul.f32 %v274, %v271
        %v279 = vsub.f32 1.0, %v245
        %s280 = scalar_lea.vmem %s215, 80 [#allocation4]
        %v281 = vld [vmem:[%s280] sm:$0xff]
        %v282 = vld [vmem:[%s280 + $0x8] sm:$0xff]
        %v284 = vperm.slane %v279, 0
        %v285 = vperm.slane %v279, 1
        %v288 = vmul.f32 %v284, %v281
        %v289 = vmul.f32 %v285, %v282
        %v290 = vadd.f32 %v277, %v288
        %v291 = vadd.f32 %v278, %v289
        %v292 = vld [vmem:[#allocation2] sm:$0xff]
        %v293 = vpack.c.bf16 %v292, %v292
        %v295 = vsel %vm242, %v293, 0
        %297 = vmatpush.bf16.msra.mxu0 0
        %298 = vmatpush.bf16.msra.mxu0 0
        %299 = vmatpush.bf16.msra.mxu0 0
        %300 = vmatpush.bf16.msra.mxu0 0
        %301 = vmatpush.bf16.msra.mxu0 %v268
        %302 = vmatpush.bf16.msra.mxu0 %v266
        %303 = vmatpush.bf16.msra.mxu0 %v264
        %304 = vmatpush.bf16.msra.mxu0 %v262
        %305 = vmatmul.bf16.gmra.mxu0 %v295
        %v306 = vpop.f32.mrf.mxu0
        %v307 = vadd.f32 0.0, %v306
        %v308 = vpop.f32.mrf.mxu0
        %309 = vdwg.mxu0
        %310 = vmatpush.bf16.msra.mxu0 0
        %311 = vmatpush.bf16.msra.mxu0 0
        %312 = vmatpush.bf16.msra.mxu0 0
        %313 = vmatpush.bf16.msra.mxu0 0
        %314 = vmatpush.bf16.msra.mxu0 %v269
        %315 = vmatpush.bf16.msra.mxu0 %v267
        %316 = vmatpush.bf16.msra.mxu0 %v265
        %317 = vmatpush.bf16.msra.mxu0 %v263
        %318 = vmatmul.bf16.gmra.mxu0 %v295
        %v319 = vpop.f32.mrf.mxu0
        %v320 = vadd.f32 0.0, %v319
        %v321 = vpop.f32.mrf.mxu0
        %322 = vdwg.mxu0
        %v323 = vadd.f32 %v290, %v307
        %v324 = vadd.f32 %v291, %v320
        %v325 = vxor.u32 %v323, 2147483648
        %v326 = vmul.f32 %v325, 1.442695
        %v327 = vpow.pop %v326
        %v328 = vadd.f32 %v327, 1.0
        %v329 = vrcp.pop %v328
        %v330 = vmul.f32 %v328, %v329
        %v331 = vsub.f32 1.0, %v330
        %v332 = vmul.f32 %v329, %v331
        %v333 = vadd.f32 %v329, %v332
        %vm334 = vweird.f32 %v328
        %vm335 = vweird.f32 %v329
        %vm336 = vmor %vm334, %vm335
        %v337 = vsel %vm336, %v329, %v333
        %v338 = vand.u32 2147483647, %v328
        %vm339 = vcmp.eq.f32.partialorder %v338, 8.507059e+37
        %v340 = vand.u32 %v328, 2147483648
        %v341 = vor.u32 1.1754944e-38, %v340
        %v342 = vsel %vm339, %v341, %v337
        %v343 = vmul.f32 1.0, %v342
        %v344 = vtanh.pop %v324
        %v345 = vxor.u32 %v324, 2147483648
        %v346 = vmul.f32 %v345, 1.442695
        %v347 = vpow.pop %v346
        %v348 = vadd.f32 %v347, 1.0
        %v349 = vrcp.pop %v348
        %v350 = vmul.f32 %v348, %v349
        %v351 = vsub.f32 1.0, %v350
        %v352 = vmul.f32 %v349, %v351
        %v353 = vadd.f32 %v349, %v352
        %vm354 = vweird.f32 %v348
        %vm355 = vweird.f32 %v349
        %vm356 = vmor %vm354, %vm355
        %v357 = vsel %vm356, %v349, %v353
        %v358 = vand.u32 2147483647, %v348
        %vm359 = vcmp.eq.f32.partialorder %v358, 8.507059e+37
        %v360 = vand.u32 %v348, 2147483648
        %v361 = vor.u32 1.1754944e-38, %v360
        %v362 = vsel %vm359, %v361, %v357
        %v363 = vmul.f32 1.0, %v362
        %v364 = vld [vmem:[#allocation3] sm:$0xff]
        %366 = vrot.lane.b32.xlu0 %v364, 64
        %v367 = vpop.permute.xlu0 %366
        %v369 = vmul.f32 %v343, %v367
        %v370 = vmul.f32 %v343, %v344
        %372 = vrot.lane.b32.xlu0 %v370, 64
        %v373 = vpop.permute.xlu0 %372
        %v375 = vadd.f32 %v369, %v373
        %v376 = vtanh.pop %v375
        %v377 = vmul.f32 %v363, %v376
        %379 = vrot.lane.b32.xlu0 %v375, 64
        %v380 = vpop.permute.xlu0 %379
        %382 = vst.msk [vmem:[#allocation3] sm:$0xff] %vm242, %v380
        %384 = vrot.lane.b32.xlu0 %v377, 64
        %v385 = vpop.permute.xlu0 %384
        %387 = vst.msk [vmem:[#allocation2] sm:$0xff] %vm242, %v385
        %vm388 = vcmask 261120
        %389 = vst.msk [vmem:[%s234] sm:$0xff] %vm388, %v385
        %390 = vrot.lane.b32.xlu0 %v377, 32
        %v391 = vpop.permute.xlu0 %390
        %s393 = scalar_lea.vmem %s240, 40 [#allocation6]
        %394 = vst.msk [vmem:[%s393] sm:$0xff] %vm388, %v391
        %s395 = scalar_lea.vmem %s215, 16 [#allocation4]
        %v396 = vld [vmem:[%s395] sm:$0xff]
        %v397 = vld [vmem:[%s395 + $0x8] sm:$0xff]
        %v398 = vmul.f32 %v273, %v396
        %v399 = vmul.f32 %v274, %v397
        %s400 = scalar_lea.vmem %s215, 64 [#allocation4]
        %v401 = vld [vmem:[%s400] sm:$0xff]
        %v402 = vld [vmem:[%s400 + $0x8] sm:$0xff]
        %v403 = vmul.f32 %v284, %v401
        %v404 = vmul.f32 %v285, %v402
        %v405 = vadd.f32 %v398, %v403
        %v406 = vadd.f32 %v399, %v404
        %v407 = vld [vmem:[#allocation2] sm:$0xff]
        %v408 = vpack.c.bf16 %v407, %v407
        %v410 = vsel %vm242, %v408, 0
        %412 = vmatpush.bf16.msra.mxu0 0
        %413 = vmatpush.bf16.msra.mxu0 0
        %414 = vmatpush.bf16.msra.mxu0 0
        %415 = vmatpush.bf16.msra.mxu0 0
        %416 = vmatpush.bf16.msra.mxu0 %v268
        %417 = vmatpush.bf16.msra.mxu0 %v266
        %418 = vmatpush.bf16.msra.mxu0 %v264
        %419 = vmatpush.bf16.msra.mxu0 %v262
        %420 = vmatmul.bf16.gmra.mxu0 %v410
        %v421 = vpop.f32.mrf.mxu0
        %v422 = vadd.f32 0.0, %v421
        %v423 = vpop.f32.mrf.mxu0
        %424 = vdwg.mxu0
        %425 = vmatpush.bf16.msra.mxu0 0
        %426 = vmatpush.bf16.msra.mxu0 0
        %427 = vmatpush.bf16.msra.mxu0 0
        %428 = vmatpush.bf16.msra.mxu0 0
        %429 = vmatpush.bf16.msra.mxu0 %v269
        %430 = vmatpush.bf16.msra.mxu0 %v267
        %431 = vmatpush.bf16.msra.mxu0 %v265
        %432 = vmatpush.bf16.msra.mxu0 %v263
        %433 = vmatmul.bf16.gmra.mxu0 %v410
        %v434 = vpop.f32.mrf.mxu0
        %v435 = vadd.f32 0.0, %v434
        %v436 = vpop.f32.mrf.mxu0
        %437 = vdwg.mxu0
        %v438 = vadd.f32 %v405, %v422
        %v439 = vadd.f32 %v406, %v435
        %v440 = vxor.u32 %v438, 2147483648
        %v441 = vmul.f32 %v440, 1.442695
        %v442 = vpow.pop %v441
        %v443 = vadd.f32 %v442, 1.0
        %v444 = vrcp.pop %v443
        %v445 = vmul.f32 %v443, %v444
        %v446 = vsub.f32 1.0, %v445
        %v447 = vmul.f32 %v444, %v446
        %v448 = vadd.f32 %v444, %v447
        %vm449 = vweird.f32 %v443
        %vm450 = vweird.f32 %v444
        %vm451 = vmor %vm449, %vm450
        %v452 = vsel %vm451, %v444, %v448
        %v453 = vand.u32 2147483647, %v443
        %vm454 = vcmp.eq.f32.partialorder %v453, 8.507059e+37
        %v455 = vand.u32 %v443, 2147483648
        %v456 = vor.u32 1.1754944e-38, %v455
        %v457 = vsel %vm454, %v456, %v452
        %v458 = vmul.f32 1.0, %v457
        %v459 = vtanh.pop %v439
        %v460 = vxor.u32 %v439, 2147483648
        %v461 = vmul.f32 %v460, 1.442695
        %v462 = vpow.pop %v461
        %v463 = vadd.f32 %v462, 1.0
        %v464 = vrcp.pop %v463
        %v465 = vmul.f32 %v463, %v464
        %v466 = vsub.f32 1.0, %v465
        %v467 = vmul.f32 %v464, %v466
        %v468 = vadd.f32 %v464, %v467
        %vm469 = vweird.f32 %v463
        %vm470 = vweird.f32 %v464
        %vm471 = vmor %vm469, %vm470
        %v472 = vsel %vm471, %v464, %v468
        %v473 = vand.u32 2147483647, %v463
        %vm474 = vcmp.eq.f32.partialorder %v473, 8.507059e+37
        %v475 = vand.u32 %v463, 2147483648
        %v476 = vor.u32 1.1754944e-38, %v475
        %v477 = vsel %vm474, %v476, %v472
        %v478 = vmul.f32 1.0, %v477
        %v479 = vld [vmem:[#allocation3] sm:$0xff]
        %481 = vrot.lane.b32.xlu0 %v479, 64
        %v482 = vpop.permute.xlu0 %481
        %v484 = vmul.f32 %v458, %v482
        %v485 = vmul.f32 %v458, %v459
        %487 = vrot.lane.b32.xlu0 %v485, 64
        %v488 = vpop.permute.xlu0 %487
        %v490 = vadd.f32 %v484, %v488
        %v491 = vtanh.pop %v490
        %v492 = vmul.f32 %v478, %v491
        %494 = vrot.lane.b32.xlu0 %v490, 64
        %v495 = vpop.permute.xlu0 %494
        %497 = vst.msk [vmem:[#allocation3] sm:$0xff] %vm242, %v495
        %499 = vrot.lane.b32.xlu0 %v492, 64
        %v500 = vpop.permute.xlu0 %499
        %502 = vst.msk [vmem:[#allocation2] sm:$0xff] %vm242, %v500
        %s503 = scalar_lea.vmem %s234, 8 [#allocation5]
        %504 = vst.msk [vmem:[%s503] sm:$0xff] %vm388, %v500
        %505 = vrot.lane.b32.xlu0 %v492, 32
        %v506 = vpop.permute.xlu0 %505
        %s508 = scalar_lea.vmem %s240, 32 [#allocation6]
        %509 = vst.msk [vmem:[%s508] sm:$0xff] %vm388, %v506
        %s510 = scalar_lea.vmem %s215, 32 [#allocation4]
        %v511 = vld [vmem:[%s510] sm:$0xff]
        %v512 = vld [vmem:[%s510 + $0x8] sm:$0xff]
        %v513 = vmul.f32 %v273, %v511
        %v514 = vmul.f32 %v274, %v512
        %s515 = scalar_lea.vmem %s215, 48 [#allocation4]
        %v516 = vld [vmem:[%s515] sm:$0xff]
        %v517 = vld [vmem:[%s515 + $0x8] sm:$0xff]
        %v518 = vmul.f32 %v284, %v516
        %v519 = vmul.f32 %v285, %v517
        %v520 = vadd.f32 %v513, %v518
        %v521 = vadd.f32 %v514, %v519
        %v522 = vld [vmem:[#allocation2] sm:$0xff]
        %v523 = vpack.c.bf16 %v522, %v522
        %v525 = vsel %vm242, %v523, 0
        %527 = vmatpush.bf16.msra.mxu0 0
        %528 = vmatpush.bf16.msra.mxu0 0
        %529 = vmatpush.bf16.msra.mxu0 0
        %530 = vmatpush.bf16.msra.mxu0 0
        %531 = vmatpush.bf16.msra.mxu0 %v268
        %532 = vmatpush.bf16.msra.mxu0 %v266
        %533 = vmatpush.bf16.msra.mxu0 %v264
        %534 = vmatpush.bf16.msra.mxu0 %v262
        %535 = vmatmul.bf16.gmra.mxu0 %v525
        %v536 = vpop.f32.mrf.mxu0
        %v537 = vadd.f32 0.0, %v536
        %v538 = vpop.f32.mrf.mxu0
        %539 = vdwg.mxu0
        %540 = vmatpush.bf16.msra.mxu0 0
        %541 = vmatpush.bf16.msra.mxu0 0
        %542 = vmatpush.bf16.msra.mxu0 0
        %543 = vmatpush.bf16.msra.mxu0 0
        %544 = vmatpush.bf16.msra.mxu0 %v269
        %545 = vmatpush.bf16.msra.mxu0 %v267
        %546 = vmatpush.bf16.msra.mxu0 %v265
        %547 = vmatpush.bf16.msra.mxu0 %v263
        %548 = vmatmul.bf16.gmra.mxu0 %v525
        %v549 = vpop.f32.mrf.mxu0
        %v550 = vadd.f32 0.0, %v549
        %v551 = vpop.f32.mrf.mxu0
        %552 = vdwg.mxu0
        %v553 = vadd.f32 %v520, %v537
        %v554 = vadd.f32 %v521, %v550
        %v555 = vxor.u32 %v553, 2147483648
        %v556 = vmul.f32 %v555, 1.442695
        %v557 = vpow.pop %v556
        %v558 = vadd.f32 %v557, 1.0
        %v559 = vrcp.pop %v558
        %v560 = vmul.f32 %v558, %v559
        %v561 = vsub.f32 1.0, %v560
        %v562 = vmul.f32 %v559, %v561
        %v563 = vadd.f32 %v559, %v562
        %vm564 = vweird.f32 %v558
        %vm565 = vweird.f32 %v559
        %vm566 = vmor %vm564, %vm565
        %v567 = vsel %vm566, %v559, %v563
        %v568 = vand.u32 2147483647, %v558
        %vm569 = vcmp.eq.f32.partialorder %v568, 8.507059e+37
        %v570 = vand.u32 %v558, 2147483648
        %v571 = vor.u32 1.1754944e-38, %v570
        %v572 = vsel %vm569, %v571, %v567
        %v573 = vmul.f32 1.0, %v572
        %v574 = vtanh.pop %v554
        %v575 = vxor.u32 %v554, 2147483648
        %v576 = vmul.f32 %v575, 1.442695
        %v577 = vpow.pop %v576
        %v578 = vadd.f32 %v577, 1.0
        %v579 = vrcp.pop %v578
        %v580 = vmul.f32 %v578, %v579
        %v581 = vsub.f32 1.0, %v580
        %v582 = vmul.f32 %v579, %v581
        %v583 = vadd.f32 %v579, %v582
        %vm584 = vweird.f32 %v578
        %vm585 = vweird.f32 %v579
        %vm586 = vmor %vm584, %vm585
        %v587 = vsel %vm586, %v579, %v583
        %v588 = vand.u32 2147483647, %v578
        %vm589 = vcmp.eq.f32.partialorder %v588, 8.507059e+37
        %v590 = vand.u32 %v578, 2147483648
        %v591 = vor.u32 1.1754944e-38, %v590
        %v592 = vsel %vm589, %v591, %v587
        %v593 = vmul.f32 1.0, %v592
        %v594 = vld [vmem:[#allocation3] sm:$0xff]
        %596 = vrot.lane.b32.xlu0 %v594, 64
        %v597 = vpop.permute.xlu0 %596
        %v599 = vmul.f32 %v573, %v597
        %v600 = vmul.f32 %v573, %v574
        %602 = vrot.lane.b32.xlu0 %v600, 64
        %v603 = vpop.permute.xlu0 %602
        %v605 = vadd.f32 %v599, %v603
        %v606 = vtanh.pop %v605
        %v607 = vmul.f32 %v593, %v606
        %609 = vrot.lane.b32.xlu0 %v605, 64
        %v610 = vpop.permute.xlu0 %609
        %612 = vst.msk [vmem:[#allocation3] sm:$0xff] %vm242, %v610
        %614 = vrot.lane.b32.xlu0 %v607, 64
        %v615 = vpop.permute.xlu0 %614
        %617 = vst.msk [vmem:[#allocation2] sm:$0xff] %vm242, %v615
        %s618 = scalar_lea.vmem %s234, 16 [#allocation5]
        %619 = vst.msk [vmem:[%s618] sm:$0xff] %vm388, %v615
        %620 = vrot.lane.b32.xlu0 %v607, 32
        %v621 = vpop.permute.xlu0 %620
        %s623 = scalar_lea.vmem %s240, 24 [#allocation6]
        %624 = vst.msk [vmem:[%s623] sm:$0xff] %vm388, %v621
        %v625 = vld [vmem:[%s515] sm:$0xff]
        %v626 = vld [vmem:[%s515 + $0x8] sm:$0xff]
        %v627 = vmul.f32 %v273, %v625
        %v628 = vmul.f32 %v274, %v626
        %v629 = vld [vmem:[%s510] sm:$0xff]
        %v630 = vld [vmem:[%s510 + $0x8] sm:$0xff]
        %v631 = vmul.f32 %v284, %v629
        %v632 = vmul.f32 %v285, %v630
        %v633 = vadd.f32 %v627, %v631
        %v634 = vadd.f32 %v628, %v632
        %v635 = vld [vmem:[#allocation2] sm:$0xff]
        %v636 = vpack.c.bf16 %v635, %v635
        %v638 = vsel %vm242, %v636, 0
        %640 = vmatpush.bf16.msra.mxu0 0
        %641 = vmatpush.bf16.msra.mxu0 0
        %642 = vmatpush.bf16.msra.mxu0 0
        %643 = vmatpush.bf16.msra.mxu0 0
        %644 = vmatpush.bf16.msra.mxu0 %v268
        %645 = vmatpush.bf16.msra.mxu0 %v266
        %646 = vmatpush.bf16.msra.mxu0 %v264
        %647 = vmatpush.bf16.msra.mxu0 %v262
        %648 = vmatmul.bf16.gmra.mxu0 %v638
        %v649 = vpop.f32.mrf.mxu0
        %v650 = vadd.f32 0.0, %v649
        %v651 = vpop.f32.mrf.mxu0
        %652 = vdwg.mxu0
        %653 = vmatpush.bf16.msra.mxu0 0
        %654 = vmatpush.bf16.msra.mxu0 0
        %655 = vmatpush.bf16.msra.mxu0 0
        %656 = vmatpush.bf16.msra.mxu0 0
        %657 = vmatpush.bf16.msra.mxu0 %v269
        %658 = vmatpush.bf16.msra.mxu0 %v267
        %659 = vmatpush.bf16.msra.mxu0 %v265
        %660 = vmatpush.bf16.msra.mxu0 %v263
        %661 = vmatmul.bf16.gmra.mxu0 %v638
        %v662 = vpop.f32.mrf.mxu0
        %v663 = vadd.f32 0.0, %v662
        %v664 = vpop.f32.mrf.mxu0
        %665 = vdwg.mxu0
        %v666 = vadd.f32 %v633, %v650
        %v667 = vadd.f32 %v634, %v663
        %v668 = vxor.u32 %v666, 2147483648
        %v669 = vmul.f32 %v668, 1.442695
        %v670 = vpow.pop %v669
        %v671 = vadd.f32 %v670, 1.0
        %v672 = vrcp.pop %v671
        %v673 = vmul.f32 %v671, %v672
        %v674 = vsub.f32 1.0, %v673
        %v675 = vmul.f32 %v672, %v674
        %v676 = vadd.f32 %v672, %v675
        %vm677 = vweird.f32 %v671
        %vm678 = vweird.f32 %v672
        %vm679 = vmor %vm677, %vm678
        %v680 = vsel %vm679, %v672, %v676
        %v681 = vand.u32 2147483647, %v671
        %vm682 = vcmp.eq.f32.partialorder %v681, 8.507059e+37
        %v683 = vand.u32 %v671, 2147483648
        %v684 = vor.u32 1.1754944e-38, %v683
        %v685 = vsel %vm682, %v684, %v680
        %v686 = vmul.f32 1.0, %v685
        %v687 = vtanh.pop %v667
        %v688 = vxor.u32 %v667, 2147483648
        %v689 = vmul.f32 %v688, 1.442695
        %v690 = vpow.pop %v689
        %v691 = vadd.f32 %v690, 1.0
        %v692 = vrcp.pop %v691
        %v693 = vmul.f32 %v691, %v692
        %v694 = vsub.f32 1.0, %v693
        %v695 = vmul.f32 %v692, %v694
        %v696 = vadd.f32 %v692, %v695
        %vm697 = vweird.f32 %v691
        %vm698 = vweird.f32 %v692
        %vm699 = vmor %vm697, %vm698
        %v700 = vsel %vm699, %v692, %v696
        %v701 = vand.u32 2147483647, %v691
        %vm702 = vcmp.eq.f32.partialorder %v701, 8.507059e+37
        %v703 = vand.u32 %v691, 2147483648
        %v704 = vor.u32 1.1754944e-38, %v703
        %v705 = vsel %vm702, %v704, %v700
        %v706 = vmul.f32 1.0, %v705
        %v707 = vld [vmem:[#allocation3] sm:$0xff]
        %709 = vrot.lane.b32.xlu0 %v707, 64
        %v710 = vpop.permute.xlu0 %709
        %v712 = vmul.f32 %v686, %v710
        %v713 = vmul.f32 %v686, %v687
        %715 = vrot.lane.b32.xlu0 %v713, 64
        %v716 = vpop.permute.xlu0 %715
        %v718 = vadd.f32 %v712, %v716
        %v719 = vtanh.pop %v718
        %v720 = vmul.f32 %v706, %v719
        %722 = vrot.lane.b32.xlu0 %v718, 64
        %v723 = vpop.permute.xlu0 %722
        %725 = vst.msk [vmem:[#allocation3] sm:$0xff] %vm242, %v723
        %727 = vrot.lane.b32.xlu0 %v720, 64
        %v728 = vpop.permute.xlu0 %727
        %730 = vst.msk [vmem:[#allocation2] sm:$0xff] %vm242, %v728
        %s731 = scalar_lea.vmem %s234, 24 [#allocation5]
        %732 = vst.msk [vmem:[%s731] sm:$0xff] %vm388, %v728
        %733 = vrot.lane.b32.xlu0 %v720, 32
        %v734 = vpop.permute.xlu0 %733
        %s736 = scalar_lea.vmem %s240, 16 [#allocation6]
        %737 = vst.msk [vmem:[%s736] sm:$0xff] %vm388, %v734
        %v738 = vld [vmem:[%s400] sm:$0xff]
        %v739 = vld [vmem:[%s400 + $0x8] sm:$0xff]
        %v740 = vmul.f32 %v273, %v738
        %v741 = vmul.f32 %v274, %v739
        %v742 = vld [vmem:[%s395] sm:$0xff]
        %v743 = vld [vmem:[%s395 + $0x8] sm:$0xff]
        %v744 = vmul.f32 %v284, %v742
        %v745 = vmul.f32 %v285, %v743
        %v746 = vadd.f32 %v740, %v744
        %v747 = vadd.f32 %v741, %v745
        %v748 = vld [vmem:[#allocation2] sm:$0xff]
        %v749 = vpack.c.bf16 %v748, %v748
        %v751 = vsel %vm242, %v749, 0
        %753 = vmatpush.bf16.msra.mxu0 0
        %754 = vmatpush.bf16.msra.mxu0 0
        %755 = vmatpush.bf16.msra.mxu0 0
        %756 = vmatpush.bf16.msra.mxu0 0
        %757 = vmatpush.bf16.msra.mxu0 %v268
        %758 = vmatpush.bf16.msra.mxu0 %v266
        %759 = vmatpush.bf16.msra.mxu0 %v264
        %760 = vmatpush.bf16.msra.mxu0 %v262
        %761 = vmatmul.bf16.gmra.mxu0 %v751
        %v762 = vpop.f32.mrf.mxu0
        %v763 = vadd.f32 0.0, %v762
        %v764 = vpop.f32.mrf.mxu0
        %765 = vdwg.mxu0
        %766 = vmatpush.bf16.msra.mxu0 0
        %767 = vmatpush.bf16.msra.mxu0 0
        %768 = vmatpush.bf16.msra.mxu0 0
        %769 = vmatpush.bf16.msra.mxu0 0
        %770 = vmatpush.bf16.msra.mxu0 %v269
        %771 = vmatpush.bf16.msra.mxu0 %v267
        %772 = vmatpush.bf16.msra.mxu0 %v265
        %773 = vmatpush.bf16.msra.mxu0 %v263
        %774 = vmatmul.bf16.gmra.mxu0 %v751
        %v775 = vpop.f32.mrf.mxu0
        %v776 = vadd.f32 0.0, %v775
        %v777 = vpop.f32.mrf.mxu0
        %778 = vdwg.mxu0
        %v779 = vadd.f32 %v746, %v763
        %v780 = vadd.f32 %v747, %v776
        %v781 = vxor.u32 %v779, 2147483648
        %v782 = vmul.f32 %v781, 1.442695
        %v783 = vpow.pop %v782
        %v784 = vadd.f32 %v783, 1.0
        %v785 = vrcp.pop %v784
        %v786 = vmul.f32 %v784, %v785
        %v787 = vsub.f32 1.0, %v786
        %v788 = vmul.f32 %v785, %v787
        %v789 = vadd.f32 %v785, %v788
        %vm790 = vweird.f32 %v784
        %vm791 = vweird.f32 %v785
        %vm792 = vmor %vm790, %vm791
        %v793 = vsel %vm792, %v785, %v789
        %v794 = vand.u32 2147483647, %v784
        %vm795 = vcmp.eq.f32.partialorder %v794, 8.507059e+37
        %v796 = vand.u32 %v784, 2147483648
        %v797 = vor.u32 1.1754944e-38, %v796
        %v798 = vsel %vm795, %v797, %v793
        %v799 = vmul.f32 1.0, %v798
        %v800 = vtanh.pop %v780
        %v801 = vxor.u32 %v780, 2147483648
        %v802 = vmul.f32 %v801, 1.442695
        %v803 = vpow.pop %v802
        %v804 = vadd.f32 %v803, 1.0
        %v805 = vrcp.pop %v804
        %v806 = vmul.f32 %v804, %v805
        %v807 = vsub.f32 1.0, %v806
        %v808 = vmul.f32 %v805, %v807
        %v809 = vadd.f32 %v805, %v808
        %vm810 = vweird.f32 %v804
        %vm811 = vweird.f32 %v805
        %vm812 = vmor %vm810, %vm811
        %v813 = vsel %vm812, %v805, %v809
        %v814 = vand.u32 2147483647, %v804
        %vm815 = vcmp.eq.f32.partialorder %v814, 8.507059e+37
        %v816 = vand.u32 %v804, 2147483648
        %v817 = vor.u32 1.1754944e-38, %v816
        %v818 = vsel %vm815, %v817, %v813
        %v819 = vmul.f32 1.0, %v818
        %v820 = vld [vmem:[#allocation3] sm:$0xff]
        %822 = vrot.lane.b32.xlu0 %v820, 64
        %v823 = vpop.permute.xlu0 %822
        %v825 = vmul.f32 %v799, %v823
        %v826 = vmul.f32 %v799, %v800
        %828 = vrot.lane.b32.xlu0 %v826, 64
        %v829 = vpop.permute.xlu0 %828
        %v831 = vadd.f32 %v825, %v829
        %v832 = vtanh.pop %v831
        %v833 = vmul.f32 %v819, %v832
        %835 = vrot.lane.b32.xlu0 %v831, 64
        %v836 = vpop.permute.xlu0 %835
        %838 = vst.msk [vmem:[#allocation3] sm:$0xff] %vm242, %v836
        %840 = vrot.lane.b32.xlu0 %v833, 64
        %v841 = vpop.permute.xlu0 %840
        %843 = vst.msk [vmem:[#allocation2] sm:$0xff] %vm242, %v841
        %s844 = scalar_lea.vmem %s234, 32 [#allocation5]
        %845 = vst.msk [vmem:[%s844] sm:$0xff] %vm388, %v841
        %846 = vrot.lane.b32.xlu0 %v833, 32
        %v847 = vpop.permute.xlu0 %846
        %s849 = scalar_lea.vmem %s240, 8 [#allocation6]
        %850 = vst.msk [vmem:[%s849] sm:$0xff] %vm388, %v847
        %v851 = vld [vmem:[%s280] sm:$0xff]
        %v852 = vld [vmem:[%s280 + $0x8] sm:$0xff]
        %v853 = vmul.f32 %v273, %v851
        %v854 = vmul.f32 %v274, %v852
        %v855 = vld [vmem:[%s215] sm:$0xff]
        %v856 = vld [vmem:[%s215 + $0x8] sm:$0xff]
        %v857 = vmul.f32 %v284, %v855
        %v858 = vmul.f32 %v285, %v856
        %v859 = vadd.f32 %v853, %v857
        %v860 = vadd.f32 %v854, %v858
        %v861 = vld [vmem:[#allocation2] sm:$0xff]
        %v862 = vpack.c.bf16 %v861, %v861
        %v864 = vsel %vm242, %v862, 0
        %866 = vmatpush.bf16.msra.mxu0 0
        %867 = vmatpush.bf16.msra.mxu0 0
        %868 = vmatpush.bf16.msra.mxu0 0
        %869 = vmatpush.bf16.msra.mxu0 0
        %870 = vmatpush.bf16.msra.mxu0 %v268
        %871 = vmatpush.bf16.msra.mxu0 %v266
        %872 = vmatpush.bf16.msra.mxu0 %v264
        %873 = vmatpush.bf16.msra.mxu0 %v262
        %874 = vmatmul.bf16.gmra.mxu0 %v864
        %v875 = vpop.f32.mrf.mxu0
        %v876 = vadd.f32 0.0, %v875
        %v877 = vpop.f32.mrf.mxu0
        %878 = vdwg.mxu0
        %879 = vmatpush.bf16.msra.mxu0 0
        %880 = vmatpush.bf16.msra.mxu0 0
        %881 = vmatpush.bf16.msra.mxu0 0
        %882 = vmatpush.bf16.msra.mxu0 0
        %883 = vmatpush.bf16.msra.mxu0 %v269
        %884 = vmatpush.bf16.msra.mxu0 %v267
        %885 = vmatpush.bf16.msra.mxu0 %v265
        %886 = vmatpush.bf16.msra.mxu0 %v263
        %887 = vmatmul.bf16.gmra.mxu0 %v864
        %v888 = vpop.f32.mrf.mxu0
        %v889 = vadd.f32 0.0, %v888
        %v890 = vpop.f32.mrf.mxu0
        %891 = vdwg.mxu0
        %v892 = vadd.f32 %v859, %v876
        %v893 = vadd.f32 %v860, %v889
        %v894 = vxor.u32 %v892, 2147483648
        %v895 = vmul.f32 %v894, 1.442695
        %v896 = vpow.pop %v895
        %v897 = vadd.f32 %v896, 1.0
        %v898 = vrcp.pop %v897
        %v899 = vmul.f32 %v897, %v898
        %v900 = vsub.f32 1.0, %v899
        %v901 = vmul.f32 %v898, %v900
        %v902 = vadd.f32 %v898, %v901
        %vm903 = vweird.f32 %v897
        %vm904 = vweird.f32 %v898
        %vm905 = vmor %vm903, %vm904
        %v906 = vsel %vm905, %v898, %v902
        %v907 = vand.u32 2147483647, %v897
        %vm908 = vcmp.eq.f32.partialorder %v907, 8.507059e+37
        %v909 = vand.u32 %v897, 2147483648
        %v910 = vor.u32 1.1754944e-38, %v909
        %v911 = vsel %vm908, %v910, %v906
        %v912 = vmul.f32 1.0, %v911
        %v913 = vtanh.pop %v893
        %v914 = vxor.u32 %v893, 2147483648
        %v915 = vmul.f32 %v914, 1.442695
        %v916 = vpow.pop %v915
        %v917 = vadd.f32 %v916, 1.0
        %v918 = vrcp.pop %v917
        %v919 = vmul.f32 %v917, %v918
        %v920 = vsub.f32 1.0, %v919
        %v921 = vmul.f32 %v918, %v920
        %v922 = vadd.f32 %v918, %v921
        %vm923 = vweird.f32 %v917
        %vm924 = vweird.f32 %v918
        %vm925 = vmor %vm923, %vm924
        %v926 = vsel %vm925, %v918, %v922
        %v927 = vand.u32 2147483647, %v917
        %vm928 = vcmp.eq.f32.partialorder %v927, 8.507059e+37
        %v929 = vand.u32 %v917, 2147483648
        %v930 = vor.u32 1.1754944e-38, %v929
        %v931 = vsel %vm928, %v930, %v926
        %v932 = vmul.f32 1.0, %v931
        %v933 = vld [vmem:[#allocation3] sm:$0xff]
        %935 = vrot.lane.b32.xlu0 %v933, 64
        %v936 = vpop.permute.xlu0 %935
        %v938 = vmul.f32 %v912, %v936
        %v939 = vmul.f32 %v912, %v913
        %941 = vrot.lane.b32.xlu0 %v939, 64
        %v942 = vpop.permute.xlu0 %941
        %v944 = vadd.f32 %v938, %v942
        %v945 = vtanh.pop %v944
        %v946 = vmul.f32 %v932, %v945
        %948 = vrot.lane.b32.xlu0 %v944, 64
        %v949 = vpop.permute.xlu0 %948
        %951 = vst.msk [vmem:[#allocation3] sm:$0xff] %vm242, %v949
        %953 = vrot.lane.b32.xlu0 %v946, 64
        %v954 = vpop.permute.xlu0 %953
        %956 = vst.msk [vmem:[#allocation2] sm:$0xff] %vm242, %v954
        %s957 = scalar_lea.vmem %s234, 40 [#allocation5]
        %958 = vst.msk [vmem:[%s957] sm:$0xff] %vm388, %v954
        %959 = vrot.lane.b32.xlu0 %v946, 32
        %v960 = vpop.permute.xlu0 %959
        %962 = vst.msk [vmem:[%s240] sm:$0xff] %vm388, %v960
        %s963 = sand.u32 %s92, 1
        %s964 = sand.u32 %s92, 1
        %s965 = smul.addr %s964, 48
        %s966 = scalar_lea.vmem [#allocation5], %s965
        %s967 = sand.u32 %s118, 1
        %s968 = sand.u32 %s118, 1
        %s969 = smul.addr %s968, 48
        %s970 = scalar_lea.vmem [#allocation6], %s969
        // Predicated region
        $region56: #{swave_forward.20} parent=50 // pred_check
          %p971 = pneg %p102
        $region57: #{swave_forward.20} parent=50 // pred_check_branch
          %973 = sbr.rel (%p971) target = $region59
        $region58: #{swave_forward.20} parent=50 // pred_region
          %s974 = smul.addr %s16, 8
          %s975 = scalar_lea.vmem %s3, %s974
          // Predicated region
          $region60: #{swave_forward.20} parent=58 // pred_check
            _
          $region61: #{swave_forward.20} parent=58 // pred_check_branch
            %977 = sbr.rel (0) target = $region63
          $region62: #{swave_forward.20} parent=58 // pred_region
            // Predicated region
            $region64: #{swave_forward.20} parent=62 // pred_check
              _
            $region65: #{swave_forward.20} parent=62 // pred_check_branch
              %979 = sbr.rel (0) target = $region67
            $region66: #{swave_forward.20} parent=62 // pred_region
              // Predicated region
              $region79: #{swave_forward.20} parent=66 // pred_check
                _
              $region80: #{swave_forward.20} parent=66 // pred_check_branch
                %1005 = sbr.rel (0) target = $region82
              $region81: #{swave_forward.20} parent=66 // pred_region
                loop: start=0, step=1, limit=1
                $region83: #{swave_forward.20} parent=81 // loop_pre_header
                  _
                $region84: #{swave_forward.20} parent=81 // loop_header
                  %s1007 = sphi 0, %s1011
                  %p1008 = scmp.ge.s32.totalorder %s1007, 1
                  %s1012 = sphi %s966, %s966
                  %s1013 = sphi %s975, %s975
                $region85: #{swave_forward.20} parent=81 // loop_header_branch
                  %1010 = sbr.rel (%p1008) target = $region89
                $region86: #{swave_forward.20} parent=81 // loop_body
                  %v1014 = vld [vmem:[%s1012] sm:$0xff]
                  %1015 = vst [vmem:[%s1013] sm:$0xff] %v1014
                  %v1016 = vld [vmem:[%s1012 + $0x8] sm:$0xff]
                  %1017 = vst [vmem:[%s1013 + $0x10] sm:$0xff] %v1016
                  %v1018 = vld [vmem:[%s1012 + $0x10] sm:$0xff]
                  %1019 = vst [vmem:[%s1013 + $0x20] sm:$0xff] %v1018
                  %v1020 = vld [vmem:[%s1012 + $0x18] sm:$0xff]
                  %1021 = vst [vmem:[%s1013 + $0x30] sm:$0xff] %v1020
                  %v1022 = vld [vmem:[%s1012 + $0x20] sm:$0xff]
                  %1023 = vst [vmem:[%s1013 + $0x40] sm:$0xff] %v1022
                  %v1024 = vld [vmem:[%s1012 + $0x28] sm:$0xff]
                  %1025 = vst [vmem:[%s1013 + $0x50] sm:$0xff] %v1024
                $region87: #{swave_forward.20} parent=81 // loop_footer
                  %s1011 = sadd.s32 1, %s1007
                $region88: #{swave_forward.20} parent=81 // loop_footer_branch
                  %1006 = sbr.rel target = $region84
                $region89: #{swave_forward.20} parent=81 // loop_exit
                  _
              $region82: #{swave_forward.20} parent=66 // pred_fallthru
                _
              // Predicated region
              $region90: #{swave_forward.20} parent=66 // pred_check
                _
              $region91: #{swave_forward.20} parent=66 // pred_check_branch
                %1027 = sbr.rel target = $region93
              $region92: #{swave_forward.20} parent=66 // pred_region
                _
              $region93: #{swave_forward.20} parent=66 // pred_fallthru
                _
            $region67: #{swave_forward.20} parent=62 // pred_fallthru
              _
            // Predicated region
            $region68: #{swave_forward.20} parent=62 // pred_check
              _
            $region69: #{swave_forward.20} parent=62 // pred_check_branch
              %981 = sbr.rel target = $region71
            $region70: #{swave_forward.20} parent=62 // pred_region
              %s983 = ssub.s32 256, 1
              loop: start=0, step=1, limit=1
              $region72: #{swave_forward.20} parent=70 // loop_pre_header
                _
              $region73: #{swave_forward.20} parent=70 // loop_header
                %s985 = sphi 0, %s989
                %p986 = scmp.ge.s32.totalorder %s985, 1
                %s990 = sphi %s966, %s966
                %s991 = sphi %s975, %s975
              $region74: #{swave_forward.20} parent=70 // loop_header_branch
                %988 = sbr.rel (%p986) target = $region78
              $region75: #{swave_forward.20} parent=70 // loop_body
                %v992 = vld [vmem:[%s990] sm:%s983]
                %993 = vst [vmem:[%s991] sm:%s983] %v992
                %v994 = vld [vmem:[%s990 + $0x8] sm:%s983]
                %995 = vst [vmem:[%s991 + $0x10] sm:%s983] %v994
                %v996 = vld [vmem:[%s990 + $0x10] sm:%s983]
                %997 = vst [vmem:[%s991 + $0x20] sm:%s983] %v996
                %v998 = vld [vmem:[%s990 + $0x18] sm:%s983]
                %999 = vst [vmem:[%s991 + $0x30] sm:%s983] %v998
                %v1000 = vld [vmem:[%s990 + $0x20] sm:%s983]
                %1001 = vst [vmem:[%s991 + $0x40] sm:%s983] %v1000
                %v1002 = vld [vmem:[%s990 + $0x28] sm:%s983]
                %1003 = vst [vmem:[%s991 + $0x50] sm:%s983] %v1002
              $region76: #{swave_forward.20} parent=70 // loop_footer
                %s989 = sadd.s32 1, %s985
              $region77: #{swave_forward.20} parent=70 // loop_footer_branch
                %984 = sbr.rel target = $region73
              $region78: #{swave_forward.20} parent=70 // loop_exit
                _
            $region71: #{swave_forward.20} parent=62 // pred_fallthru
              _
          $region63: #{swave_forward.20} parent=58 // pred_fallthru
            _
          %1028 = vnop
        $region59: #{swave_forward.20} parent=50 // pred_fallthru
          _
        // Predicated region
        $region94: #{swave_forward.20} parent=50 // pred_check
          %p1029 = pneg %p128
        $region95: #{swave_forward.20} parent=50 // pred_check_branch
          %1031 = sbr.rel (%p1029) target = $region97
        $region96: #{swave_forward.20} parent=50 // pred_region
          %s1032 = smul.addr %s16, 8
          %s1033 = scalar_lea.vmem %s4, %s1032
          // Predicated region
          $region98: #{swave_forward.20} parent=96 // pred_check
            _
          $region99: #{swave_forward.20} parent=96 // pred_check_branch
            %1035 = sbr.rel (0) target = $region101
          $region100: #{swave_forward.20} parent=96 // pred_region
            // Predicated region
            $region102: #{swave_forward.20} parent=100 // pred_check
              _
            $region103: #{swave_forward.20} parent=100 // pred_check_branch
              %1037 = sbr.rel (0) target = $region105
            $region104: #{swave_forward.20} parent=100 // pred_region
              // Predicated region
              $region117: #{swave_forward.20} parent=104 // pred_check
                _
              $region118: #{swave_forward.20} parent=104 // pred_check_branch
                %1063 = sbr.rel (0) target = $region120
              $region119: #{swave_forward.20} parent=104 // pred_region
                loop: start=0, step=1, limit=1
                $region121: #{swave_forward.20} parent=119 // loop_pre_header
                  _
                $region122: #{swave_forward.20} parent=119 // loop_header
                  %s1065 = sphi 0, %s1069
                  %p1066 = scmp.ge.s32.totalorder %s1065, 1
                  %s1070 = sphi %s970, %s970
                  %s1071 = sphi %s1033, %s1033
                $region123: #{swave_forward.20} parent=119 // loop_header_branch
                  %1068 = sbr.rel (%p1066) target = $region127
                $region124: #{swave_forward.20} parent=119 // loop_body
                  %v1072 = vld [vmem:[%s1070] sm:$0xff]
                  %1073 = vst [vmem:[%s1071] sm:$0xff] %v1072
                  %v1074 = vld [vmem:[%s1070 + $0x8] sm:$0xff]
                  %1075 = vst [vmem:[%s1071 + $0x10] sm:$0xff] %v1074
                  %v1076 = vld [vmem:[%s1070 + $0x10] sm:$0xff]
                  %1077 = vst [vmem:[%s1071 + $0x20] sm:$0xff] %v1076
                  %v1078 = vld [vmem:[%s1070 + $0x18] sm:$0xff]
                  %1079 = vst [vmem:[%s1071 + $0x30] sm:$0xff] %v1078
                  %v1080 = vld [vmem:[%s1070 + $0x20] sm:$0xff]
                  %1081 = vst [vmem:[%s1071 + $0x40] sm:$0xff] %v1080
                  %v1082 = vld [vmem:[%s1070 + $0x28] sm:$0xff]
                  %1083 = vst [vmem:[%s1071 + $0x50] sm:$0xff] %v1082
                $region125: #{swave_forward.20} parent=119 // loop_footer
                  %s1069 = sadd.s32 1, %s1065
                $region126: #{swave_forward.20} parent=119 // loop_footer_branch
                  %1064 = sbr.rel target = $region122
                $region127: #{swave_forward.20} parent=119 // loop_exit
                  _
              $region120: #{swave_forward.20} parent=104 // pred_fallthru
                _
              // Predicated region
              $region128: #{swave_forward.20} parent=104 // pred_check
                _
              $region129: #{swave_forward.20} parent=104 // pred_check_branch
                %1085 = sbr.rel target = $region131
              $region130: #{swave_forward.20} parent=104 // pred_region
                _
              $region131: #{swave_forward.20} parent=104 // pred_fallthru
                _
            $region105: #{swave_forward.20} parent=100 // pred_fallthru
              _
            // Predicated region
            $region106: #{swave_forward.20} parent=100 // pred_check
              _
            $region107: #{swave_forward.20} parent=100 // pred_check_branch
              %1039 = sbr.rel target = $region109
            $region108: #{swave_forward.20} parent=100 // pred_region
              %s1041 = ssub.s32 256, 1
              loop: start=0, step=1, limit=1
              $region110: #{swave_forward.20} parent=108 // loop_pre_header
                _
              $region111: #{swave_forward.20} parent=108 // loop_header
                %s1043 = sphi 0, %s1047
                %p1044 = scmp.ge.s32.totalorder %s1043, 1
                %s1048 = sphi %s970, %s970
                %s1049 = sphi %s1033, %s1033
              $region112: #{swave_forward.20} parent=108 // loop_header_branch
                %1046 = sbr.rel (%p1044) target = $region116
              $region113: #{swave_forward.20} parent=108 // loop_body
                %v1050 = vld [vmem:[%s1048] sm:%s1041]
                %1051 = vst [vmem:[%s1049] sm:%s1041] %v1050
                %v1052 = vld [vmem:[%s1048 + $0x8] sm:%s1041]
                %1053 = vst [vmem:[%s1049 + $0x10] sm:%s1041] %v1052
                %v1054 = vld [vmem:[%s1048 + $0x10] sm:%s1041]
                %1055 = vst [vmem:[%s1049 + $0x20] sm:%s1041] %v1054
                %v1056 = vld [vmem:[%s1048 + $0x18] sm:%s1041]
                %1057 = vst [vmem:[%s1049 + $0x30] sm:%s1041] %v1056
                %v1058 = vld [vmem:[%s1048 + $0x20] sm:%s1041]
                %1059 = vst [vmem:[%s1049 + $0x40] sm:%s1041] %v1058
                %v1060 = vld [vmem:[%s1048 + $0x28] sm:%s1041]
                %1061 = vst [vmem:[%s1049 + $0x50] sm:%s1041] %v1060
              $region114: #{swave_forward.20} parent=108 // loop_footer
                %s1047 = sadd.s32 1, %s1043
              $region115: #{swave_forward.20} parent=108 // loop_footer_branch
                %1042 = sbr.rel target = $region111
              $region116: #{swave_forward.20} parent=108 // loop_exit
                _
            $region109: #{swave_forward.20} parent=100 // pred_fallthru
              _
          $region101: #{swave_forward.20} parent=96 // pred_fallthru
            _
          %1086 = vnop
        $region97: #{swave_forward.20} parent=50 // pred_fallthru
          _
      $region51: #{swave_forward.20} parent=5 // pred_fallthru
        _
      %p1087 = scmp.le.s32.totalorder 2, %s11
      // Predicated region
      $region132: #{swave_forward.20} parent=5 // pred_check
        %p1088 = pneg %p1087
      $region133: #{swave_forward.20} parent=5 // pred_check_branch
        %1090 = sbr.rel (%p1088) target = $region135
      $region134: #{swave_forward.20} parent=5 // pred_region
        %s1091 = ssub.s32 %s11, 2
        // Predicated region
        $region136: #{swave_forward.20} parent=134 // pred_check
          %p1092 = pneg %p108
        $region137: #{swave_forward.20} parent=134 // pred_check_branch
          %1094 = sbr.rel (%p1092) target = $region139
        $region138: #{swave_forward.20} parent=134 // pred_region
          %s1095 = sand.u32 %s93, 1
          %s1096 = sand.u32 %s93, 1
          %s1097 = smul.addr %s1096, 48
          %s1098 = scalar_lea.vmem [#allocation5], %s1097
        $region139: #{swave_forward.20} parent=134 // pred_fallthru
          _
        // Predicated region
        $region140: #{swave_forward.20} parent=134 // pred_check
          %p1099 = pneg %p134
        $region141: #{swave_forward.20} parent=134 // pred_check_branch
          %1101 = sbr.rel (%p1099) target = $region143
        $region142: #{swave_forward.20} parent=134 // pred_region
          %s1102 = sand.u32 %s119, 1
          %s1103 = sand.u32 %s119, 1
          %s1104 = smul.addr %s1103, 48
          %s1105 = scalar_lea.vmem [#allocation6], %s1104
        $region143: #{swave_forward.20} parent=134 // pred_fallthru
          _
      $region135: #{swave_forward.20} parent=5 // pred_fallthru
        _
    $region6: #{swave_forward.20} parent=1 // loop_footer
      %s15 = sadd.s32 1, %s11
    $region7: #{swave_forward.20} parent=1 // loop_footer_branch
      %10 = sbr.rel target = $region3
    $region8: #{swave_forward.20} parent=1 // loop_exit
      _

</llo_original>
